<compile_context>
chip_gen: v5e
topology: v5e:2x2
jax: 0.10.0
libtpu: 0.0.40
codegen_flags: <defaults>
</compile_context>

<pallas_src>
import jax
import jax.numpy as jnp
import numpy as np
from jax.experimental import pallas as pl
from jax.experimental.pallas import tpu as pltpu

# ---- model dims (from the PyTorch module defaults) ----
INPUT_DIM = 10
NUM_NODES = 10
UNITS_GNN = 16
H = 32                      # units_per_lstm_layer
ACTOR_OUT = 4
CRITIC_OUT = 1
SEQ_LEN = 5
GP_LANE0 = 8                # lanes 8:24 of the packed output hold the GCN pooled embedding

# ---- packed 128-wide parameter buffer row layout (all offsets multiple of 8) ----
R_GW1 = 0                   # GCN W1: rows 0:10, cols 0:16
R_GB1 = 16                  # GCN b1: 1 row, cols 0:16
R_GW2 = 24                  # GCN W2: 128 rows (real rows 0:16), cols GP_LANE0:GP_LANE0+16
R_GB2 = R_GW2 + 128         # 152
R_HW = 160                  # fused head weight: 64 rows (actor rows 0:32 -> cols 0:4,
                            #                            critic rows 32:64 -> col 4)
R_HB = R_HW + 2 * H         # 224, fused head bias
R_SH = 232                  # shared LSTM layers, stride 72: [W_ih(32) | W_hh(32) | b(1) | pad]
SH_STRIDE = 72
P128_ROWS = R_SH + 2 * SH_STRIDE     # 376

# ---- packed 256-wide fused actor/critic LSTM buffer ----
F_STRIDE = 136              # [W_ih(64) | W_hh(64) | b(1) | pad] per layer-pair
P256_ROWS = 2 * F_STRIDE    # 272

# ---- packed graph buffer (width = NUM_NODES) ----
G_X = 0                     # node features rows 0:10
G_A = 16                    # dense normalized adjacency rows 16:26
GRAPH_ROWS = 32


def actor_critic_kernel(graph_ref, seq_ref, p128_ref, p256_ref, out_ref):
    f32 = jnp.float32

    # ---------------- GCN branch ----------------
    # out = relu(A_hat @ (X W) + b) twice, then global mean pool over nodes.
    # W2/b2 live at lanes GP_LANE0:GP_LANE0+16 so the pooled row is already in
    # its final output lanes (no extra shuffles / partial stores).
    x = graph_ref[G_X:G_X + NUM_NODES, :]                    # (10, 10)
    ahat = graph_ref[G_A:G_A + NUM_NODES, :]                 # (10, 10)
    gw1 = p128_ref[R_GW1:R_GW1 + INPUT_DIM, :]               # (10, 128)
    gb1 = p128_ref[R_GB1:R_GB1 + 1, :]                       # (1, 128)
    gw2 = p128_ref[R_GW2:R_GW2 + 128, :]                     # (128, 128)
    gb2 = p128_ref[R_GB2:R_GB2 + 1, :]                       # (1, 128)

    h = jnp.dot(x, gw1, preferred_element_type=f32)                              # (10,128)
    h = jnp.maximum(jnp.dot(ahat, h, preferred_element_type=f32) + gb1, 0.0)
    h = jnp.dot(h, gw2, preferred_element_type=f32)
    h = jnp.maximum(jnp.dot(ahat, h, preferred_element_type=f32) + gb2, 0.0)
    gpool_row = jnp.mean(h, axis=0, keepdims=True)           # (1,128), nonzero lanes 8:24

    # ---------------- LSTM stacks (wavefront-friendly) ----------------
    # Gate columns are pre-ordered [i | f | o | g] (each `width` wide).  For the
    # fused actor/critic layers width == 2*H and every gate block is itself
    # [actor(32) | critic(32)], so the same elementwise recurrence updates both
    # branches at once on state h = [h_actor | h_critic].
    def cell(gates, c_t, width):
        n3 = 3 * width
        sg = jax.nn.sigmoid(gates[:, 0:n3])                  # [i | f | o]  (one EUP op)
        gg = jnp.tanh(gates[:, n3:])                         # g
        c_t = sg[:, width:2 * width] * c_t + sg[:, 0:width] * gg
        h_t = sg[:, 2 * width:n3] * jnp.tanh(c_t)
        return h_t, c_t

    # layer 0 (shared0): input is the external sequence, so the x-projection is
    # hoisted (one matmul for all timesteps) without lengthening any chain.
    base0 = R_SH
    wih0 = p128_ref[base0:base0 + H, :]                      # (32, 128)
    whh0 = p128_ref[base0 + H:base0 + 2 * H, :]              # (32, 128)
    b0 = p128_ref[base0 + 2 * H:base0 + 2 * H + 1, :]        # (1, 128)
    xs = seq_ref[0:SEQ_LEN, :]                               # (5, 32)
    xp0 = jnp.dot(xs, wih0, preferred_element_type=f32) + b0  # (5, 128)

    h_t = jnp.zeros((1, H), f32)
    c_t = jnp.zeros((1, H), f32)
    outs0 = []
    for t in range(SEQ_LEN):                                 # fully unrolled
        gates = xp0[t:t + 1, :] + jnp.dot(h_t, whh0, preferred_element_type=f32)
        h_t, c_t = cell(gates, c_t, H)
        outs0.append(h_t)

    # layers 1..3: per-step input projection + per-step (1, W) hand-off, so
    # layer l+1 step t depends only on layer l step t -> the unrolled basic
    # block exposes a wavefront (critical path 5 + 3 step-latencies, not 20).
    def run_layer(x_list, wih, whh, b, width, collect):
        h_t = jnp.zeros((1, width), f32)
        c_t = jnp.zeros((1, width), f32)
        outs = []
        for t in range(SEQ_LEN):
            gates = (jnp.dot(x_list[t], wih, preferred_element_type=f32)
                     + jnp.dot(h_t, whh, preferred_element_type=f32) + b)
            h_t, c_t = cell(gates, c_t, width)
            if collect:
                outs.append(h_t)
        return outs, h_t

    # shared layer 1 (128-wide gates)
    base1 = R_SH + SH_STRIDE
    wih1 = p128_ref[base1:base1 + H, :]                      # (32, 128)
    whh1 = p128_ref[base1 + H:base1 + 2 * H, :]              # (32, 128)
    b1 = p128_ref[base1 + 2 * H:base1 + 2 * H + 1, :]        # (1, 128)
    outs1, _ = run_layer(outs0, wih1, whh1, b1, H, collect=True)

    # fused actor/critic layer-pair 0 (256-wide gates, 64-wide state)
    wih2 = p256_ref[0:H, :]                                  # (32, 256) shared input rows
    whh2 = p256_ref[2 * H:4 * H, :]                          # (64, 256) block-diagonal
    b2 = p256_ref[4 * H:4 * H + 1, :]                        # (1, 256)
    outs2, _ = run_layer(outs1, wih2, whh2, b2, 2 * H, collect=True)

    # fused layer-pair 1 — only the last step's hidden state is consumed
    wih3 = p256_ref[F_STRIDE:F_STRIDE + 2 * H, :]            # (64, 256) block-diagonal
    whh3 = p256_ref[F_STRIDE + 2 * H:F_STRIDE + 4 * H, :]    # (64, 256) block-diagonal
    b3 = p256_ref[F_STRIDE + 4 * H:F_STRIDE + 4 * H + 1, :]  # (1, 256)
    _, h_last = run_layer(outs2, wih3, whh3, b3, 2 * H, collect=False)
    # h_last: (1, 64) = [h_actor | h_critic]

    # ---------------- fused heads + packed lane-dense output ----------------
    head_w = p128_ref[R_HW:R_HW + 2 * H, :]                  # (64, 128)
    head_b = p128_ref[R_HB:R_HB + 1, :]                      # (1, 128)
    head = jnp.dot(h_last, head_w, preferred_element_type=f32) + head_b   # (1, 128)
    # lanes 0:4 = actor logits, lane 4 = critic value, rest 0

    lane = jax.lax.broadcasted_iota(jnp.int32, (1, 128), 1)
    logits = jnp.where(lane < ACTOR_OUT, head, -jnp.inf)
    m = jnp.max(logits, axis=-1, keepdims=True)
    e = jnp.exp(logits - m)                                  # padded lanes -> 0
    probs_full = e / jnp.sum(e, axis=-1, keepdims=True)
    value_full = jnp.where(lane == ACTOR_OUT, head, 0.0)

    # one unmasked 128-lane store: [probs(0:4) | value(4) | 0 | gpool(8:24) | 0...]
    out_ref[...] = probs_full + value_full + gpool_row


# ---------------------------------------------------------------------------
# Wrapper: parameter packing + pallas_call
# ---------------------------------------------------------------------------
def pack_params(params):
    """Pack canonical (PyTorch-layout) params into the two lane-dense VMEM buffers."""
    f32 = jnp.float32
    lstm = params["lstm"]                      # [shared0, shared1, actor0, actor1, critic0, critic1]

    def gsplit(w):                             # canonical gate order [i, f, g, o]
        return jnp.split(w, 4, axis=-1)

    # ---- 128-wide buffer: GCN + fused heads + shared LSTM (gates -> [i,f,o,g]) ----
    p128 = jnp.zeros((P128_ROWS, 128), f32)
    p128 = p128.at[R_GW1:R_GW1 + INPUT_DIM, 0:UNITS_GNN].set(params["gcn_w1"])
    p128 = p128.at[R_GB1, 0:UNITS_GNN].set(params["gcn_b1"][0])
    p128 = p128.at[R_GW2:R_GW2 + UNITS_GNN, GP_LANE0:GP_LANE0 + UNITS_GNN].set(params["gcn_w2"])
    p128 = p128.at[R_GB2, GP_LANE0:GP_LANE0 + UNITS_GNN].set(params["gcn_b2"][0])
    p128 = p128.at[R_HW:R_HW + H, 0:ACTOR_OUT].set(params["actor_w"])
    p128 = p128.at[R_HW + H:R_HW + 2 * H, ACTOR_OUT:ACTOR_OUT + CRITIC_OUT].set(params["critic_w"])
    p128 = p128.at[R_HB, 0:ACTOR_OUT].set(params["actor_b"][0])
    p128 = p128.at[R_HB, ACTOR_OUT:ACTOR_OUT + CRITIC_OUT].set(params["critic_b"][0])

    for l in range(2):                         # shared layers
        layer = lstm[l]
        wi_i, wi_f, wi_g, wi_o = gsplit(layer["wih"])
        wh_i, wh_f, wh_g, wh_o = gsplit(layer["whh"])
        b_i, b_f, b_g, b_o = gsplit(layer["b"])
        wih_r = jnp.concatenate([wi_i, wi_f, wi_o, wi_g], axis=1)     # [i,f,o,g]
        whh_r = jnp.concatenate([wh_i, wh_f, wh_o, wh_g], axis=1)
        b_r = jnp.concatenate([b_i, b_f, b_o, b_g], axis=1)
        base = R_SH + l * SH_STRIDE
        p128 = p128.at[base:base + wih_r.shape[0], :].set(wih_r)      # layer0 rows 10:32 stay 0
        p128 = p128.at[base + H:base + 2 * H, :].set(whh_r)
        p128 = p128.at[base + 2 * H, :].set(b_r[0])

    # ---- 256-wide buffer: fused actor/critic layer-pairs ----
    # fused gate columns: [i_a|i_c | f_a|f_c | o_a|o_c | g_a|g_c], state = [h_a | h_c]
    def fuse_shared_rows(wa, wc):              # both branches read the same input rows
        ai, af, ag, ao = gsplit(wa)
        ci, cf, cg, co = gsplit(wc)
        return jnp.concatenate([ai, ci, af, cf, ao, co, ag, cg], axis=1)

    def fuse_block(wa, wc):                    # block-diagonal over [rows_a | rows_c]
        ai, af, ag, ao = gsplit(wa)
        ci, cf, cg, co = gsplit(wc)
        z = jnp.zeros_like(ai)
        top = jnp.concatenate([ai, z, af, z, ao, z, ag, z], axis=1)
        bot = jnp.concatenate([z, ci, z, cf, z, co, z, cg], axis=1)
        return jnp.concatenate([top, bot], axis=0)

    p256 = jnp.zeros((P256_ROWS, 256), f32)
    for p in range(2):
        a, c = lstm[2 + p], lstm[4 + p]
        base = p * F_STRIDE
        if p == 0:
            wih_f = fuse_shared_rows(a["wih"], c["wih"])              # (32, 256)
            p256 = p256.at[base:base + H, :].set(wih_f)
        else:
            wih_f = fuse_block(a["wih"], c["wih"])                    # (64, 256)
            p256 = p256.at[base:base + 2 * H, :].set(wih_f)
        whh_f = fuse_block(a["whh"], c["whh"])                        # (64, 256)
        b_f = fuse_shared_rows(a["b"], c["b"])                        # (1, 256)
        p256 = p256.at[base + 2 * H:base + 4 * H, :].set(whh_f)
        p256 = p256.at[base + 4 * H, :].set(b_f[0])

    return {"p128": p128, "p256": p256}


def actor_critic_forward(packed, graph_x, a_hat, sequence):
    """sequence: (1, SEQ_LEN, INPUT_DIM) batch_first; graph_x: (NUM_NODES, INPUT_DIM)."""
    f32 = jnp.float32
    seq2 = jnp.squeeze(sequence, axis=0).astype(f32)                  # (5, 10)
    seq_pack = jnp.zeros((8, H), f32).at[0:SEQ_LEN, 0:INPUT_DIM].set(seq2)

    graph_pack = jnp.zeros((GRAPH_ROWS, NUM_NODES), f32)
    graph_pack = graph_pack.at[G_X:G_X + NUM_NODES, :].set(graph_x.astype(f32))
    graph_pack = graph_pack.at[G_A:G_A + NUM_NODES, :].set(a_hat.astype(f32))

    vmem = pl.BlockSpec(memory_space=pltpu.MemorySpace.VMEM)
    out = pl.pallas_call(
        actor_critic_kernel,
        out_shape=jax.ShapeDtypeStruct((1, 128), f32),                # single lane-dense output
        in_specs=[vmem, vmem, vmem, vmem],
        out_specs=vmem,
    )(graph_pack, seq_pack, packed["p128"], packed["p256"])

    probs = out[:, 0:ACTOR_OUT]
    value = out[:, ACTOR_OUT:ACTOR_OUT + CRITIC_OUT]
    gpool = out[:, GP_LANE0:GP_LANE0 + UNITS_GNN]
    return probs, value, gpool


# ---------------------------------------------------------------------------
# Canonical parameters, pure-JAX reference, test harness
# ---------------------------------------------------------------------------
def make_params(key):
    ks = jax.random.split(key, 32)
    ki = iter(ks)

    def nrm(shape, scale=0.1):
        return scale * jax.random.normal(next(ki), shape, jnp.float32)

    params = {
        "gcn_w1": nrm((INPUT_DIM, UNITS_GNN)),
        "gcn_b1": nrm((1, UNITS_GNN)),
        "gcn_w2": nrm((UNITS_GNN, UNITS_GNN)),
        "gcn_b2": nrm((1, UNITS_GNN)),
        "actor_w": nrm((H, ACTOR_OUT)),
        "actor_b": nrm((1, ACTOR_OUT)),
        "critic_w": nrm((H, CRITIC_OUT)),
        "critic_b": nrm((1, CRITIC_OUT)),
    }
    # LSTM layers: [shared0(in=10), shared1, actor0, actor1, critic0, critic1]
    # canonical PyTorch layout: W_ih^T (in, 4H), W_hh^T (H, 4H), combined bias (1, 4H), gates [i,f,g,o]
    layer_in_dims = [INPUT_DIM, H, H, H, H, H]
    params["lstm"] = [
        {"wih": nrm((in_dim, 4 * H)), "whh": nrm((H, 4 * H)), "b": nrm((1, 4 * H))}
        for in_dim in layer_in_dims
    ]
    return params


def make_a_hat():
    # edge_index: src [0..9] -> dst [(i+1)%10]; GCNConv adds self loops and sym-normalizes.
    # Every node has degree 2 after self-loops => every nonzero entry is 0.5.
    src = jnp.arange(NUM_NODES)
    dst = (src + 1) % NUM_NODES
    a = jnp.zeros((NUM_NODES, NUM_NODES), jnp.float32)
    a = a.at[dst, src].set(0.5)
    a = a + 0.5 * jnp.eye(NUM_NODES, dtype=jnp.float32)
    return a


def reference_forward(params, graph_x, a_hat, sequence):
    """Pure-JAX reference with canonical (unfused, unpadded) parameters."""
    f32 = jnp.float32
    hp = jax.lax.Precision.HIGHEST

    def mm(a, b):
        return jnp.dot(a, b, precision=hp)

    h = mm(graph_x, params["gcn_w1"])
    h = jnp.maximum(mm(a_hat, h) + params["gcn_b1"], 0.0)
    h = mm(h, params["gcn_w2"])
    h = jnp.maximum(mm(a_hat, h) + params["gcn_b2"], 0.0)
    gpool = jnp.mean(h, axis=0, keepdims=True)

    def lstm(x_seq, layer):
        wih, whh, b = layer["wih"], layer["whh"], layer["b"]
        h_t = jnp.zeros((1, H), f32)
        c_t = jnp.zeros((1, H), f32)
        outs = []
        for t in range(x_seq.shape[0]):
            g = mm(x_seq[t:t + 1, :], wih) + mm(h_t, whh) + b
            i = jax.nn.sigmoid(g[:, 0:H])
            f = jax.nn.sigmoid(g[:, H:2 * H])
            gg = jnp.tanh(g[:, 2 * H:3 * H])
            o = jax.nn.sigmoid(g[:, 3 * H:4 * H])
            c_t = f * c_t + i * gg
            h_t = o * jnp.tanh(c_t)
            outs.append(h_t)
        return jnp.concatenate(outs, axis=0)

    seq = sequence[0]
    shared = lstm(lstm(seq, params["lstm"][0]), params["lstm"][1])
    actor = lstm(lstm(shared, params["lstm"][2]), params["lstm"][3])
    critic = lstm(lstm(shared, params["lstm"][4]), params["lstm"][5])
    logits = mm(actor[-1:], params["actor_w"]) + params["actor_b"]
    probs = jax.nn.softmax(logits, axis=-1)
    value = mm(critic[-1:], params["critic_w"]) + params["critic_b"]
    return probs, value, gpool


if __name__ == "__main__":
    key = jax.random.PRNGKey(0)
    k_param, k_graph, k_seq = jax.random.split(key, 3)

    params = make_params(k_param)
    packed = pack_params(params)
    graph_x = jax.random.uniform(k_graph, (NUM_NODES, INPUT_DIM), jnp.float32)
    sequence = jax.random.uniform(k_seq, (1, SEQ_LEN, INPUT_DIM), jnp.float32)
    a_hat = make_a_hat()

    forward = jax.jit(actor_critic_forward)
    probs, value, gpool = forward(packed, graph_x, a_hat, sequence)
    jax.block_until_ready((probs, value, gpool))

    assert probs.shape == (1, ACTOR_OUT)
    assert value.shape == (1, CRITIC_OUT)
    assert gpool.shape == (1, UNITS_GNN)
    assert abs(float(jnp.sum(probs)) - 1.0) < 1e-4

    # correctness vs pure-JAX reference (canonical weights, no fusion/packing)
    r_probs, r_value, r_gpool = reference_forward(params, graph_x, a_hat, sequence)
    np.testing.assert_allclose(np.asarray(probs), np.asarray(r_probs), rtol=2e-2, atol=2e-3)
    np.testing.assert_allclose(np.asarray(value), np.asarray(r_value), rtol=2e-2, atol=2e-3)
    np.testing.assert_allclose(np.asarray(gpool), np.asarray(r_gpool), rtol=2e-2, atol=2e-3)

    print("KERNEL_OK")
</pallas_src>

<mosaic_0001>
module attributes {stable_mosaic.version = 11 : i64} {
  func.func @actor_critic_kernel(%arg0: memref<32x10xf32, #tpu.memory_space<vmem>>, %arg1: memref<8x32xf32, #tpu.memory_space<vmem>>, %arg2: memref<376x128xf32, #tpu.memory_space<vmem>>, %arg3: memref<272x256xf32, #tpu.memory_space<vmem>>, %arg4: memref<1x128xf32, #tpu.memory_space<vmem>>) attributes {dimension_semantics = [], scalar_prefetch = 0 : i64, scratch_operands = 0 : i64, tpu.core_type = #tpu.core_type<tc>} {
    %c0 = arith.constant 0 : index
    %c0_0 = arith.constant 0 : index
    %0 = vector.load %arg0[%c0, %c0_0] : memref<32x10xf32, #tpu.memory_space<vmem>>, vector<10x10xf32>
    %c16 = arith.constant 16 : index
    %c0_1 = arith.constant 0 : index
    %1 = vector.load %arg0[%c16, %c0_1] : memref<32x10xf32, #tpu.memory_space<vmem>>, vector<10x10xf32>
    %c0_2 = arith.constant 0 : index
    %c0_3 = arith.constant 0 : index
    %2 = vector.load %arg2[%c0_2, %c0_3] : memref<376x128xf32, #tpu.memory_space<vmem>>, vector<10x128xf32>
    %c16_4 = arith.constant 16 : index
    %c0_5 = arith.constant 0 : index
    %3 = vector.load %arg2[%c16_4, %c0_5] : memref<376x128xf32, #tpu.memory_space<vmem>>, vector<1x128xf32>
    %c24 = arith.constant 24 : index
    %c0_6 = arith.constant 0 : index
    %4 = vector.load %arg2[%c24, %c0_6] : memref<376x128xf32, #tpu.memory_space<vmem>>, vector<128x128xf32>
    %c152 = arith.constant 152 : index
    %c0_7 = arith.constant 0 : index
    %5 = vector.load %arg2[%c152, %c0_7] : memref<376x128xf32, #tpu.memory_space<vmem>>, vector<1x128xf32>
    %cst = arith.constant dense<0.000000e+00> : vector<10x128xf32>
    %6 = tpu.matmul %0, %2, %cst {dimension_numbers = #tpu.dot_dimension_numbers<[1], [0], [0], [1], [0, 0, 1, 1], [], []>} : vector<10x10xf32>, vector<10x128xf32>, vector<10x128xf32> -> vector<10x128xf32>
    %cst_8 = arith.constant dense<0.000000e+00> : vector<10x128xf32>
    %7 = tpu.matmul %1, %6, %cst_8 {dimension_numbers = #tpu.dot_dimension_numbers<[1], [0], [0], [1], [0, 0, 1, 1], [], []>} : vector<10x10xf32>, vector<10x128xf32>, vector<10x128xf32> -> vector<10x128xf32>
    %8 = vector.broadcast %3 : vector<1x128xf32> to vector<10x128xf32>
    %9 = arith.addf %7, %8 : vector<10x128xf32>
    %cst_9 = arith.constant 0.000000e+00 : f32
    %10 = vector.broadcast %cst_9 : f32 to vector<10x128xf32>
    %11 = arith.maximumf %9, %10 : vector<10x128xf32>
    %cst_10 = arith.constant dense<0.000000e+00> : vector<10x128xf32>
    %12 = tpu.matmul %11, %4, %cst_10 {dimension_numbers = #tpu.dot_dimension_numbers<[1], [0], [0], [1], [0, 0, 1, 1], [], []>} : vector<10x128xf32>, vector<128x128xf32>, vector<10x128xf32> -> vector<10x128xf32>
    %cst_11 = arith.constant dense<0.000000e+00> : vector<10x128xf32>
    %13 = tpu.matmul %1, %12, %cst_11 {dimension_numbers = #tpu.dot_dimension_numbers<[1], [0], [0], [1], [0, 0, 1, 1], [], []>} : vector<10x10xf32>, vector<10x128xf32>, vector<10x128xf32> -> vector<10x128xf32>
    %14 = vector.broadcast %5 : vector<1x128xf32> to vector<10x128xf32>
    %15 = arith.addf %13, %14 : vector<10x128xf32>
    %cst_12 = arith.constant 0.000000e+00 : f32
    %16 = vector.broadcast %cst_12 : f32 to vector<10x128xf32>
    %17 = arith.maximumf %15, %16 : vector<10x128xf32>
    %cst_13 = arith.constant dense<0.000000e+00> : vector<128xf32>
    %18 = vector.multi_reduction <add>, %17, %cst_13 [0] : vector<10x128xf32> to vector<128xf32>
    %19 = vector.shape_cast %18 : vector<128xf32> to vector<1x128xf32>
    %cst_14 = arith.constant 1.000000e+01 : f32
    %20 = vector.broadcast %cst_14 : f32 to vector<1x128xf32>
    %21 = arith.divf %19, %20 : vector<1x128xf32>
    %c232 = arith.constant 232 : index
    %c0_15 = arith.constant 0 : index
    %22 = vector.load %arg2[%c232, %c0_15] : memref<376x128xf32, #tpu.memory_space<vmem>>, vector<32x128xf32>
    %c264 = arith.constant 264 : index
    %c0_16 = arith.constant 0 : index
    %23 = vector.load %arg2[%c264, %c0_16] : memref<376x128xf32, #tpu.memory_space<vmem>>, vector<32x128xf32>
    %c296 = arith.constant 296 : index
    %c0_17 = arith.constant 0 : index
    %24 = vector.load %arg2[%c296, %c0_17] : memref<376x128xf32, #tpu.memory_space<vmem>>, vector<1x128xf32>
    %c0_18 = arith.constant 0 : index
    %c0_19 = arith.constant 0 : index
    %25 = vector.load %arg1[%c0_18, %c0_19] : memref<8x32xf32, #tpu.memory_space<vmem>>, vector<5x32xf32>
    %cst_20 = arith.constant dense<0.000000e+00> : vector<5x128xf32>
    %26 = tpu.matmul %25, %22, %cst_20 {dimension_numbers = #tpu.dot_dimension_numbers<[1], [0], [0], [1], [0, 0, 1, 1], [], []>} : vector<5x32xf32>, vector<32x128xf32>, vector<5x128xf32> -> vector<5x128xf32>
    %27 = vector.broadcast %24 : vector<1x128xf32> to vector<5x128xf32>
    %28 = arith.addf %26, %27 : vector<5x128xf32>
    %cst_21 = arith.constant 0.000000e+00 : f32
    %29 = vector.broadcast %cst_21 : f32 to vector<1x32xf32>
    %cst_22 = arith.constant 0.000000e+00 : f32
    %30 = vector.broadcast %cst_22 : f32 to vector<1x32xf32>
    %31 = vector.extract_strided_slice %28 {offsets = [0, 0], sizes = [1, 128], strides = [1, 1]} : vector<5x128xf32> to vector<1x128xf32>
    %cst_23 = arith.constant dense<0.000000e+00> : vector<1x128xf32>
    %32 = tpu.matmul %29, %23, %cst_23 {dimension_numbers = #tpu.dot_dimension_numbers<[1], [0], [0], [1], [0, 0, 1, 1], [], []>} : vector<1x32xf32>, vector<32x128xf32>, vector<1x128xf32> -> vector<1x128xf32>
    %33 = arith.addf %31, %32 : vector<1x128xf32>
    %34 = vector.extract_strided_slice %33 {offsets = [0, 0], sizes = [1, 96], strides = [1, 1]} : vector<1x128xf32> to vector<1x96xf32>
    %35 = arith.negf %34 : vector<1x96xf32>
    %36 = math.exp %35 : vector<1x96xf32>
    %cst_24 = arith.constant 1.000000e+00 : f32
    %37 = vector.broadcast %cst_24 : f32 to vector<1x96xf32>
    %38 = arith.addf %37, %36 : vector<1x96xf32>
    %39 = arith.divf %37, %38 : vector<1x96xf32>
    %40 = vector.extract_strided_slice %33 {offsets = [0, 96], sizes = [1, 32], strides = [1, 1]} : vector<1x128xf32> to vector<1x32xf32>
    %41 = math.tanh %40 : vector<1x32xf32>
    %42 = vector.extract_strided_slice %39 {offsets = [0, 32], sizes = [1, 32], strides = [1, 1]} : vector<1x96xf32> to vector<1x32xf32>
    %43 = arith.mulf %42, %30 : vector<1x32xf32>
    %44 = vector.extract_strided_slice %39 {offsets = [0, 0], sizes = [1, 32], strides = [1, 1]} : vector<1x96xf32> to vector<1x32xf32>
    %45 = arith.mulf %44, %41 : vector<1x32xf32>
    %46 = arith.addf %43, %45 : vector<1x32xf32>
    %47 = vector.extract_strided_slice %39 {offsets = [0, 64], sizes = [1, 32], strides = [1, 1]} : vector<1x96xf32> to vector<1x32xf32>
    %48 = math.tanh %46 : vector<1x32xf32>
    %49 = arith.mulf %47, %48 : vector<1x32xf32>
    %50 = vector.extract_strided_slice %28 {offsets = [1, 0], sizes = [1, 128], strides = [1, 1]} : vector<5x128xf32> to vector<1x128xf32>
    %cst_25 = arith.constant dense<0.000000e+00> : vector<1x128xf32>
    %51 = tpu.matmul %49, %23, %cst_25 {dimension_numbers = #tpu.dot_dimension_numbers<[1], [0], [0], [1], [0, 0, 1, 1], [], []>} : vector<1x32xf32>, vector<32x128xf32>, vector<1x128xf32> -> vector<1x128xf32>
    %52 = arith.addf %50, %51 : vector<1x128xf32>
    %53 = vector.extract_strided_slice %52 {offsets = [0, 0], sizes = [1, 96], strides = [1, 1]} : vector<1x128xf32> to vector<1x96xf32>
    %54 = arith.negf %53 : vector<1x96xf32>
    %55 = math.exp %54 : vector<1x96xf32>
    %cst_26 = arith.constant 1.000000e+00 : f32
    %56 = vector.broadcast %cst_26 : f32 to vector<1x96xf32>
    %57 = arith.addf %56, %55 : vector<1x96xf32>
    %58 = arith.divf %56, %57 : vector<1x96xf32>
    %59 = vector.extract_strided_slice %52 {offsets = [0, 96], sizes = [1, 32], strides = [1, 1]} : vector<1x128xf32> to vector<1x32xf32>
    %60 = math.tanh %59 : vector<1x32xf32>
    %61 = vector.extract_strided_slice %58 {offsets = [0, 32], sizes = [1, 32], strides = [1, 1]} : vector<1x96xf32> to vector<1x32xf32>
    %62 = arith.mulf %61, %46 : vector<1x32xf32>
    %63 = vector.extract_strided_slice %58 {offsets = [0, 0], sizes = [1, 32], strides = [1, 1]} : vector<1x96xf32> to vector<1x32xf32>
    %64 = arith.mulf %63, %60 : vector<1x32xf32>
    %65 = arith.addf %62, %64 : vector<1x32xf32>
    %66 = vector.extract_strided_slice %58 {offsets = [0, 64], sizes = [1, 32], strides = [1, 1]} : vector<1x96xf32> to vector<1x32xf32>
    %67 = math.tanh %65 : vector<1x32xf32>
    %68 = arith.mulf %66, %67 : vector<1x32xf32>
    %69 = vector.extract_strided_slice %28 {offsets = [2, 0], sizes = [1, 128], strides = [1, 1]} : vector<5x128xf32> to vector<1x128xf32>
    %cst_27 = arith.constant dense<0.000000e+00> : vector<1x128xf32>
    %70 = tpu.matmul %68, %23, %cst_27 {dimension_numbers = #tpu.dot_dimension_numbers<[1], [0], [0], [1], [0, 0, 1, 1], [], []>} : vector<1x32xf32>, vector<32x128xf32>, vector<1x128xf32> -> vector<1x128xf32>
    %71 = arith.addf %69, %70 : vector<1x128xf32>
    %72 = vector.extract_strided_slice %71 {offsets = [0, 0], sizes = [1, 96], strides = [1, 1]} : vector<1x128xf32> to vector<1x96xf32>
    %73 = arith.negf %72 : vector<1x96xf32>
    %74 = math.exp %73 : vector<1x96xf32>
    %cst_28 = arith.constant 1.000000e+00 : f32
    %75 = vector.broadcast %cst_28 : f32 to vector<1x96xf32>
    %76 = arith.addf %75, %74 : vector<1x96xf32>
    %77 = arith.divf %75, %76 : vector<1x96xf32>
    %78 = vector.extract_strided_slice %71 {offsets = [0, 96], sizes = [1, 32], strides = [1, 1]} : vector<1x128xf32> to vector<1x32xf32>
    %79 = math.tanh %78 : vector<1x32xf32>
    %80 = vector.extract_strided_slice %77 {offsets = [0, 32], sizes = [1, 32], strides = [1, 1]} : vector<1x96xf32> to vector<1x32xf32>
    %81 = arith.mulf %80, %65 : vector<1x32xf32>
    %82 = vector.extract_strided_slice %77 {offsets = [0, 0], sizes = [1, 32], strides = [1, 1]} : vector<1x96xf32> to vector<1x32xf32>
    %83 = arith.mulf %82, %79 : vector<1x32xf32>
    %84 = arith.addf %81, %83 : vector<1x32xf32>
    %85 = vector.extract_strided_slice %77 {offsets = [0, 64], sizes = [1, 32], strides = [1, 1]} : vector<1x96xf32> to vector<1x32xf32>
    %86 = math.tanh %84 : vector<1x32xf32>
    %87 = arith.mulf %85, %86 : vector<1x32xf32>
    %88 = vector.extract_strided_slice %28 {offsets = [3, 0], sizes = [1, 128], strides = [1, 1]} : vector<5x128xf32> to vector<1x128xf32>
    %cst_29 = arith.constant dense<0.000000e+00> : vector<1x128xf32>
    %89 = tpu.matmul %87, %23, %cst_29 {dimension_numbers = #tpu.dot_dimension_numbers<[1], [0], [0], [1], [0, 0, 1, 1], [], []>} : vector<1x32xf32>, vector<32x128xf32>, vector<1x128xf32> -> vector<1x128xf32>
    %90 = arith.addf %88, %89 : vector<1x128xf32>
    %91 = vector.extract_strided_slice %90 {offsets = [0, 0], sizes = [1, 96], strides = [1, 1]} : vector<1x128xf32> to vector<1x96xf32>
    %92 = arith.negf %91 : vector<1x96xf32>
    %93 = math.exp %92 : vector<1x96xf32>
    %cst_30 = arith.constant 1.000000e+00 : f32
    %94 = vector.broadcast %cst_30 : f32 to vector<1x96xf32>
    %95 = arith.addf %94, %93 : vector<1x96xf32>
    %96 = arith.divf %94, %95 : vector<1x96xf32>
    %97 = vector.extract_strided_slice %90 {offsets = [0, 96], sizes = [1, 32], strides = [1, 1]} : vector<1x128xf32> to vector<1x32xf32>
    %98 = math.tanh %97 : vector<1x32xf32>
    %99 = vector.extract_strided_slice %96 {offsets = [0, 32], sizes = [1, 32], strides = [1, 1]} : vector<1x96xf32> to vector<1x32xf32>
    %100 = arith.mulf %99, %84 : vector<1x32xf32>
    %101 = vector.extract_strided_slice %96 {offsets = [0, 0], sizes = [1, 32], strides = [1, 1]} : vector<1x96xf32> to vector<1x32xf32>
    %102 = arith.mulf %101, %98 : vector<1x32xf32>
    %103 = arith.addf %100, %102 : vector<1x32xf32>
    %104 = vector.extract_strided_slice %96 {offsets = [0, 64], sizes = [1, 32], strides = [1, 1]} : vector<1x96xf32> to vector<1x32xf32>
    %105 = math.tanh %103 : vector<1x32xf32>
    %106 = arith.mulf %104, %105 : vector<1x32xf32>
    %107 = vector.extract_strided_slice %28 {offsets = [4, 0], sizes = [1, 128], strides = [1, 1]} : vector<5x128xf32> to vector<1x128xf32>
    %cst_31 = arith.constant dense<0.000000e+00> : vector<1x128xf32>
    %108 = tpu.matmul %106, %23, %cst_31 {dimension_numbers = #tpu.dot_dimension_numbers<[1], [0], [0], [1], [0, 0, 1, 1], [], []>} : vector<1x32xf32>, vector<32x128xf32>, vector<1x128xf32> -> vector<1x128xf32>
    %109 = arith.addf %107, %108 : vector<1x128xf32>
    %110 = vector.extract_strided_slice %109 {offsets = [0, 0], sizes = [1, 96], strides = [1, 1]} : vector<1x128xf32> to vector<1x96xf32>
    %111 = arith.negf %110 : vector<1x96xf32>
    %112 = math.exp %111 : vector<1x96xf32>
    %cst_32 = arith.constant 1.000000e+00 : f32
    %113 = vector.broadcast %cst_32 : f32 to vector<1x96xf32>
    %114 = arith.addf %113, %112 : vector<1x96xf32>
    %115 = arith.divf %113, %114 : vector<1x96xf32>
    %116 = vector.extract_strided_slice %109 {offsets = [0, 96], sizes = [1, 32], strides = [1, 1]} : vector<1x128xf32> to vector<1x32xf32>
    %117 = math.tanh %116 : vector<1x32xf32>
    %118 = vector.extract_strided_slice %115 {offsets = [0, 32], sizes = [1, 32], strides = [1, 1]} : vector<1x96xf32> to vector<1x32xf32>
    %119 = arith.mulf %118, %103 : vector<1x32xf32>
    %120 = vector.extract_strided_slice %115 {offsets = [0, 0], sizes = [1, 32], strides = [1, 1]} : vector<1x96xf32> to vector<1x32xf32>
    %121 = arith.mulf %120, %117 : vector<1x32xf32>
    %122 = arith.addf %119, %121 : vector<1x32xf32>
    %123 = vector.extract_strided_slice %115 {offsets = [0, 64], sizes = [1, 32], strides = [1, 1]} : vector<1x96xf32> to vector<1x32xf32>
    %124 = math.tanh %122 : vector<1x32xf32>
    %125 = arith.mulf %123, %124 : vector<1x32xf32>
    %c304 = arith.constant 304 : index
    %c0_33 = arith.constant 0 : index
    %126 = vector.load %arg2[%c304, %c0_33] : memref<376x128xf32, #tpu.memory_space<vmem>>, vector<32x128xf32>
    %c336 = arith.constant 336 : index
    %c0_34 = arith.constant 0 : index
    %127 = vector.load %arg2[%c336, %c0_34] : memref<376x128xf32, #tpu.memory_space<vmem>>, vector<32x128xf32>
    %c368 = arith.constant 368 : index
    %c0_35 = arith.constant 0 : index
    %128 = vector.load %arg2[%c368, %c0_35] : memref<376x128xf32, #tpu.memory_space<vmem>>, vector<1x128xf32>
    %cst_36 = arith.constant 0.000000e+00 : f32
    %129 = vector.broadcast %cst_36 : f32 to vector<1x32xf32>
    %cst_37 = arith.constant 0.000000e+00 : f32
    %130 = vector.broadcast %cst_37 : f32 to vector<1x32xf32>
    %cst_38 = arith.constant dense<0.000000e+00> : vector<1x128xf32>
    %131 = tpu.matmul %49, %126, %cst_38 {dimension_numbers = #tpu.dot_dimension_numbers<[1], [0], [0], [1], [0, 0, 1, 1], [], []>} : vector<1x32xf32>, vector<32x128xf32>, vector<1x128xf32> -> vector<1x128xf32>
    %cst_39 = arith.constant dense<0.000000e+00> : vector<1x128xf32>
    %132 = tpu.matmul %129, %127, %cst_39 {dimension_numbers = #tpu.dot_dimension_numbers<[1], [0], [0], [1], [0, 0, 1, 1], [], []>} : vector<1x32xf32>, vector<32x128xf32>, vector<1x128xf32> -> vector<1x128xf32>
    %133 = arith.addf %131, %132 : vector<1x128xf32>
    %134 = arith.addf %133, %128 : vector<1x128xf32>
    %135 = vector.extract_strided_slice %134 {offsets = [0, 0], sizes = [1, 96], strides = [1, 1]} : vector<1x128xf32> to vector<1x96xf32>
    %136 = arith.negf %135 : vector<1x96xf32>
    %137 = math.exp %136 : vector<1x96xf32>
    %cst_40 = arith.constant 1.000000e+00 : f32
    %138 = vector.broadcast %cst_40 : f32 to vector<1x96xf32>
    %139 = arith.addf %138, %137 : vector<1x96xf32>
    %140 = arith.divf %138, %139 : vector<1x96xf32>
    %141 = vector.extract_strided_slice %134 {offsets = [0, 96], sizes = [1, 32], strides = [1, 1]} : vector<1x128xf32> to vector<1x32xf32>
    %142 = math.tanh %141 : vector<1x32xf32>
    %143 = vector.extract_strided_slice %140 {offsets = [0, 32], sizes = [1, 32], strides = [1, 1]} : vector<1x96xf32> to vector<1x32xf32>
    %144 = arith.mulf %143, %130 : vector<1x32xf32>
    %145 = vector.extract_strided_slice %140 {offsets = [0, 0], sizes = [1, 32], strides = [1, 1]} : vector<1x96xf32> to vector<1x32xf32>
    %146 = arith.mulf %145, %142 : vector<1x32xf32>
    %147 = arith.addf %144, %146 : vector<1x32xf32>
    %148 = vector.extract_strided_slice %140 {offsets = [0, 64], sizes = [1, 32], strides = [1, 1]} : vector<1x96xf32> to vector<1x32xf32>
    %149 = math.tanh %147 : vector<1x32xf32>
    %150 = arith.mulf %148, %149 : vector<1x32xf32>
    %cst_41 = arith.constant dense<0.000000e+00> : vector<1x128xf32>
    %151 = tpu.matmul %68, %126, %cst_41 {dimension_numbers = #tpu.dot_dimension_numbers<[1], [0], [0], [1], [0, 0, 1, 1], [], []>} : vector<1x32xf32>, vector<32x128xf32>, vector<1x128xf32> -> vector<1x128xf32>
    %cst_42 = arith.constant dense<0.000000e+00> : vector<1x128xf32>
    %152 = tpu.matmul %150, %127, %cst_42 {dimension_numbers = #tpu.dot_dimension_numbers<[1], [0], [0], [1], [0, 0, 1, 1], [], []>} : vector<1x32xf32>, vector<32x128xf32>, vector<1x128xf32> -> vector<1x128xf32>
    %153 = arith.addf %151, %152 : vector<1x128xf32>
    %154 = arith.addf %153, %128 : vector<1x128xf32>
    %155 = vector.extract_strided_slice %154 {offsets = [0, 0], sizes = [1, 96], strides = [1, 1]} : vector<1x128xf32> to vector<1x96xf32>
    %156 = arith.negf %155 : vector<1x96xf32>
    %157 = math.exp %156 : vector<1x96xf32>
    %cst_43 = arith.constant 1.000000e+00 : f32
    %158 = vector.broadcast %cst_43 : f32 to vector<1x96xf32>
    %159 = arith.addf %158, %157 : vector<1x96xf32>
    %160 = arith.divf %158, %159 : vector<1x96xf32>
    %161 = vector.extract_strided_slice %154 {offsets = [0, 96], sizes = [1, 32], strides = [1, 1]} : vector<1x128xf32> to vector<1x32xf32>
    %162 = math.tanh %161 : vector<1x32xf32>
    %163 = vector.extract_strided_slice %160 {offsets = [0, 32], sizes = [1, 32], strides = [1, 1]} : vector<1x96xf32> to vector<1x32xf32>
    %164 = arith.mulf %163, %147 : vector<1x32xf32>
    %165 = vector.extract_strided_slice %160 {offsets = [0, 0], sizes = [1, 32], strides = [1, 1]} : vector<1x96xf32> to vector<1x32xf32>
    %166 = arith.mulf %165, %162 : vector<1x32xf32>
    %167 = arith.addf %164, %166 : vector<1x32xf32>
    %168 = vector.extract_strided_slice %160 {offsets = [0, 64], sizes = [1, 32], strides = [1, 1]} : vector<1x96xf32> to vector<1x32xf32>
    %169 = math.tanh %167 : vector<1x32xf32>
    %170 = arith.mulf %168, %169 : vector<1x32xf32>
    %cst_44 = arith.constant dense<0.000000e+00> : vector<1x128xf32>
    %171 = tpu.matmul %87, %126, %cst_44 {dimension_numbers = #tpu.dot_dimension_numbers<[1], [0], [0], [1], [0, 0, 1, 1], [], []>} : vector<1x32xf32>, vector<32x128xf32>, vector<1x128xf32> -> vector<1x128xf32>
    %cst_45 = arith.constant dense<0.000000e+00> : vector<1x128xf32>
    %172 = tpu.matmul %170, %127, %cst_45 {dimension_numbers = #tpu.dot_dimension_numbers<[1], [0], [0], [1], [0, 0, 1, 1], [], []>} : vector<1x32xf32>, vector<32x128xf32>, vector<1x128xf32> -> vector<1x128xf32>
    %173 = arith.addf %171, %172 : vector<1x128xf32>
    %174 = arith.addf %173, %128 : vector<1x128xf32>
    %175 = vector.extract_strided_slice %174 {offsets = [0, 0], sizes = [1, 96], strides = [1, 1]} : vector<1x128xf32> to vector<1x96xf32>
    %176 = arith.negf %175 : vector<1x96xf32>
    %177 = math.exp %176 : vector<1x96xf32>
    %cst_46 = arith.constant 1.000000e+00 : f32
    %178 = vector.broadcast %cst_46 : f32 to vector<1x96xf32>
    %179 = arith.addf %178, %177 : vector<1x96xf32>
    %180 = arith.divf %178, %179 : vector<1x96xf32>
    %181 = vector.extract_strided_slice %174 {offsets = [0, 96], sizes = [1, 32], strides = [1, 1]} : vector<1x128xf32> to vector<1x32xf32>
    %182 = math.tanh %181 : vector<1x32xf32>
    %183 = vector.extract_strided_slice %180 {offsets = [0, 32], sizes = [1, 32], strides = [1, 1]} : vector<1x96xf32> to vector<1x32xf32>
    %184 = arith.mulf %183, %167 : vector<1x32xf32>
    %185 = vector.extract_strided_slice %180 {offsets = [0, 0], sizes = [1, 32], strides = [1, 1]} : vector<1x96xf32> to vector<1x32xf32>
    %186 = arith.mulf %185, %182 : vector<1x32xf32>
    %187 = arith.addf %184, %186 : vector<1x32xf32>
    %188 = vector.extract_strided_slice %180 {offsets = [0, 64], sizes = [1, 32], strides = [1, 1]} : vector<1x96xf32> to vector<1x32xf32>
    %189 = math.tanh %187 : vector<1x32xf32>
    %190 = arith.mulf %188, %189 : vector<1x32xf32>
    %cst_47 = arith.constant dense<0.000000e+00> : vector<1x128xf32>
    %191 = tpu.matmul %106, %126, %cst_47 {dimension_numbers = #tpu.dot_dimension_numbers<[1], [0], [0], [1], [0, 0, 1, 1], [], []>} : vector<1x32xf32>, vector<32x128xf32>, vector<1x128xf32> -> vector<1x128xf32>
    %cst_48 = arith.constant dense<0.000000e+00> : vector<1x128xf32>
    %192 = tpu.matmul %190, %127, %cst_48 {dimension_numbers = #tpu.dot_dimension_numbers<[1], [0], [0], [1], [0, 0, 1, 1], [], []>} : vector<1x32xf32>, vector<32x128xf32>, vector<1x128xf32> -> vector<1x128xf32>
    %193 = arith.addf %191, %192 : vector<1x128xf32>
    %194 = arith.addf %193, %128 : vector<1x128xf32>
    %195 = vector.extract_strided_slice %194 {offsets = [0, 0], sizes = [1, 96], strides = [1, 1]} : vector<1x128xf32> to vector<1x96xf32>
    %196 = arith.negf %195 : vector<1x96xf32>
    %197 = math.exp %196 : vector<1x96xf32>
    %cst_49 = arith.constant 1.000000e+00 : f32
    %198 = vector.broadcast %cst_49 : f32 to vector<1x96xf32>
    %199 = arith.addf %198, %197 : vector<1x96xf32>
    %200 = arith.divf %198, %199 : vector<1x96xf32>
    %201 = vector.extract_strided_slice %194 {offsets = [0, 96], sizes = [1, 32], strides = [1, 1]} : vector<1x128xf32> to vector<1x32xf32>
    %202 = math.tanh %201 : vector<1x32xf32>
    %203 = vector.extract_strided_slice %200 {offsets = [0, 32], sizes = [1, 32], strides = [1, 1]} : vector<1x96xf32> to vector<1x32xf32>
    %204 = arith.mulf %203, %187 : vector<1x32xf32>
    %205 = vector.extract_strided_slice %200 {offsets = [0, 0], sizes = [1, 32], strides = [1, 1]} : vector<1x96xf32> to vector<1x32xf32>
    %206 = arith.mulf %205, %202 : vector<1x32xf32>
    %207 = arith.addf %204, %206 : vector<1x32xf32>
    %208 = vector.extract_strided_slice %200 {offsets = [0, 64], sizes = [1, 32], strides = [1, 1]} : vector<1x96xf32> to vector<1x32xf32>
    %209 = math.tanh %207 : vector<1x32xf32>
    %210 = arith.mulf %208, %209 : vector<1x32xf32>
    %cst_50 = arith.constant dense<0.000000e+00> : vector<1x128xf32>
    %211 = tpu.matmul %125, %126, %cst_50 {dimension_numbers = #tpu.dot_dimension_numbers<[1], [0], [0], [1], [0, 0, 1, 1], [], []>} : vector<1x32xf32>, vector<32x128xf32>, vector<1x128xf32> -> vector<1x128xf32>
    %cst_51 = arith.constant dense<0.000000e+00> : vector<1x128xf32>
    %212 = tpu.matmul %210, %127, %cst_51 {dimension_numbers = #tpu.dot_dimension_numbers<[1], [0], [0], [1], [0, 0, 1, 1], [], []>} : vector<1x32xf32>, vector<32x128xf32>, vector<1x128xf32> -> vector<1x128xf32>
    %213 = arith.addf %211, %212 : vector<1x128xf32>
    %214 = arith.addf %213, %128 : vector<1x128xf32>
    %215 = vector.extract_strided_slice %214 {offsets = [0, 0], sizes = [1, 96], strides = [1, 1]} : vector<1x128xf32> to vector<1x96xf32>
    %216 = arith.negf %215 : vector<1x96xf32>
    %217 = math.exp %216 : vector<1x96xf32>
    %cst_52 = arith.constant 1.000000e+00 : f32
    %218 = vector.broadcast %cst_52 : f32 to vector<1x96xf32>
    %219 = arith.addf %218, %217 : vector<1x96xf32>
    %220 = arith.divf %218, %219 : vector<1x96xf32>
    %221 = vector.extract_strided_slice %214 {offsets = [0, 96], sizes = [1, 32], strides = [1, 1]} : vector<1x128xf32> to vector<1x32xf32>
    %222 = math.tanh %221 : vector<1x32xf32>
    %223 = vector.extract_strided_slice %220 {offsets = [0, 32], sizes = [1, 32], strides = [1, 1]} : vector<1x96xf32> to vector<1x32xf32>
    %224 = arith.mulf %223, %207 : vector<1x32xf32>
    %225 = vector.extract_strided_slice %220 {offsets = [0, 0], sizes = [1, 32], strides = [1, 1]} : vector<1x96xf32> to vector<1x32xf32>
    %226 = arith.mulf %225, %222 : vector<1x32xf32>
    %227 = arith.addf %224, %226 : vector<1x32xf32>
    %228 = vector.extract_strided_slice %220 {offsets = [0, 64], sizes = [1, 32], strides = [1, 1]} : vector<1x96xf32> to vector<1x32xf32>
    %229 = math.tanh %227 : vector<1x32xf32>
    %230 = arith.mulf %228, %229 : vector<1x32xf32>
    %c0_53 = arith.constant 0 : index
    %c0_54 = arith.constant 0 : index
    %231 = vector.load %arg3[%c0_53, %c0_54] : memref<272x256xf32, #tpu.memory_space<vmem>>, vector<32x256xf32>
    %c64 = arith.constant 64 : index
    %c0_55 = arith.constant 0 : index
    %232 = vector.load %arg3[%c64, %c0_55] : memref<272x256xf32, #tpu.memory_space<vmem>>, vector<64x256xf32>
    %c128 = arith.constant 128 : index
    %c0_56 = arith.constant 0 : index
    %233 = vector.load %arg3[%c128, %c0_56] : memref<272x256xf32, #tpu.memory_space<vmem>>, vector<1x256xf32>
    %cst_57 = arith.constant 0.000000e+00 : f32
    %234 = vector.broadcast %cst_57 : f32 to vector<1x64xf32>
    %cst_58 = arith.constant 0.000000e+00 : f32
    %235 = vector.broadcast %cst_58 : f32 to vector<1x64xf32>
    %cst_59 = arith.constant dense<0.000000e+00> : vector<1x256xf32>
    %236 = tpu.matmul %150, %231, %cst_59 {dimension_numbers = #tpu.dot_dimension_numbers<[1], [0], [0], [1], [0, 0, 1, 1], [], []>} : vector<1x32xf32>, vector<32x256xf32>, vector<1x256xf32> -> vector<1x256xf32>
    %cst_60 = arith.constant dense<0.000000e+00> : vector<1x256xf32>
    %237 = tpu.matmul %234, %232, %cst_60 {dimension_numbers = #tpu.dot_dimension_numbers<[1], [0], [0], [1], [0, 0, 1, 1], [], []>} : vector<1x64xf32>, vector<64x256xf32>, vector<1x256xf32> -> vector<1x256xf32>
    %238 = arith.addf %236, %237 : vector<1x256xf32>
    %239 = arith.addf %238, %233 : vector<1x256xf32>
    %240 = vector.extract_strided_slice %239 {offsets = [0, 0], sizes = [1, 192], strides = [1, 1]} : vector<1x256xf32> to vector<1x192xf32>
    %241 = arith.negf %240 : vector<1x192xf32>
    %242 = math.exp %241 : vector<1x192xf32>
    %cst_61 = arith.constant 1.000000e+00 : f32
    %243 = vector.broadcast %cst_61 : f32 to vector<1x192xf32>
    %244 = arith.addf %243, %242 : vector<1x192xf32>
    %245 = arith.divf %243, %244 : vector<1x192xf32>
    %246 = vector.extract_strided_slice %239 {offsets = [0, 192], sizes = [1, 64], strides = [1, 1]} : vector<1x256xf32> to vector<1x64xf32>
    %247 = math.tanh %246 : vector<1x64xf32>
    %248 = vector.extract_strided_slice %245 {offsets = [0, 64], sizes = [1, 64], strides = [1, 1]} : vector<1x192xf32> to vector<1x64xf32>
    %249 = arith.mulf %248, %235 : vector<1x64xf32>
    %250 = vector.extract_strided_slice %245 {offsets = [0, 0], sizes = [1, 64], strides = [1, 1]} : vector<1x192xf32> to vector<1x64xf32>
    %251 = arith.mulf %250, %247 : vector<1x64xf32>
    %252 = arith.addf %249, %251 : vector<1x64xf32>
    %253 = vector.extract_strided_slice %245 {offsets = [0, 128], sizes = [1, 64], strides = [1, 1]} : vector<1x192xf32> to vector<1x64xf32>
    %254 = math.tanh %252 : vector<1x64xf32>
    %255 = arith.mulf %253, %254 : vector<1x64xf32>
    %cst_62 = arith.constant dense<0.000000e+00> : vector<1x256xf32>
    %256 = tpu.matmul %170, %231, %cst_62 {dimension_numbers = #tpu.dot_dimension_numbers<[1], [0], [0], [1], [0, 0, 1, 1], [], []>} : vector<1x32xf32>, vector<32x256xf32>, vector<1x256xf32> -> vector<1x256xf32>
    %cst_63 = arith.constant dense<0.000000e+00> : vector<1x256xf32>
    %257 = tpu.matmul %255, %232, %cst_63 {dimension_numbers = #tpu.dot_dimension_numbers<[1], [0], [0], [1], [0, 0, 1, 1], [], []>} : vector<1x64xf32>, vector<64x256xf32>, vector<1x256xf32> -> vector<1x256xf32>
    %258 = arith.addf %256, %257 : vector<1x256xf32>
    %259 = arith.addf %258, %233 : vector<1x256xf32>
    %260 = vector.extract_strided_slice %259 {offsets = [0, 0], sizes = [1, 192], strides = [1, 1]} : vector<1x256xf32> to vector<1x192xf32>
    %261 = arith.negf %260 : vector<1x192xf32>
    %262 = math.exp %261 : vector<1x192xf32>
    %cst_64 = arith.constant 1.000000e+00 : f32
    %263 = vector.broadcast %cst_64 : f32 to vector<1x192xf32>
    %264 = arith.addf %263, %262 : vector<1x192xf32>
    %265 = arith.divf %263, %264 : vector<1x192xf32>
    %266 = vector.extract_strided_slice %259 {offsets = [0, 192], sizes = [1, 64], strides = [1, 1]} : vector<1x256xf32> to vector<1x64xf32>
    %267 = math.tanh %266 : vector<1x64xf32>
    %268 = vector.extract_strided_slice %265 {offsets = [0, 64], sizes = [1, 64], strides = [1, 1]} : vector<1x192xf32> to vector<1x64xf32>
    %269 = arith.mulf %268, %252 : vector<1x64xf32>
    %270 = vector.extract_strided_slice %265 {offsets = [0, 0], sizes = [1, 64], strides = [1, 1]} : vector<1x192xf32> to vector<1x64xf32>
    %271 = arith.mulf %270, %267 : vector<1x64xf32>
    %272 = arith.addf %269, %271 : vector<1x64xf32>
    %273 = vector.extract_strided_slice %265 {offsets = [0, 128], sizes = [1, 64], strides = [1, 1]} : vector<1x192xf32> to vector<1x64xf32>
    %274 = math.tanh %272 : vector<1x64xf32>
    %275 = arith.mulf %273, %274 : vector<1x64xf32>
    %cst_65 = arith.constant dense<0.000000e+00> : vector<1x256xf32>
    %276 = tpu.matmul %190, %231, %cst_65 {dimension_numbers = #tpu.dot_dimension_numbers<[1], [0], [0], [1], [0, 0, 1, 1], [], []>} : vector<1x32xf32>, vector<32x256xf32>, vector<1x256xf32> -> vector<1x256xf32>
    %cst_66 = arith.constant dense<0.000000e+00> : vector<1x256xf32>
    %277 = tpu.matmul %275, %232, %cst_66 {dimension_numbers = #tpu.dot_dimension_numbers<[1], [0], [0], [1], [0, 0, 1, 1], [], []>} : vector<1x64xf32>, vector<64x256xf32>, vector<1x256xf32> -> vector<1x256xf32>
    %278 = arith.addf %276, %277 : vector<1x256xf32>
    %279 = arith.addf %278, %233 : vector<1x256xf32>
    %280 = vector.extract_strided_slice %279 {offsets = [0, 0], sizes = [1, 192], strides = [1, 1]} : vector<1x256xf32> to vector<1x192xf32>
    %281 = arith.negf %280 : vector<1x192xf32>
    %282 = math.exp %281 : vector<1x192xf32>
    %cst_67 = arith.constant 1.000000e+00 : f32
    %283 = vector.broadcast %cst_67 : f32 to vector<1x192xf32>
    %284 = arith.addf %283, %282 : vector<1x192xf32>
    %285 = arith.divf %283, %284 : vector<1x192xf32>
    %286 = vector.extract_strided_slice %279 {offsets = [0, 192], sizes = [1, 64], strides = [1, 1]} : vector<1x256xf32> to vector<1x64xf32>
    %287 = math.tanh %286 : vector<1x64xf32>
    %288 = vector.extract_strided_slice %285 {offsets = [0, 64], sizes = [1, 64], strides = [1, 1]} : vector<1x192xf32> to vector<1x64xf32>
    %289 = arith.mulf %288, %272 : vector<1x64xf32>
    %290 = vector.extract_strided_slice %285 {offsets = [0, 0], sizes = [1, 64], strides = [1, 1]} : vector<1x192xf32> to vector<1x64xf32>
    %291 = arith.mulf %290, %287 : vector<1x64xf32>
    %292 = arith.addf %289, %291 : vector<1x64xf32>
    %293 = vector.extract_strided_slice %285 {offsets = [0, 128], sizes = [1, 64], strides = [1, 1]} : vector<1x192xf32> to vector<1x64xf32>
    %294 = math.tanh %292 : vector<1x64xf32>
    %295 = arith.mulf %293, %294 : vector<1x64xf32>
    %cst_68 = arith.constant dense<0.000000e+00> : vector<1x256xf32>
    %296 = tpu.matmul %210, %231, %cst_68 {dimension_numbers = #tpu.dot_dimension_numbers<[1], [0], [0], [1], [0, 0, 1, 1], [], []>} : vector<1x32xf32>, vector<32x256xf32>, vector<1x256xf32> -> vector<1x256xf32>
    %cst_69 = arith.constant dense<0.000000e+00> : vector<1x256xf32>
    %297 = tpu.matmul %295, %232, %cst_69 {dimension_numbers = #tpu.dot_dimension_numbers<[1], [0], [0], [1], [0, 0, 1, 1], [], []>} : vector<1x64xf32>, vector<64x256xf32>, vector<1x256xf32> -> vector<1x256xf32>
    %298 = arith.addf %296, %297 : vector<1x256xf32>
    %299 = arith.addf %298, %233 : vector<1x256xf32>
    %300 = vector.extract_strided_slice %299 {offsets = [0, 0], sizes = [1, 192], strides = [1, 1]} : vector<1x256xf32> to vector<1x192xf32>
    %301 = arith.negf %300 : vector<1x192xf32>
    %302 = math.exp %301 : vector<1x192xf32>
    %cst_70 = arith.constant 1.000000e+00 : f32
    %303 = vector.broadcast %cst_70 : f32 to vector<1x192xf32>
    %304 = arith.addf %303, %302 : vector<1x192xf32>
    %305 = arith.divf %303, %304 : vector<1x192xf32>
    %306 = vector.extract_strided_slice %299 {offsets = [0, 192], sizes = [1, 64], strides = [1, 1]} : vector<1x256xf32> to vector<1x64xf32>
    %307 = math.tanh %306 : vector<1x64xf32>
    %308 = vector.extract_strided_slice %305 {offsets = [0, 64], sizes = [1, 64], strides = [1, 1]} : vector<1x192xf32> to vector<1x64xf32>
    %309 = arith.mulf %308, %292 : vector<1x64xf32>
    %310 = vector.extract_strided_slice %305 {offsets = [0, 0], sizes = [1, 64], strides = [1, 1]} : vector<1x192xf32> to vector<1x64xf32>
    %311 = arith.mulf %310, %307 : vector<1x64xf32>
    %312 = arith.addf %309, %311 : vector<1x64xf32>
    %313 = vector.extract_strided_slice %305 {offsets = [0, 128], sizes = [1, 64], strides = [1, 1]} : vector<1x192xf32> to vector<1x64xf32>
    %314 = math.tanh %312 : vector<1x64xf32>
    %315 = arith.mulf %313, %314 : vector<1x64xf32>
    %cst_71 = arith.constant dense<0.000000e+00> : vector<1x256xf32>
    %316 = tpu.matmul %230, %231, %cst_71 {dimension_numbers = #tpu.dot_dimension_numbers<[1], [0], [0], [1], [0, 0, 1, 1], [], []>} : vector<1x32xf32>, vector<32x256xf32>, vector<1x256xf32> -> vector<1x256xf32>
    %cst_72 = arith.constant dense<0.000000e+00> : vector<1x256xf32>
    %317 = tpu.matmul %315, %232, %cst_72 {dimension_numbers = #tpu.dot_dimension_numbers<[1], [0], [0], [1], [0, 0, 1, 1], [], []>} : vector<1x64xf32>, vector<64x256xf32>, vector<1x256xf32> -> vector<1x256xf32>
    %318 = arith.addf %316, %317 : vector<1x256xf32>
    %319 = arith.addf %318, %233 : vector<1x256xf32>
    %320 = vector.extract_strided_slice %319 {offsets = [0, 0], sizes = [1, 192], strides = [1, 1]} : vector<1x256xf32> to vector<1x192xf32>
    %321 = arith.negf %320 : vector<1x192xf32>
    %322 = math.exp %321 : vector<1x192xf32>
    %cst_73 = arith.constant 1.000000e+00 : f32
    %323 = vector.broadcast %cst_73 : f32 to vector<1x192xf32>
    %324 = arith.addf %323, %322 : vector<1x192xf32>
    %325 = arith.divf %323, %324 : vector<1x192xf32>
    %326 = vector.extract_strided_slice %319 {offsets = [0, 192], sizes = [1, 64], strides = [1, 1]} : vector<1x256xf32> to vector<1x64xf32>
    %327 = math.tanh %326 : vector<1x64xf32>
    %328 = vector.extract_strided_slice %325 {offsets = [0, 64], sizes = [1, 64], strides = [1, 1]} : vector<1x192xf32> to vector<1x64xf32>
    %329 = arith.mulf %328, %312 : vector<1x64xf32>
    %330 = vector.extract_strided_slice %325 {offsets = [0, 0], sizes = [1, 64], strides = [1, 1]} : vector<1x192xf32> to vector<1x64xf32>
    %331 = arith.mulf %330, %327 : vector<1x64xf32>
    %332 = arith.addf %329, %331 : vector<1x64xf32>
    %333 = vector.extract_strided_slice %325 {offsets = [0, 128], sizes = [1, 64], strides = [1, 1]} : vector<1x192xf32> to vector<1x64xf32>
    %334 = math.tanh %332 : vector<1x64xf32>
    %335 = arith.mulf %333, %334 : vector<1x64xf32>
    %c136 = arith.constant 136 : index
    %c0_74 = arith.constant 0 : index
    %336 = vector.load %arg3[%c136, %c0_74] : memref<272x256xf32, #tpu.memory_space<vmem>>, vector<64x256xf32>
    %c200 = arith.constant 200 : index
    %c0_75 = arith.constant 0 : index
    %337 = vector.load %arg3[%c200, %c0_75] : memref<272x256xf32, #tpu.memory_space<vmem>>, vector<64x256xf32>
    %c264_76 = arith.constant 264 : index
    %c0_77 = arith.constant 0 : index
    %338 = vector.load %arg3[%c264_76, %c0_77] : memref<272x256xf32, #tpu.memory_space<vmem>>, vector<1x256xf32>
    %cst_78 = arith.constant 0.000000e+00 : f32
    %339 = vector.broadcast %cst_78 : f32 to vector<1x64xf32>
    %cst_79 = arith.constant 0.000000e+00 : f32
    %340 = vector.broadcast %cst_79 : f32 to vector<1x64xf32>
    %cst_80 = arith.constant dense<0.000000e+00> : vector<1x256xf32>
    %341 = tpu.matmul %255, %336, %cst_80 {dimension_numbers = #tpu.dot_dimension_numbers<[1], [0], [0], [1], [0, 0, 1, 1], [], []>} : vector<1x64xf32>, vector<64x256xf32>, vector<1x256xf32> -> vector<1x256xf32>
    %cst_81 = arith.constant dense<0.000000e+00> : vector<1x256xf32>
    %342 = tpu.matmul %339, %337, %cst_81 {dimension_numbers = #tpu.dot_dimension_numbers<[1], [0], [0], [1], [0, 0, 1, 1], [], []>} : vector<1x64xf32>, vector<64x256xf32>, vector<1x256xf32> -> vector<1x256xf32>
    %343 = arith.addf %341, %342 : vector<1x256xf32>
    %344 = arith.addf %343, %338 : vector<1x256xf32>
    %345 = vector.extract_strided_slice %344 {offsets = [0, 0], sizes = [1, 192], strides = [1, 1]} : vector<1x256xf32> to vector<1x192xf32>
    %346 = arith.negf %345 : vector<1x192xf32>
    %347 = math.exp %346 : vector<1x192xf32>
    %cst_82 = arith.constant 1.000000e+00 : f32
    %348 = vector.broadcast %cst_82 : f32 to vector<1x192xf32>
    %349 = arith.addf %348, %347 : vector<1x192xf32>
    %350 = arith.divf %348, %349 : vector<1x192xf32>
    %351 = vector.extract_strided_slice %344 {offsets = [0, 192], sizes = [1, 64], strides = [1, 1]} : vector<1x256xf32> to vector<1x64xf32>
    %352 = math.tanh %351 : vector<1x64xf32>
    %353 = vector.extract_strided_slice %350 {offsets = [0, 64], sizes = [1, 64], strides = [1, 1]} : vector<1x192xf32> to vector<1x64xf32>
    %354 = arith.mulf %353, %340 : vector<1x64xf32>
    %355 = vector.extract_strided_slice %350 {offsets = [0, 0], sizes = [1, 64], strides = [1, 1]} : vector<1x192xf32> to vector<1x64xf32>
    %356 = arith.mulf %355, %352 : vector<1x64xf32>
    %357 = arith.addf %354, %356 : vector<1x64xf32>
    %358 = vector.extract_strided_slice %350 {offsets = [0, 128], sizes = [1, 64], strides = [1, 1]} : vector<1x192xf32> to vector<1x64xf32>
    %359 = math.tanh %357 : vector<1x64xf32>
    %360 = arith.mulf %358, %359 : vector<1x64xf32>
    %cst_83 = arith.constant dense<0.000000e+00> : vector<1x256xf32>
    %361 = tpu.matmul %275, %336, %cst_83 {dimension_numbers = #tpu.dot_dimension_numbers<[1], [0], [0], [1], [0, 0, 1, 1], [], []>} : vector<1x64xf32>, vector<64x256xf32>, vector<1x256xf32> -> vector<1x256xf32>
    %cst_84 = arith.constant dense<0.000000e+00> : vector<1x256xf32>
    %362 = tpu.matmul %360, %337, %cst_84 {dimension_numbers = #tpu.dot_dimension_numbers<[1], [0], [0], [1], [0, 0, 1, 1], [], []>} : vector<1x64xf32>, vector<64x256xf32>, vector<1x256xf32> -> vector<1x256xf32>
    %363 = arith.addf %361, %362 : vector<1x256xf32>
    %364 = arith.addf %363, %338 : vector<1x256xf32>
    %365 = vector.extract_strided_slice %364 {offsets = [0, 0], sizes = [1, 192], strides = [1, 1]} : vector<1x256xf32> to vector<1x192xf32>
    %366 = arith.negf %365 : vector<1x192xf32>
    %367 = math.exp %366 : vector<1x192xf32>
    %cst_85 = arith.constant 1.000000e+00 : f32
    %368 = vector.broadcast %cst_85 : f32 to vector<1x192xf32>
    %369 = arith.addf %368, %367 : vector<1x192xf32>
    %370 = arith.divf %368, %369 : vector<1x192xf32>
    %371 = vector.extract_strided_slice %364 {offsets = [0, 192], sizes = [1, 64], strides = [1, 1]} : vector<1x256xf32> to vector<1x64xf32>
    %372 = math.tanh %371 : vector<1x64xf32>
    %373 = vector.extract_strided_slice %370 {offsets = [0, 64], sizes = [1, 64], strides = [1, 1]} : vector<1x192xf32> to vector<1x64xf32>
    %374 = arith.mulf %373, %357 : vector<1x64xf32>
    %375 = vector.extract_strided_slice %370 {offsets = [0, 0], sizes = [1, 64], strides = [1, 1]} : vector<1x192xf32> to vector<1x64xf32>
    %376 = arith.mulf %375, %372 : vector<1x64xf32>
    %377 = arith.addf %374, %376 : vector<1x64xf32>
    %378 = vector.extract_strided_slice %370 {offsets = [0, 128], sizes = [1, 64], strides = [1, 1]} : vector<1x192xf32> to vector<1x64xf32>
    %379 = math.tanh %377 : vector<1x64xf32>
    %380 = arith.mulf %378, %379 : vector<1x64xf32>
    %cst_86 = arith.constant dense<0.000000e+00> : vector<1x256xf32>
    %381 = tpu.matmul %295, %336, %cst_86 {dimension_numbers = #tpu.dot_dimension_numbers<[1], [0], [0], [1], [0, 0, 1, 1], [], []>} : vector<1x64xf32>, vector<64x256xf32>, vector<1x256xf32> -> vector<1x256xf32>
    %cst_87 = arith.constant dense<0.000000e+00> : vector<1x256xf32>
    %382 = tpu.matmul %380, %337, %cst_87 {dimension_numbers = #tpu.dot_dimension_numbers<[1], [0], [0], [1], [0, 0, 1, 1], [], []>} : vector<1x64xf32>, vector<64x256xf32>, vector<1x256xf32> -> vector<1x256xf32>
    %383 = arith.addf %381, %382 : vector<1x256xf32>
    %384 = arith.addf %383, %338 : vector<1x256xf32>
    %385 = vector.extract_strided_slice %384 {offsets = [0, 0], sizes = [1, 192], strides = [1, 1]} : vector<1x256xf32> to vector<1x192xf32>
    %386 = arith.negf %385 : vector<1x192xf32>
    %387 = math.exp %386 : vector<1x192xf32>
    %cst_88 = arith.constant 1.000000e+00 : f32
    %388 = vector.broadcast %cst_88 : f32 to vector<1x192xf32>
    %389 = arith.addf %388, %387 : vector<1x192xf32>
    %390 = arith.divf %388, %389 : vector<1x192xf32>
    %391 = vector.extract_strided_slice %384 {offsets = [0, 192], sizes = [1, 64], strides = [1, 1]} : vector<1x256xf32> to vector<1x64xf32>
    %392 = math.tanh %391 : vector<1x64xf32>
    %393 = vector.extract_strided_slice %390 {offsets = [0, 64], sizes = [1, 64], strides = [1, 1]} : vector<1x192xf32> to vector<1x64xf32>
    %394 = arith.mulf %393, %377 : vector<1x64xf32>
    %395 = vector.extract_strided_slice %390 {offsets = [0, 0], sizes = [1, 64], strides = [1, 1]} : vector<1x192xf32> to vector<1x64xf32>
    %396 = arith.mulf %395, %392 : vector<1x64xf32>
    %397 = arith.addf %394, %396 : vector<1x64xf32>
    %398 = vector.extract_strided_slice %390 {offsets = [0, 128], sizes = [1, 64], strides = [1, 1]} : vector<1x192xf32> to vector<1x64xf32>
    %399 = math.tanh %397 : vector<1x64xf32>
    %400 = arith.mulf %398, %399 : vector<1x64xf32>
    %cst_89 = arith.constant dense<0.000000e+00> : vector<1x256xf32>
    %401 = tpu.matmul %315, %336, %cst_89 {dimension_numbers = #tpu.dot_dimension_numbers<[1], [0], [0], [1], [0, 0, 1, 1], [], []>} : vector<1x64xf32>, vector<64x256xf32>, vector<1x256xf32> -> vector<1x256xf32>
    %cst_90 = arith.constant dense<0.000000e+00> : vector<1x256xf32>
    %402 = tpu.matmul %400, %337, %cst_90 {dimension_numbers = #tpu.dot_dimension_numbers<[1], [0], [0], [1], [0, 0, 1, 1], [], []>} : vector<1x64xf32>, vector<64x256xf32>, vector<1x256xf32> -> vector<1x256xf32>
    %403 = arith.addf %401, %402 : vector<1x256xf32>
    %404 = arith.addf %403, %338 : vector<1x256xf32>
    %405 = vector.extract_strided_slice %404 {offsets = [0, 0], sizes = [1, 192], strides = [1, 1]} : vector<1x256xf32> to vector<1x192xf32>
    %406 = arith.negf %405 : vector<1x192xf32>
    %407 = math.exp %406 : vector<1x192xf32>
    %cst_91 = arith.constant 1.000000e+00 : f32
    %408 = vector.broadcast %cst_91 : f32 to vector<1x192xf32>
    %409 = arith.addf %408, %407 : vector<1x192xf32>
    %410 = arith.divf %408, %409 : vector<1x192xf32>
    %411 = vector.extract_strided_slice %404 {offsets = [0, 192], sizes = [1, 64], strides = [1, 1]} : vector<1x256xf32> to vector<1x64xf32>
    %412 = math.tanh %411 : vector<1x64xf32>
    %413 = vector.extract_strided_slice %410 {offsets = [0, 64], sizes = [1, 64], strides = [1, 1]} : vector<1x192xf32> to vector<1x64xf32>
    %414 = arith.mulf %413, %397 : vector<1x64xf32>
    %415 = vector.extract_strided_slice %410 {offsets = [0, 0], sizes = [1, 64], strides = [1, 1]} : vector<1x192xf32> to vector<1x64xf32>
    %416 = arith.mulf %415, %412 : vector<1x64xf32>
    %417 = arith.addf %414, %416 : vector<1x64xf32>
    %418 = vector.extract_strided_slice %410 {offsets = [0, 128], sizes = [1, 64], strides = [1, 1]} : vector<1x192xf32> to vector<1x64xf32>
    %419 = math.tanh %417 : vector<1x64xf32>
    %420 = arith.mulf %418, %419 : vector<1x64xf32>
    %cst_92 = arith.constant dense<0.000000e+00> : vector<1x256xf32>
    %421 = tpu.matmul %335, %336, %cst_92 {dimension_numbers = #tpu.dot_dimension_numbers<[1], [0], [0], [1], [0, 0, 1, 1], [], []>} : vector<1x64xf32>, vector<64x256xf32>, vector<1x256xf32> -> vector<1x256xf32>
    %cst_93 = arith.constant dense<0.000000e+00> : vector<1x256xf32>
    %422 = tpu.matmul %420, %337, %cst_93 {dimension_numbers = #tpu.dot_dimension_numbers<[1], [0], [0], [1], [0, 0, 1, 1], [], []>} : vector<1x64xf32>, vector<64x256xf32>, vector<1x256xf32> -> vector<1x256xf32>
    %423 = arith.addf %421, %422 : vector<1x256xf32>
    %424 = arith.addf %423, %338 : vector<1x256xf32>
    %425 = vector.extract_strided_slice %424 {offsets = [0, 0], sizes = [1, 192], strides = [1, 1]} : vector<1x256xf32> to vector<1x192xf32>
    %426 = arith.negf %425 : vector<1x192xf32>
    %427 = math.exp %426 : vector<1x192xf32>
    %cst_94 = arith.constant 1.000000e+00 : f32
    %428 = vector.broadcast %cst_94 : f32 to vector<1x192xf32>
    %429 = arith.addf %428, %427 : vector<1x192xf32>
    %430 = arith.divf %428, %429 : vector<1x192xf32>
    %431 = vector.extract_strided_slice %424 {offsets = [0, 192], sizes = [1, 64], strides = [1, 1]} : vector<1x256xf32> to vector<1x64xf32>
    %432 = math.tanh %431 : vector<1x64xf32>
    %433 = vector.extract_strided_slice %430 {offsets = [0, 64], sizes = [1, 64], strides = [1, 1]} : vector<1x192xf32> to vector<1x64xf32>
    %434 = arith.mulf %433, %417 : vector<1x64xf32>
    %435 = vector.extract_strided_slice %430 {offsets = [0, 0], sizes = [1, 64], strides = [1, 1]} : vector<1x192xf32> to vector<1x64xf32>
    %436 = arith.mulf %435, %432 : vector<1x64xf32>
    %437 = arith.addf %434, %436 : vector<1x64xf32>
    %438 = vector.extract_strided_slice %430 {offsets = [0, 128], sizes = [1, 64], strides = [1, 1]} : vector<1x192xf32> to vector<1x64xf32>
    %439 = math.tanh %437 : vector<1x64xf32>
    %440 = arith.mulf %438, %439 : vector<1x64xf32>
    %c160 = arith.constant 160 : index
    %c0_95 = arith.constant 0 : index
    %441 = vector.load %arg2[%c160, %c0_95] : memref<376x128xf32, #tpu.memory_space<vmem>>, vector<64x128xf32>
    %c224 = arith.constant 224 : index
    %c0_96 = arith.constant 0 : index
    %442 = vector.load %arg2[%c224, %c0_96] : memref<376x128xf32, #tpu.memory_space<vmem>>, vector<1x128xf32>
    %cst_97 = arith.constant dense<0.000000e+00> : vector<1x128xf32>
    %443 = tpu.matmul %440, %441, %cst_97 {dimension_numbers = #tpu.dot_dimension_numbers<[1], [0], [0], [1], [0, 0, 1, 1], [], []>} : vector<1x64xf32>, vector<64x128xf32>, vector<1x128xf32> -> vector<1x128xf32>
    %444 = arith.addf %443, %442 : vector<1x128xf32>
    %445 = tpu.iota {dimensions = array<i32: 1>} : vector<1x128xi32>
    %c4_i32 = arith.constant 4 : i32
    %446 = vector.broadcast %c4_i32 : i32 to vector<1x128xi32>
    %447 = arith.cmpi slt, %445, %446 : vector<1x128xi32>
    %cst_98 = arith.constant 0xFF800000 : f32
    %448 = vector.broadcast %cst_98 : f32 to vector<1x128xf32>
    %449 = arith.select %447, %444, %448 : vector<1x128xi1>, vector<1x128xf32>
    %cst_99 = arith.constant dense<0xFF800000> : vector<1xf32>
    %450 = vector.multi_reduction <maximumf>, %449, %cst_99 [1] : vector<1x128xf32> to vector<1xf32>
    %451 = vector.shape_cast %450 : vector<1xf32> to vector<1x1xf32>
    %452 = vector.broadcast %451 : vector<1x1xf32> to vector<1x128xf32>
    %453 = arith.subf %449, %452 : vector<1x128xf32>
    %454 = math.exp %453 : vector<1x128xf32>
    %cst_100 = arith.constant dense<0.000000e+00> : vector<1xf32>
    %455 = vector.multi_reduction <add>, %454, %cst_100 [1] : vector<1x128xf32> to vector<1xf32>
    %456 = vector.shape_cast %455 : vector<1xf32> to vector<1x1xf32>
    %457 = vector.broadcast %456 : vector<1x1xf32> to vector<1x128xf32>
    %458 = arith.divf %454, %457 : vector<1x128xf32>
    %c4_i32_101 = arith.constant 4 : i32
    %459 = vector.broadcast %c4_i32_101 : i32 to vector<1x128xi32>
    %460 = arith.cmpi eq, %445, %459 : vector<1x128xi32>
    %cst_102 = arith.constant 0.000000e+00 : f32
    %461 = vector.broadcast %cst_102 : f32 to vector<1x128xf32>
    %462 = arith.select %460, %444, %461 : vector<1x128xi1>, vector<1x128xf32>
    %463 = arith.addf %458, %462 : vector<1x128xf32>
    %464 = arith.addf %463, %21 : vector<1x128xf32>
    %c0_103 = arith.constant 0 : index
    %c0_104 = arith.constant 0 : index
    %465 = vector.load %arg4[%c0_103, %c0_104] : memref<1x128xf32, #tpu.memory_space<vmem>>, vector<1x128xf32>
    tpu.vector_store %arg4[%c0_103, %c0_104], %464 {strides = array<i32>} : memref<1x128xf32, #tpu.memory_space<vmem>>, vector<1x128xf32>,
    return
  }
}

</mosaic_0001>

<llo_original>
// kernel: actor_critic_forward.1
$region0: #{actor_critic_forward.1}
  #allocation0 [shape = 'u32[]', space=smem, size = 0x4, offset = 0x4, fixed_abs, tag = 'smem constant byte address 0x4 - core index']
  #allocation1 [shape = 'u32[72,128]{1,0:T(1,128)}', space=vmem, size = 0x9000, scoped, tag = 'internal scratch']
  %s0 = inlined_call_operand.vmem [shape: f32[32,10], index: 0, kind: input, shape index: {}]
  %s1 = inlined_call_operand.vmem [shape: f32[8,32], index: 1, kind: input, shape index: {}]
  %s2 = inlined_call_operand.hbm [shape: f32[376,128], index: 2, kind: input, shape index: {}]
  %s3 = inlined_call_operand.hbm [shape: f32[272,256], index: 3, kind: input, shape index: {}]
  %s4 = inlined_call_operand.vmem [shape: f32[1,128], index: 4, kind: output, shape index: {}]
  %s5 = sld [smem:[#allocation0]]
  $region34: #{actor_critic_forward.1} parent=0
    _
  %s7 = ssub.s32 1, %s5
  %s8 = scalar_select 0, %s7, %s5
  $region1: #{actor_critic_forward.1} parent=0
    #allocation2 [shape = 'u8[192512]{0}', space=vmem, size = 0x2f000, scoped, tag = 'input window, operand 2, single buffered']
    #allocation3 [shape = 's32[1]{0}', space=sflag, size = 0x4, scoped, tag = 'scoped memory for actor_critic_forward.1']
    #allocation4 [shape = 'u8[278528]{0}', space=vmem, size = 0x44000, scoped, tag = 'input window, operand 3, single buffered']
    #allocation5 [shape = 's32[1]{0}', space=sflag, size = 0x4, scoped, tag = 'scoped memory for actor_critic_forward.1']
    %9 = vsyncpa [#allocation3], 0
    %10 = vsyncpa [#allocation5], 0
    // Predicated region
    $region2: #{actor_critic_forward.1} parent=1 // pred_check
      _
    $region3: #{actor_critic_forward.1} parent=1 // pred_check_branch
      %12 = sbr.rel (0) target = $region5
    $region4: #{actor_critic_forward.1} parent=1 // pred_region
      _
    $region5: #{actor_critic_forward.1} parent=1 // pred_fallthru
      _
    // Predicated region
    $region6: #{actor_critic_forward.1} parent=1 // pred_check
      _
    $region7: #{actor_critic_forward.1} parent=1 // pred_check_branch
      %14 = sbr.rel (0) target = $region9
    $region8: #{actor_critic_forward.1} parent=1 // pred_region
      _
    $region9: #{actor_critic_forward.1} parent=1 // pred_fallthru
      _
    // Predicated region
    $region10: #{actor_critic_forward.1} parent=1 // pred_check
      _
    $region11: #{actor_critic_forward.1} parent=1 // pred_check_branch
      %16 = sbr.rel (0) target = $region13
    $region12: #{actor_critic_forward.1} parent=1 // pred_region
      %18 = vsyncadd [#allocation3], 0
      %s19 = sshll.u32 %s2, 4
      %s20 = int_to_ptr.hbm [resolvable:$true] %s19
      %s21 = sshll.u32 [#allocation2], 4
      %s22 = int_to_ptr.vmem [resolvable:$true] %s21
      %27 = dma.hbm_to_vmem [thread:$0]  %s20, 6016, %s22, [#allocation3], 128, 128, 8
    $region13: #{actor_critic_forward.1} parent=1 // pred_fallthru
      _
    // Predicated region
    $region14: #{actor_critic_forward.1} parent=1 // pred_check
      _
    $region15: #{actor_critic_forward.1} parent=1 // pred_check_branch
      %29 = sbr.rel (0) target = $region17
    $region16: #{actor_critic_forward.1} parent=1 // pred_region
      %31 = vsyncadd [#allocation5], 0
      %s32 = sshll.u32 %s3, 4
      %s33 = int_to_ptr.hbm [resolvable:$true] %s32
      %s34 = sshll.u32 [#allocation4], 4
      %s35 = int_to_ptr.vmem [resolvable:$true] %s34
      %40 = dma.hbm_to_vmem [thread:$0]  %s33, 8704, %s35, [#allocation5], 256, 256, 16
    $region17: #{actor_critic_forward.1} parent=1 // pred_fallthru
      _
    // Predicated region
    $region18: #{actor_critic_forward.1} parent=1 // pred_check
      _
    $region19: #{actor_critic_forward.1} parent=1 // pred_check_branch
      %42 = sbr.rel (0) target = $region21
    $region20: #{actor_critic_forward.1} parent=1 // pred_region
      %44 = dma.done [#allocation3], 6016
    $region21: #{actor_critic_forward.1} parent=1 // pred_fallthru
      _
    // Predicated region
    $region22: #{actor_critic_forward.1} parent=1 // pred_check
      _
    $region23: #{actor_critic_forward.1} parent=1 // pred_check_branch
      %46 = sbr.rel (0) target = $region25
    $region24: #{actor_critic_forward.1} parent=1 // pred_region
      %48 = dma.done [#allocation5], 8704
    $region25: #{actor_critic_forward.1} parent=1 // pred_fallthru
      _
    %v49 = vld [vmem:[%s0] sm:$0xff]
    %v50 = vld [vmem:[%s0 + $0x8] sm:$0x3]
    %v51 = vld [vmem:[%s0 + $0x10] sm:$0xff]
    %v52 = vld [vmem:[%s0 + $0x18] sm:$0x3]
    %v53 = vld [vmem:[#allocation2] sm:$0xff]
    %v54 = vld [vmem:[#allocation2 + $0x8] sm:$0x3]
    %v55 = vld [vmem:[#allocation2 + $0x10] sm:$0x1]
    %v56 = vld [vmem:[#allocation2 + $0x18] sm:$0xff]
    %v57 = vld [vmem:[#allocation2 + $0x20] sm:$0xff]
    %v58 = vld [vmem:[#allocation2 + $0x28] sm:$0xff]
    %v59 = vld [vmem:[#allocation2 + $0x30] sm:$0xff]
    %v60 = vld [vmem:[#allocation2 + $0x38] sm:$0xff]
    %v61 = vld [vmem:[#allocation2 + $0x40] sm:$0xff]
    %v62 = vld [vmem:[#allocation2 + $0x48] sm:$0xff]
    %v63 = vld [vmem:[#allocation2 + $0x50] sm:$0xff]
    %v64 = vld [vmem:[#allocation2 + $0x58] sm:$0xff]
    %v65 = vld [vmem:[#allocation2 + $0x60] sm:$0xff]
    %v66 = vld [vmem:[#allocation2 + $0x68] sm:$0xff]
    %v67 = vld [vmem:[#allocation2 + $0x70] sm:$0xff]
    %v68 = vld [vmem:[#allocation2 + $0x78] sm:$0xff]
    %v69 = vld [vmem:[#allocation2 + $0x80] sm:$0xff]
    %v70 = vld [vmem:[#allocation2 + $0x88] sm:$0xff]
    %v71 = vld [vmem:[#allocation2 + $0x90] sm:$0xff]
    %v72 = vld [vmem:[#allocation2 + $0x98] sm:$0x1]
    %vm73 = vcmask 80896
    %v75 = vsel %vm73, %v49, 0
    %v78 = vsel %vm73, %v50, 0
    %vm80 = vcmask 1041408
    %v82 = vsel %vm80, %v54, 0
    %84 = vmatpush.msra.mxu0 0.0
    %85 = vmatpush.msra.mxu0 0.0
    %86 = vmatpush.msra.mxu0 0.0
    %87 = vmatpush.msra.mxu0 0.0
    %88 = vmatpush.msra.mxu0 0.0
    %89 = vmatpush.msra.mxu0 0.0
    %90 = vmatpush.msra.mxu0 0.0
    %91 = vmatpush.msra.mxu0 0.0
    %92 = vmatpush.msra.mxu0 0.0
    %93 = vmatpush.msra.mxu0 0.0
    %94 = vmatpush.msra.mxu0 0.0
    %95 = vmatpush.msra.mxu0 0.0
    %96 = vmatpush.msra.mxu0 0.0
    %97 = vmatpush.msra.mxu0 0.0
    %98 = vmatpush.msra.mxu0 %v82
    %99 = vmatpush.msra.mxu0 %v53
    %100 = vmatmul.f32.gmra.mxu0 %v75
    %v101 = vpop.f32.mrf.mxu0
    %v102 = vadd.f32 0.0, %v101
    %103 = vmatmul.f32.gmra.mxu0 %v78
    %v104 = vpop.f32.mrf.mxu0
    %v105 = vadd.f32 0.0, %v104
    %106 = vdwg.mxu0
    %v107 = vperm.slane %v55, 0
    %v109 = vsel %vm73, %v51, 0
    %v112 = vsel %vm73, %v52, 0
    %v115 = vsel %vm80, %v105, 0
    %117 = vmatpush.msra.mxu0 0.0
    %118 = vmatpush.msra.mxu0 0.0
    %119 = vmatpush.msra.mxu0 0.0
    %120 = vmatpush.msra.mxu0 0.0
    %121 = vmatpush.msra.mxu0 0.0
    %122 = vmatpush.msra.mxu0 0.0
    %123 = vmatpush.msra.mxu0 0.0
    %124 = vmatpush.msra.mxu0 0.0
    %125 = vmatpush.msra.mxu0 0.0
    %126 = vmatpush.msra.mxu0 0.0
    %127 = vmatpush.msra.mxu0 0.0
    %128 = vmatpush.msra.mxu0 0.0
    %129 = vmatpush.msra.mxu0 0.0
    %130 = vmatpush.msra.mxu0 0.0
    %131 = vmatpush.msra.mxu0 %v115
    %132 = vmatpush.msra.mxu0 %v102
    %133 = vmatmul.f32.gmra.mxu0 %v109
    %v134 = vpop.f32.mrf.mxu0
    %v135 = vadd.f32 %v107, %v134
    %136 = vmatmul.f32.gmra.mxu0 %v112
    %v137 = vpop.f32.mrf.mxu0
    %v138 = vadd.f32 %v107, %v137
    %139 = vdwg.mxu0
    %v140 = vmax.f32 %v135, 0.0
    %v141 = vmax.f32 %v138, 0.0
    %142 = vmatpush.msra.mxu0 %v71
    %143 = vmatpush.msra.mxu0 %v70
    %144 = vmatpush.msra.mxu0 %v69
    %145 = vmatpush.msra.mxu0 %v68
    %146 = vmatpush.msra.mxu0 %v67
    %147 = vmatpush.msra.mxu0 %v66
    %148 = vmatpush.msra.mxu0 %v65
    %149 = vmatpush.msra.mxu0 %v64
    %150 = vmatpush.msra.mxu0 %v63
    %151 = vmatpush.msra.mxu0 %v62
    %152 = vmatpush.msra.mxu0 %v61
    %153 = vmatpush.msra.mxu0 %v60
    %154 = vmatpush.msra.mxu0 %v59
    %155 = vmatpush.msra.mxu0 %v58
    %156 = vmatpush.msra.mxu0 %v57
    %157 = vmatpush.msra.mxu0 %v56
    %158 = vmatmul.f32.gmra.mxu0 %v140
    %v159 = vpop.f32.mrf.mxu0
    %v160 = vadd.f32 0.0, %v159
    %161 = vmatmul.f32.gmra.mxu0 %v141
    %v162 = vpop.f32.mrf.mxu0
    %v163 = vadd.f32 0.0, %v162
    %164 = vdwg.mxu0
    %v165 = vperm.slane %v72, 0
    %v167 = vsel %vm80, %v163, 0
    %169 = vmatpush.msra.mxu0 0.0
    %170 = vmatpush.msra.mxu0 0.0
    %171 = vmatpush.msra.mxu0 0.0
    %172 = vmatpush.msra.mxu0 0.0
    %173 = vmatpush.msra.mxu0 0.0
    %174 = vmatpush.msra.mxu0 0.0
    %175 = vmatpush.msra.mxu0 0.0
    %176 = vmatpush.msra.mxu0 0.0
    %177 = vmatpush.msra.mxu0 0.0
    %178 = vmatpush.msra.mxu0 0.0
    %179 = vmatpush.msra.mxu0 0.0
    %180 = vmatpush.msra.mxu0 0.0
    %181 = vmatpush.msra.mxu0 0.0
    %182 = vmatpush.msra.mxu0 0.0
    %183 = vmatpush.msra.mxu0 %v167
    %184 = vmatpush.msra.mxu0 %v160
    %185 = vmatmul.f32.gmra.mxu0 %v109
    %v186 = vpop.f32.mrf.mxu0
    %v187 = vadd.f32 %v165, %v186
    %188 = vmatmul.f32.gmra.mxu0 %v112
    %v189 = vpop.f32.mrf.mxu0
    %v190 = vadd.f32 %v165, %v189
    %191 = vdwg.mxu0
    %v192 = vmax.f32 %v187, 0.0
    %v193 = vmax.f32 %v190, 0.0
    %v194 = vsel %vm80, %v193, 0.0
    %v195 = vadd.f32 %v192, %v194
    %v196 = vrot.slane %v195, 4
    %v197 = vadd.f32 %v195, %v196
    %v198 = vrot.slane %v197, 2
    %v199 = vadd.f32 %v197, %v198
    %v200 = vrot.slane %v199, 1
    %v201 = vadd.f32 %v199, %v200
    %v202 = vrcp.pop 10.0
    %v203 = vmul.f32 10.0, %v202
    %v204 = vsub.f32 1.0, %v203
    %v205 = vmul.f32 %v202, %v204
    %v206 = vadd.f32 %v202, %v205
    %vm207 = vweird.f32 %v202
    %v208 = vsel %vm207, %v202, %v206
    %v209 = vmul.f32 %v201, %v208
    %v210 = vld [vmem:[#allocation2 + $0xe8] sm:$0xff]
    %v211 = vld [vmem:[#allocation2 + $0xf0] sm:$0xff]
    %v212 = vld [vmem:[#allocation2 + $0xf8] sm:$0xff]
    %v213 = vld [vmem:[#allocation2 + $0x100] sm:$0xff]
    %v214 = vld [vmem:[#allocation2 + $0x108] sm:$0xff]
    %v215 = vld [vmem:[#allocation2 + $0x110] sm:$0xff]
    %v216 = vld [vmem:[#allocation2 + $0x118] sm:$0xff]
    %v217 = vld [vmem:[#allocation2 + $0x120] sm:$0xff]
    %v218 = vld [vmem:[#allocation2 + $0x128] sm:$0x1]
    %v219 = vld [vmem:[%s1] sm:$0x1f]
    %v220 = vperm.slane %v218, 0
    %vm221 = vcmask 261120
    %v223 = vsel %vm221, %v219, 0
    %225 = vmatpush.msra.mxu0 0.0
    %226 = vmatpush.msra.mxu0 0.0
    %227 = vmatpush.msra.mxu0 0.0
    %228 = vmatpush.msra.mxu0 0.0
    %229 = vmatpush.msra.mxu0 0.0
    %230 = vmatpush.msra.mxu0 0.0
    %231 = vmatpush.msra.mxu0 0.0
    %232 = vmatpush.msra.mxu0 0.0
    %233 = vmatpush.msra.mxu0 0.0
    %234 = vmatpush.msra.mxu0 0.0
    %235 = vmatpush.msra.mxu0 0.0
    %236 = vmatpush.msra.mxu0 0.0
    %237 = vmatpush.msra.mxu0 %v213
    %238 = vmatpush.msra.mxu0 %v212
    %239 = vmatpush.msra.mxu0 %v211
    %240 = vmatpush.msra.mxu0 %v210
    %241 = vmatmul.f32.gmra.mxu0 %v223
    %v242 = vpop.f32.mrf.mxu0
    %v243 = vadd.f32 %v220, %v242
    %244 = vdwg.mxu0
    %v246 = vsel %vm221, 0.0, 0
    %248 = vmatpush.msra.mxu0 0.0
    %249 = vmatpush.msra.mxu0 0.0
    %250 = vmatpush.msra.mxu0 0.0
    %251 = vmatpush.msra.mxu0 0.0
    %252 = vmatpush.msra.mxu0 0.0
    %253 = vmatpush.msra.mxu0 0.0
    %254 = vmatpush.msra.mxu0 0.0
    %255 = vmatpush.msra.mxu0 0.0
    %256 = vmatpush.msra.mxu0 0.0
    %257 = vmatpush.msra.mxu0 0.0
    %258 = vmatpush.msra.mxu0 0.0
    %259 = vmatpush.msra.mxu0 0.0
    %260 = vmatpush.msra.mxu0 %v217
    %261 = vmatpush.msra.mxu0 %v216
    %262 = vmatpush.msra.mxu0 %v215
    %263 = vmatpush.msra.mxu0 %v214
    %264 = vmatmul.f32.gmra.mxu0 %v246
    %v265 = vpop.f32.mrf.mxu0
    %v266 = vadd.f32 0.0, %v265
    %267 = vdwg.mxu0
    %v268 = vadd.f32 %v243, %v266
    %v269 = vxor.u32 %v268, 2147483648
    %v270 = vmul.f32 %v269, 1.442695
    %v271 = vpow.pop %v270
    %v272 = vadd.f32 %v271, 1.0
    %v273 = vrcp.pop %v272
    %v274 = vmul.f32 %v272, %v273
    %v275 = vsub.f32 1.0, %v274
    %v276 = vmul.f32 %v273, %v275
    %v277 = vadd.f32 %v273, %v276
    %vm278 = vweird.f32 %v272
    %vm279 = vweird.f32 %v273
    %vm280 = vmor %vm278, %vm279
    %v281 = vsel %vm280, %v273, %v277
    %v282 = vand.u32 2147483647, %v272
    %vm283 = vcmp.eq.f32.partialorder %v282, 8.507059e+37
    %v284 = vand.u32 %v272, 2147483648
    %v285 = vor.u32 1.1754944e-38, %v284
    %v286 = vsel %vm283, %v285, %v281
    %v287 = vmul.f32 1.0, %v286
    %v288 = vtanh.pop %v268
    %v289 = vmul.f32 %v287, 0.0
    %291 = vrot.lane.b32.xlu0 %v288, 32
    %v292 = vpop.permute.xlu0 %291
    %v294 = vmul.f32 %v287, %v292
    %296 = vrot.lane.b32.xlu0 %v294, 32
    %v297 = vpop.permute.xlu0 %296
    %v299 = vadd.f32 %v289, %v297
    %v300 = vtanh.pop %v299
    %302 = vrot.lane.b32.xlu0 %v300, 32
    %v303 = vpop.permute.xlu0 %302
    %v305 = vmul.f32 %v287, %v303
    %307 = vrot.lane.b32.xlu0 %v305, 64
    %v308 = vpop.permute.xlu0 %307
    %v309 = vsel %vm221, %v308, 0
    %311 = vmatpush.msra.mxu0 0.0
    %312 = vmatpush.msra.mxu0 0.0
    %313 = vmatpush.msra.mxu0 0.0
    %314 = vmatpush.msra.mxu0 0.0
    %315 = vmatpush.msra.mxu0 0.0
    %316 = vmatpush.msra.mxu0 0.0
    %317 = vmatpush.msra.mxu0 0.0
    %318 = vmatpush.msra.mxu0 0.0
    %319 = vmatpush.msra.mxu0 0.0
    %320 = vmatpush.msra.mxu0 0.0
    %321 = vmatpush.msra.mxu0 0.0
    %322 = vmatpush.msra.mxu0 0.0
    %323 = vmatpush.msra.mxu0 %v217
    %324 = vmatpush.msra.mxu0 %v216
    %325 = vmatpush.msra.mxu0 %v215
    %326 = vmatpush.msra.mxu0 %v214
    %327 = vmatmul.f32.gmra.mxu0 %v309
    %v328 = vpop.f32.mrf.mxu0
    %v329 = vadd.f32 0.0, %v328
    %330 = vdwg.mxu0
    %v332 = vrot.slane %v329, 7
    %v334 = vadd.f32 %v243, %v332
    %v335 = vxor.u32 %v334, 2147483648
    %v336 = vmul.f32 %v335, 1.442695
    %v337 = vpow.pop %v336
    %v338 = vadd.f32 %v337, 1.0
    %v339 = vrcp.pop %v338
    %v340 = vmul.f32 %v338, %v339
    %v341 = vsub.f32 1.0, %v340
    %v342 = vmul.f32 %v339, %v341
    %v343 = vadd.f32 %v339, %v342
    %vm344 = vweird.f32 %v338
    %vm345 = vweird.f32 %v339
    %vm346 = vmor %vm344, %vm345
    %v347 = vsel %vm346, %v339, %v343
    %v348 = vand.u32 2147483647, %v338
    %vm349 = vcmp.eq.f32.partialorder %v348, 8.507059e+37
    %v350 = vand.u32 %v338, 2147483648
    %v351 = vor.u32 1.1754944e-38, %v350
    %v352 = vsel %vm349, %v351, %v347
    %v353 = vmul.f32 1.0, %v352
    %v354 = vtanh.pop %v334
    %v356 = vrot.slane %v299, 7
    %v358 = vmul.f32 %v353, %v356
    %360 = vrot.lane.b32.xlu0 %v354, 32
    %v361 = vpop.permute.xlu0 %360
    %v363 = vmul.f32 %v353, %v361
    %365 = vrot.lane.b32.xlu0 %v363, 32
    %v366 = vpop.permute.xlu0 %365
    %v368 = vadd.f32 %v358, %v366
    %v369 = vtanh.pop %v368
    %371 = vrot.lane.b32.xlu0 %v369, 32
    %v372 = vpop.permute.xlu0 %371
    %v374 = vmul.f32 %v353, %v372
    %v376 = vrot.slane %v374, 1
    %377 = vrot.lane.b32.xlu0 %v376, 64
    %v378 = vpop.permute.xlu0 %377
    %v379 = vsel %vm221, %v378, 0
    %381 = vmatpush.msra.mxu0 0.0
    %382 = vmatpush.msra.mxu0 0.0
    %383 = vmatpush.msra.mxu0 0.0
    %384 = vmatpush.msra.mxu0 0.0
    %385 = vmatpush.msra.mxu0 0.0
    %386 = vmatpush.msra.mxu0 0.0
    %387 = vmatpush.msra.mxu0 0.0
    %388 = vmatpush.msra.mxu0 0.0
    %389 = vmatpush.msra.mxu0 0.0
    %390 = vmatpush.msra.mxu0 0.0
    %391 = vmatpush.msra.mxu0 0.0
    %392 = vmatpush.msra.mxu0 0.0
    %393 = vmatpush.msra.mxu0 %v217
    %394 = vmatpush.msra.mxu0 %v216
    %395 = vmatpush.msra.mxu0 %v215
    %396 = vmatpush.msra.mxu0 %v214
    %397 = vmatmul.f32.gmra.mxu0 %v379
    %v398 = vpop.f32.mrf.mxu0
    %v399 = vadd.f32 0.0, %v398
    %400 = vdwg.mxu0
    %v402 = vrot.slane %v399, 6
    %v404 = vadd.f32 %v243, %v402
    %v405 = vxor.u32 %v404, 2147483648
    %v406 = vmul.f32 %v405, 1.442695
    %v407 = vpow.pop %v406
    %v408 = vadd.f32 %v407, 1.0
    %v409 = vrcp.pop %v408
    %v410 = vmul.f32 %v408, %v409
    %v411 = vsub.f32 1.0, %v410
    %v412 = vmul.f32 %v409, %v411
    %v413 = vadd.f32 %v409, %v412
    %vm414 = vweird.f32 %v408
    %vm415 = vweird.f32 %v409
    %vm416 = vmor %vm414, %vm415
    %v417 = vsel %vm416, %v409, %v413
    %v418 = vand.u32 2147483647, %v408
    %vm419 = vcmp.eq.f32.partialorder %v418, 8.507059e+37
    %v420 = vand.u32 %v408, 2147483648
    %v421 = vor.u32 1.1754944e-38, %v420
    %v422 = vsel %vm419, %v421, %v417
    %v423 = vmul.f32 1.0, %v422
    %v424 = vtanh.pop %v404
    %v426 = vrot.slane %v368, 7
    %v428 = vmul.f32 %v423, %v426
    %430 = vrot.lane.b32.xlu0 %v424, 32
    %v431 = vpop.permute.xlu0 %430
    %v433 = vmul.f32 %v423, %v431
    %435 = vrot.lane.b32.xlu0 %v433, 32
    %v436 = vpop.permute.xlu0 %435
    %v438 = vadd.f32 %v428, %v436
    %v439 = vtanh.pop %v438
    %441 = vrot.lane.b32.xlu0 %v439, 32
    %v442 = vpop.permute.xlu0 %441
    %v444 = vmul.f32 %v423, %v442
    %v446 = vrot.slane %v444, 2
    %447 = vrot.lane.b32.xlu0 %v446, 64
    %v448 = vpop.permute.xlu0 %447
    %v449 = vsel %vm221, %v448, 0
    %451 = vmatpush.msra.mxu0 0.0
    %452 = vmatpush.msra.mxu0 0.0
    %453 = vmatpush.msra.mxu0 0.0
    %454 = vmatpush.msra.mxu0 0.0
    %455 = vmatpush.msra.mxu0 0.0
    %456 = vmatpush.msra.mxu0 0.0
    %457 = vmatpush.msra.mxu0 0.0
    %458 = vmatpush.msra.mxu0 0.0
    %459 = vmatpush.msra.mxu0 0.0
    %460 = vmatpush.msra.mxu0 0.0
    %461 = vmatpush.msra.mxu0 0.0
    %462 = vmatpush.msra.mxu0 0.0
    %463 = vmatpush.msra.mxu0 %v217
    %464 = vmatpush.msra.mxu0 %v216
    %465 = vmatpush.msra.mxu0 %v215
    %466 = vmatpush.msra.mxu0 %v214
    %467 = vmatmul.f32.gmra.mxu0 %v449
    %v468 = vpop.f32.mrf.mxu0
    %v469 = vadd.f32 0.0, %v468
    %470 = vdwg.mxu0
    %v472 = vrot.slane %v469, 5
    %v474 = vadd.f32 %v243, %v472
    %v475 = vxor.u32 %v474, 2147483648
    %v476 = vmul.f32 %v475, 1.442695
    %v477 = vpow.pop %v476
    %v478 = vadd.f32 %v477, 1.0
    %v479 = vrcp.pop %v478
    %v480 = vmul.f32 %v478, %v479
    %v481 = vsub.f32 1.0, %v480
    %v482 = vmul.f32 %v479, %v481
    %v483 = vadd.f32 %v479, %v482
    %vm484 = vweird.f32 %v478
    %vm485 = vweird.f32 %v479
    %vm486 = vmor %vm484, %vm485
    %v487 = vsel %vm486, %v479, %v483
    %v488 = vand.u32 2147483647, %v478
    %vm489 = vcmp.eq.f32.partialorder %v488, 8.507059e+37
    %v490 = vand.u32 %v478, 2147483648
    %v491 = vor.u32 1.1754944e-38, %v490
    %v492 = vsel %vm489, %v491, %v487
    %v493 = vmul.f32 1.0, %v492
    %v494 = vtanh.pop %v474
    %v496 = vrot.slane %v438, 7
    %v498 = vmul.f32 %v493, %v496
    %500 = vrot.lane.b32.xlu0 %v494, 32
    %v501 = vpop.permute.xlu0 %500
    %v503 = vmul.f32 %v493, %v501
    %505 = vrot.lane.b32.xlu0 %v503, 32
    %v506 = vpop.permute.xlu0 %505
    %v508 = vadd.f32 %v498, %v506
    %v509 = vtanh.pop %v508
    %511 = vrot.lane.b32.xlu0 %v509, 32
    %v512 = vpop.permute.xlu0 %511
    %v514 = vmul.f32 %v493, %v512
    %v516 = vrot.slane %v514, 3
    %517 = vrot.lane.b32.xlu0 %v516, 64
    %v518 = vpop.permute.xlu0 %517
    %v519 = vsel %vm221, %v518, 0
    %521 = vmatpush.msra.mxu0 0.0
    %522 = vmatpush.msra.mxu0 0.0
    %523 = vmatpush.msra.mxu0 0.0
    %524 = vmatpush.msra.mxu0 0.0
    %525 = vmatpush.msra.mxu0 0.0
    %526 = vmatpush.msra.mxu0 0.0
    %527 = vmatpush.msra.mxu0 0.0
    %528 = vmatpush.msra.mxu0 0.0
    %529 = vmatpush.msra.mxu0 0.0
    %530 = vmatpush.msra.mxu0 0.0
    %531 = vmatpush.msra.mxu0 0.0
    %532 = vmatpush.msra.mxu0 0.0
    %533 = vmatpush.msra.mxu0 %v217
    %534 = vmatpush.msra.mxu0 %v216
    %535 = vmatpush.msra.mxu0 %v215
    %536 = vmatpush.msra.mxu0 %v214
    %537 = vmatmul.f32.gmra.mxu0 %v519
    %v538 = vpop.f32.mrf.mxu0
    %v539 = vadd.f32 0.0, %v538
    %540 = vdwg.mxu0
    %v542 = vrot.slane %v539, 4
    %v544 = vadd.f32 %v243, %v542
    %v545 = vxor.u32 %v544, 2147483648
    %v546 = vmul.f32 %v545, 1.442695
    %v547 = vpow.pop %v546
    %v548 = vadd.f32 %v547, 1.0
    %v549 = vrcp.pop %v548
    %v550 = vmul.f32 %v548, %v549
    %v551 = vsub.f32 1.0, %v550
    %v552 = vmul.f32 %v549, %v551
    %v553 = vadd.f32 %v549, %v552
    %vm554 = vweird.f32 %v548
    %vm555 = vweird.f32 %v549
    %vm556 = vmor %vm554, %vm555
    %v557 = vsel %vm556, %v549, %v553
    %v558 = vand.u32 2147483647, %v548
    %vm559 = vcmp.eq.f32.partialorder %v558, 8.507059e+37
    %v560 = vand.u32 %v548, 2147483648
    %v561 = vor.u32 1.1754944e-38, %v560
    %v562 = vsel %vm559, %v561, %v557
    %v563 = vmul.f32 1.0, %v562
    %v564 = vtanh.pop %v544
    %v566 = vrot.slane %v508, 7
    %v568 = vmul.f32 %v563, %v566
    %570 = vrot.lane.b32.xlu0 %v564, 32
    %v571 = vpop.permute.xlu0 %570
    %v573 = vmul.f32 %v563, %v571
    %575 = vrot.lane.b32.xlu0 %v573, 32
    %v576 = vpop.permute.xlu0 %575
    %v578 = vadd.f32 %v568, %v576
    %v579 = vtanh.pop %v578
    %581 = vrot.lane.b32.xlu0 %v579, 32
    %v582 = vpop.permute.xlu0 %581
    %v584 = vmul.f32 %v563, %v582
    %v585 = vld [vmem:[#allocation2 + $0x130] sm:$0xff]
    %v586 = vld [vmem:[#allocation2 + $0x138] sm:$0xff]
    %v587 = vld [vmem:[#allocation2 + $0x140] sm:$0xff]
    %v588 = vld [vmem:[#allocation2 + $0x148] sm:$0xff]
    %v589 = vld [vmem:[#allocation2 + $0x150] sm:$0xff]
    %v590 = vld [vmem:[#allocation2 + $0x158] sm:$0xff]
    %v591 = vld [vmem:[#allocation2 + $0x160] sm:$0xff]
    %v592 = vld [vmem:[#allocation2 + $0x168] sm:$0xff]
    %v593 = vld [vmem:[#allocation2 + $0x170] sm:$0x1]
    %594 = vmatpush.msra.mxu0 0.0
    %595 = vmatpush.msra.mxu0 0.0
    %596 = vmatpush.msra.mxu0 0.0
    %597 = vmatpush.msra.mxu0 0.0
    %598 = vmatpush.msra.mxu0 0.0
    %599 = vmatpush.msra.mxu0 0.0
    %600 = vmatpush.msra.mxu0 0.0
    %601 = vmatpush.msra.mxu0 0.0
    %602 = vmatpush.msra.mxu0 0.0
    %603 = vmatpush.msra.mxu0 0.0
    %604 = vmatpush.msra.mxu0 0.0
    %605 = vmatpush.msra.mxu0 0.0
    %606 = vmatpush.msra.mxu0 %v592
    %607 = vmatpush.msra.mxu0 %v591
    %608 = vmatpush.msra.mxu0 %v590
    %609 = vmatpush.msra.mxu0 %v589
    %610 = vmatmul.f32.gmra.mxu0 %v246
    %v611 = vpop.f32.mrf.mxu0
    %v612 = vadd.f32 0.0, %v611
    %613 = vdwg.mxu0
    %614 = vmatpush.msra.mxu0 0.0
    %615 = vmatpush.msra.mxu0 0.0
    %616 = vmatpush.msra.mxu0 0.0
    %617 = vmatpush.msra.mxu0 0.0
    %618 = vmatpush.msra.mxu0 0.0
    %619 = vmatpush.msra.mxu0 0.0
    %620 = vmatpush.msra.mxu0 0.0
    %621 = vmatpush.msra.mxu0 0.0
    %622 = vmatpush.msra.mxu0 0.0
    %623 = vmatpush.msra.mxu0 0.0
    %624 = vmatpush.msra.mxu0 0.0
    %625 = vmatpush.msra.mxu0 0.0
    %626 = vmatpush.msra.mxu0 %v588
    %627 = vmatpush.msra.mxu0 %v587
    %628 = vmatpush.msra.mxu0 %v586
    %629 = vmatpush.msra.mxu0 %v585
    %630 = vmatmul.f32.gmra.mxu0 %v309
    %v631 = vpop.f32.mrf.mxu0
    %v632 = vadd.f32 %v612, %v631
    %633 = vdwg.mxu0
    %v634 = vadd.f32 %v632, %v593
    %v635 = vxor.u32 %v634, 2147483648
    %v636 = vmul.f32 %v635, 1.442695
    %v637 = vpow.pop %v636
    %v638 = vadd.f32 %v637, 1.0
    %v639 = vrcp.pop %v638
    %v640 = vmul.f32 %v638, %v639
    %v641 = vsub.f32 1.0, %v640
    %v642 = vmul.f32 %v639, %v641
    %v643 = vadd.f32 %v639, %v642
    %vm644 = vweird.f32 %v638
    %vm645 = vweird.f32 %v639
    %vm646 = vmor %vm644, %vm645
    %v647 = vsel %vm646, %v639, %v643
    %v648 = vand.u32 2147483647, %v638
    %vm649 = vcmp.eq.f32.partialorder %v648, 8.507059e+37
    %v650 = vand.u32 %v638, 2147483648
    %v651 = vor.u32 1.1754944e-38, %v650
    %v652 = vsel %vm649, %v651, %v647
    %v653 = vmul.f32 1.0, %v652
    %v654 = vtanh.pop %v634
    %v655 = vmul.f32 %v653, 0.0
    %657 = vrot.lane.b32.xlu0 %v654, 32
    %v658 = vpop.permute.xlu0 %657
    %v660 = vmul.f32 %v653, %v658
    %662 = vrot.lane.b32.xlu0 %v660, 32
    %v663 = vpop.permute.xlu0 %662
    %v665 = vadd.f32 %v655, %v663
    %v666 = vtanh.pop %v665
    %668 = vrot.lane.b32.xlu0 %v666, 32
    %v669 = vpop.permute.xlu0 %668
    %v671 = vmul.f32 %v653, %v669
    %673 = vrot.lane.b32.xlu0 %v671, 64
    %v674 = vpop.permute.xlu0 %673
    %v675 = vsel %vm221, %v674, 0
    %677 = vmatpush.msra.mxu0 0.0
    %678 = vmatpush.msra.mxu0 0.0
    %679 = vmatpush.msra.mxu0 0.0
    %680 = vmatpush.msra.mxu0 0.0
    %681 = vmatpush.msra.mxu0 0.0
    %682 = vmatpush.msra.mxu0 0.0
    %683 = vmatpush.msra.mxu0 0.0
    %684 = vmatpush.msra.mxu0 0.0
    %685 = vmatpush.msra.mxu0 0.0
    %686 = vmatpush.msra.mxu0 0.0
    %687 = vmatpush.msra.mxu0 0.0
    %688 = vmatpush.msra.mxu0 0.0
    %689 = vmatpush.msra.mxu0 %v592
    %690 = vmatpush.msra.mxu0 %v591
    %691 = vmatpush.msra.mxu0 %v590
    %692 = vmatpush.msra.mxu0 %v589
    %693 = vmatmul.f32.gmra.mxu0 %v675
    %v694 = vpop.f32.mrf.mxu0
    %v695 = vadd.f32 0.0, %v694
    %696 = vdwg.mxu0
    %697 = vmatpush.msra.mxu0 0.0
    %698 = vmatpush.msra.mxu0 0.0
    %699 = vmatpush.msra.mxu0 0.0
    %700 = vmatpush.msra.mxu0 0.0
    %701 = vmatpush.msra.mxu0 0.0
    %702 = vmatpush.msra.mxu0 0.0
    %703 = vmatpush.msra.mxu0 0.0
    %704 = vmatpush.msra.mxu0 0.0
    %705 = vmatpush.msra.mxu0 0.0
    %706 = vmatpush.msra.mxu0 0.0
    %707 = vmatpush.msra.mxu0 0.0
    %708 = vmatpush.msra.mxu0 0.0
    %709 = vmatpush.msra.mxu0 %v588
    %710 = vmatpush.msra.mxu0 %v587
    %711 = vmatpush.msra.mxu0 %v586
    %712 = vmatpush.msra.mxu0 %v585
    %713 = vmatmul.f32.gmra.mxu0 %v379
    %v714 = vpop.f32.mrf.mxu0
    %v715 = vadd.f32 %v695, %v714
    %716 = vdwg.mxu0
    %v717 = vadd.f32 %v715, %v593
    %v718 = vxor.u32 %v717, 2147483648
    %v719 = vmul.f32 %v718, 1.442695
    %v720 = vpow.pop %v719
    %v721 = vadd.f32 %v720, 1.0
    %v722 = vrcp.pop %v721
    %v723 = vmul.f32 %v721, %v722
    %v724 = vsub.f32 1.0, %v723
    %v725 = vmul.f32 %v722, %v724
    %v726 = vadd.f32 %v722, %v725
    %vm727 = vweird.f32 %v721
    %vm728 = vweird.f32 %v722
    %vm729 = vmor %vm727, %vm728
    %v730 = vsel %vm729, %v722, %v726
    %v731 = vand.u32 2147483647, %v721
    %vm732 = vcmp.eq.f32.partialorder %v731, 8.507059e+37
    %v733 = vand.u32 %v721, 2147483648
    %v734 = vor.u32 1.1754944e-38, %v733
    %v735 = vsel %vm732, %v734, %v730
    %v736 = vmul.f32 1.0, %v735
    %v737 = vtanh.pop %v717
    %v738 = vmul.f32 %v736, %v665
    %740 = vrot.lane.b32.xlu0 %v737, 32
    %v741 = vpop.permute.xlu0 %740
    %v743 = vmul.f32 %v736, %v741
    %745 = vrot.lane.b32.xlu0 %v743, 32
    %v746 = vpop.permute.xlu0 %745
    %v748 = vadd.f32 %v738, %v746
    %v749 = vtanh.pop %v748
    %751 = vrot.lane.b32.xlu0 %v749, 32
    %v752 = vpop.permute.xlu0 %751
    %v754 = vmul.f32 %v736, %v752
    %756 = vrot.lane.b32.xlu0 %v754, 64
    %v757 = vpop.permute.xlu0 %756
    %v758 = vsel %vm221, %v757, 0
    %760 = vmatpush.msra.mxu0 0.0
    %761 = vmatpush.msra.mxu0 0.0
    %762 = vmatpush.msra.mxu0 0.0
    %763 = vmatpush.msra.mxu0 0.0
    %764 = vmatpush.msra.mxu0 0.0
    %765 = vmatpush.msra.mxu0 0.0
    %766 = vmatpush.msra.mxu0 0.0
    %767 = vmatpush.msra.mxu0 0.0
    %768 = vmatpush.msra.mxu0 0.0
    %769 = vmatpush.msra.mxu0 0.0
    %770 = vmatpush.msra.mxu0 0.0
    %771 = vmatpush.msra.mxu0 0.0
    %772 = vmatpush.msra.mxu0 %v592
    %773 = vmatpush.msra.mxu0 %v591
    %774 = vmatpush.msra.mxu0 %v590
    %775 = vmatpush.msra.mxu0 %v589
    %776 = vmatmul.f32.gmra.mxu0 %v758
    %v777 = vpop.f32.mrf.mxu0
    %v778 = vadd.f32 0.0, %v777
    %779 = vdwg.mxu0
    %780 = vmatpush.msra.mxu0 0.0
    %781 = vmatpush.msra.mxu0 0.0
    %782 = vmatpush.msra.mxu0 0.0
    %783 = vmatpush.msra.mxu0 0.0
    %784 = vmatpush.msra.mxu0 0.0
    %785 = vmatpush.msra.mxu0 0.0
    %786 = vmatpush.msra.mxu0 0.0
    %787 = vmatpush.msra.mxu0 0.0
    %788 = vmatpush.msra.mxu0 0.0
    %789 = vmatpush.msra.mxu0 0.0
    %790 = vmatpush.msra.mxu0 0.0
    %791 = vmatpush.msra.mxu0 0.0
    %792 = vmatpush.msra.mxu0 %v588
    %793 = vmatpush.msra.mxu0 %v587
    %794 = vmatpush.msra.mxu0 %v586
    %795 = vmatpush.msra.mxu0 %v585
    %796 = vmatmul.f32.gmra.mxu0 %v449
    %v797 = vpop.f32.mrf.mxu0
    %v798 = vadd.f32 %v778, %v797
    %799 = vdwg.mxu0
    %v800 = vadd.f32 %v798, %v593
    %v801 = vxor.u32 %v800, 2147483648
    %v802 = vmul.f32 %v801, 1.442695
    %v803 = vpow.pop %v802
    %v804 = vadd.f32 %v803, 1.0
    %v805 = vrcp.pop %v804
    %v806 = vmul.f32 %v804, %v805
    %v807 = vsub.f32 1.0, %v806
    %v808 = vmul.f32 %v805, %v807
    %v809 = vadd.f32 %v805, %v808
    %vm810 = vweird.f32 %v804
    %vm811 = vweird.f32 %v805
    %vm812 = vmor %vm810, %vm811
    %v813 = vsel %vm812, %v805, %v809
    %v814 = vand.u32 2147483647, %v804
    %vm815 = vcmp.eq.f32.partialorder %v814, 8.507059e+37
    %v816 = vand.u32 %v804, 2147483648
    %v817 = vor.u32 1.1754944e-38, %v816
    %v818 = vsel %vm815, %v817, %v813
    %v819 = vmul.f32 1.0, %v818
    %v820 = vtanh.pop %v800
    %v821 = vmul.f32 %v819, %v748
    %823 = vrot.lane.b32.xlu0 %v820, 32
    %v824 = vpop.permute.xlu0 %823
    %v826 = vmul.f32 %v819, %v824
    %828 = vrot.lane.b32.xlu0 %v826, 32
    %v829 = vpop.permute.xlu0 %828
    %v831 = vadd.f32 %v821, %v829
    %v832 = vtanh.pop %v831
    %834 = vrot.lane.b32.xlu0 %v832, 32
    %v835 = vpop.permute.xlu0 %834
    %v837 = vmul.f32 %v819, %v835
    %839 = vrot.lane.b32.xlu0 %v837, 64
    %v840 = vpop.permute.xlu0 %839
    %v841 = vsel %vm221, %v840, 0
    %843 = vmatpush.msra.mxu0 0.0
    %844 = vmatpush.msra.mxu0 0.0
    %845 = vmatpush.msra.mxu0 0.0
    %846 = vmatpush.msra.mxu0 0.0
    %847 = vmatpush.msra.mxu0 0.0
    %848 = vmatpush.msra.mxu0 0.0
    %849 = vmatpush.msra.mxu0 0.0
    %850 = vmatpush.msra.mxu0 0.0
    %851 = vmatpush.msra.mxu0 0.0
    %852 = vmatpush.msra.mxu0 0.0
    %853 = vmatpush.msra.mxu0 0.0
    %854 = vmatpush.msra.mxu0 0.0
    %855 = vmatpush.msra.mxu0 %v592
    %856 = vmatpush.msra.mxu0 %v591
    %857 = vmatpush.msra.mxu0 %v590
    %858 = vmatpush.msra.mxu0 %v589
    %859 = vmatmul.f32.gmra.mxu0 %v841
    %v860 = vpop.f32.mrf.mxu0
    %v861 = vadd.f32 0.0, %v860
    %862 = vdwg.mxu0
    %863 = vmatpush.msra.mxu0 0.0
    %864 = vmatpush.msra.mxu0 0.0
    %865 = vmatpush.msra.mxu0 0.0
    %866 = vmatpush.msra.mxu0 0.0
    %867 = vmatpush.msra.mxu0 0.0
    %868 = vmatpush.msra.mxu0 0.0
    %869 = vmatpush.msra.mxu0 0.0
    %870 = vmatpush.msra.mxu0 0.0
    %871 = vmatpush.msra.mxu0 0.0
    %872 = vmatpush.msra.mxu0 0.0
    %873 = vmatpush.msra.mxu0 0.0
    %874 = vmatpush.msra.mxu0 0.0
    %875 = vmatpush.msra.mxu0 %v588
    %876 = vmatpush.msra.mxu0 %v587
    %877 = vmatpush.msra.mxu0 %v586
    %878 = vmatpush.msra.mxu0 %v585
    %879 = vmatmul.f32.gmra.mxu0 %v519
    %v880 = vpop.f32.mrf.mxu0
    %v881 = vadd.f32 %v861, %v880
    %882 = vdwg.mxu0
    %v883 = vadd.f32 %v881, %v593
    %v884 = vxor.u32 %v883, 2147483648
    %v885 = vmul.f32 %v884, 1.442695
    %v886 = vpow.pop %v885
    %v887 = vadd.f32 %v886, 1.0
    %v888 = vrcp.pop %v887
    %v889 = vmul.f32 %v887, %v888
    %v890 = vsub.f32 1.0, %v889
    %v891 = vmul.f32 %v888, %v890
    %v892 = vadd.f32 %v888, %v891
    %vm893 = vweird.f32 %v887
    %vm894 = vweird.f32 %v888
    %vm895 = vmor %vm893, %vm894
    %v896 = vsel %vm895, %v888, %v892
    %v897 = vand.u32 2147483647, %v887
    %vm898 = vcmp.eq.f32.partialorder %v897, 8.507059e+37
    %v899 = vand.u32 %v887, 2147483648
    %v900 = vor.u32 1.1754944e-38, %v899
    %v901 = vsel %vm898, %v900, %v896
    %v902 = vmul.f32 1.0, %v901
    %v903 = vtanh.pop %v883
    %v904 = vmul.f32 %v902, %v831
    %906 = vrot.lane.b32.xlu0 %v903, 32
    %v907 = vpop.permute.xlu0 %906
    %v909 = vmul.f32 %v902, %v907
    %911 = vrot.lane.b32.xlu0 %v909, 32
    %v912 = vpop.permute.xlu0 %911
    %v914 = vadd.f32 %v904, %v912
    %v915 = vtanh.pop %v914
    %917 = vrot.lane.b32.xlu0 %v915, 32
    %v918 = vpop.permute.xlu0 %917
    %v920 = vmul.f32 %v902, %v918
    %922 = vrot.lane.b32.xlu0 %v920, 64
    %v923 = vpop.permute.xlu0 %922
    %v924 = vsel %vm221, %v923, 0
    %926 = vmatpush.msra.mxu0 0.0
    %927 = vmatpush.msra.mxu0 0.0
    %928 = vmatpush.msra.mxu0 0.0
    %929 = vmatpush.msra.mxu0 0.0
    %930 = vmatpush.msra.mxu0 0.0
    %931 = vmatpush.msra.mxu0 0.0
    %932 = vmatpush.msra.mxu0 0.0
    %933 = vmatpush.msra.mxu0 0.0
    %934 = vmatpush.msra.mxu0 0.0
    %935 = vmatpush.msra.mxu0 0.0
    %936 = vmatpush.msra.mxu0 0.0
    %937 = vmatpush.msra.mxu0 0.0
    %938 = vmatpush.msra.mxu0 %v592
    %939 = vmatpush.msra.mxu0 %v591
    %940 = vmatpush.msra.mxu0 %v590
    %941 = vmatpush.msra.mxu0 %v589
    %942 = vmatmul.f32.gmra.mxu0 %v924
    %v943 = vpop.f32.mrf.mxu0
    %v944 = vadd.f32 0.0, %v943
    %945 = vdwg.mxu0
    %v947 = vrot.slane %v584, 4
    %948 = vrot.lane.b32.xlu0 %v947, 64
    %v949 = vpop.permute.xlu0 %948
    %v950 = vsel %vm221, %v949, 0
    %952 = vmatpush.msra.mxu0 0.0
    %953 = vmatpush.msra.mxu0 0.0
    %954 = vmatpush.msra.mxu0 0.0
    %955 = vmatpush.msra.mxu0 0.0
    %956 = vmatpush.msra.mxu0 0.0
    %957 = vmatpush.msra.mxu0 0.0
    %958 = vmatpush.msra.mxu0 0.0
    %959 = vmatpush.msra.mxu0 0.0
    %960 = vmatpush.msra.mxu0 0.0
    %961 = vmatpush.msra.mxu0 0.0
    %962 = vmatpush.msra.mxu0 0.0
    %963 = vmatpush.msra.mxu0 0.0
    %964 = vmatpush.msra.mxu0 %v588
    %965 = vmatpush.msra.mxu0 %v587
    %966 = vmatpush.msra.mxu0 %v586
    %967 = vmatpush.msra.mxu0 %v585
    %968 = vmatmul.f32.gmra.mxu0 %v950
    %v969 = vpop.f32.mrf.mxu0
    %v970 = vadd.f32 %v944, %v969
    %971 = vdwg.mxu0
    %v972 = vadd.f32 %v970, %v593
    %v973 = vxor.u32 %v972, 2147483648
    %v974 = vmul.f32 %v973, 1.442695
    %v975 = vpow.pop %v974
    %v976 = vadd.f32 %v975, 1.0
    %v977 = vrcp.pop %v976
    %v978 = vmul.f32 %v976, %v977
    %v979 = vsub.f32 1.0, %v978
    %v980 = vmul.f32 %v977, %v979
    %v981 = vadd.f32 %v977, %v980
    %vm982 = vweird.f32 %v976
    %vm983 = vweird.f32 %v977
    %vm984 = vmor %vm982, %vm983
    %v985 = vsel %vm984, %v977, %v981
    %v986 = vand.u32 2147483647, %v976
    %vm987 = vcmp.eq.f32.partialorder %v986, 8.507059e+37
    %v988 = vand.u32 %v976, 2147483648
    %v989 = vor.u32 1.1754944e-38, %v988
    %v990 = vsel %vm987, %v989, %v985
    %v991 = vmul.f32 1.0, %v990
    %v992 = vtanh.pop %v972
    %v993 = vmul.f32 %v991, %v914
    %995 = vrot.lane.b32.xlu0 %v992, 32
    %v996 = vpop.permute.xlu0 %995
    %v998 = vmul.f32 %v991, %v996
    %1000 = vrot.lane.b32.xlu0 %v998, 32
    %v1001 = vpop.permute.xlu0 %1000
    %v1003 = vadd.f32 %v993, %v1001
    %v1004 = vtanh.pop %v1003
    %1006 = vrot.lane.b32.xlu0 %v1004, 32
    %v1007 = vpop.permute.xlu0 %1006
    %v1009 = vmul.f32 %v991, %v1007
    %v1010 = vld [vmem:[#allocation4] sm:$0xff]
    %v1011 = vld [vmem:[#allocation4 + $0x8] sm:$0xff]
    %v1012 = vld [vmem:[#allocation4 + $0x10] sm:$0xff]
    %v1013 = vld [vmem:[#allocation4 + $0x18] sm:$0xff]
    %v1014 = vld [vmem:[#allocation4 + $0x20] sm:$0xff]
    %v1015 = vld [vmem:[#allocation4 + $0x28] sm:$0xff]
    %v1016 = vld [vmem:[#allocation4 + $0x30] sm:$0xff]
    %v1017 = vld [vmem:[#allocation4 + $0x38] sm:$0xff]
    %v1018 = vld [vmem:[#allocation4 + $0x80] sm:$0xff]
    %v1019 = vld [vmem:[#allocation4 + $0x88] sm:$0xff]
    %v1020 = vld [vmem:[#allocation4 + $0x90] sm:$0xff]
    %v1021 = vld [vmem:[#allocation4 + $0x98] sm:$0xff]
    %v1022 = vld [vmem:[#allocation4 + $0xa0] sm:$0xff]
    %v1023 = vld [vmem:[#allocation4 + $0xa8] sm:$0xff]
    %v1024 = vld [vmem:[#allocation4 + $0xb0] sm:$0xff]
    %v1025 = vld [vmem:[#allocation4 + $0xb8] sm:$0xff]
    %v1026 = vld [vmem:[#allocation4 + $0xc0] sm:$0xff]
    %v1027 = vld [vmem:[#allocation4 + $0xc8] sm:$0xff]
    %v1028 = vld [vmem:[#allocation4 + $0xd0] sm:$0xff]
    %v1029 = vld [vmem:[#allocation4 + $0xd8] sm:$0xff]
    %v1030 = vld [vmem:[#allocation4 + $0xe0] sm:$0xff]
    %v1031 = vld [vmem:[#allocation4 + $0xe8] sm:$0xff]
    %v1032 = vld [vmem:[#allocation4 + $0xf0] sm:$0xff]
    %v1033 = vld [vmem:[#allocation4 + $0xf8] sm:$0xff]
    %s1034 = scalar_lea.vmem [#allocation4], 256
    %v1035 = vld [vmem:[%s1034] ss:$8 sm:$0x3]
    %vm1036 = vcmask 523264
    %v1037 = vsel %vm1036, 0.0, 0
    %1039 = vmatpush.msra.mxu0 0.0
    %1040 = vmatpush.msra.mxu0 0.0
    %1041 = vmatpush.msra.mxu0 0.0
    %1042 = vmatpush.msra.mxu0 0.0
    %1043 = vmatpush.msra.mxu0 0.0
    %1044 = vmatpush.msra.mxu0 0.0
    %1045 = vmatpush.msra.mxu0 0.0
    %1046 = vmatpush.msra.mxu0 0.0
    %1047 = vmatpush.msra.mxu0 %v1032
    %1048 = vmatpush.msra.mxu0 %v1030
    %1049 = vmatpush.msra.mxu0 %v1028
    %1050 = vmatpush.msra.mxu0 %v1026
    %1051 = vmatpush.msra.mxu0 %v1024
    %1052 = vmatpush.msra.mxu0 %v1022
    %1053 = vmatpush.msra.mxu0 %v1020
    %1054 = vmatpush.msra.mxu0 %v1018
    %1055 = vmatmul.f32.gmra.mxu0 %v1037
    %v1056 = vpop.f32.mrf.mxu0
    %v1057 = vadd.f32 0.0, %v1056
    %1058 = vdwg.mxu0
    %1059 = vmatpush.msra.mxu0 0.0
    %1060 = vmatpush.msra.mxu0 0.0
    %1061 = vmatpush.msra.mxu0 0.0
    %1062 = vmatpush.msra.mxu0 0.0
    %1063 = vmatpush.msra.mxu0 0.0
    %1064 = vmatpush.msra.mxu0 0.0
    %1065 = vmatpush.msra.mxu0 0.0
    %1066 = vmatpush.msra.mxu0 0.0
    %1067 = vmatpush.msra.mxu0 %v1033
    %1068 = vmatpush.msra.mxu0 %v1031
    %1069 = vmatpush.msra.mxu0 %v1029
    %1070 = vmatpush.msra.mxu0 %v1027
    %1071 = vmatpush.msra.mxu0 %v1025
    %1072 = vmatpush.msra.mxu0 %v1023
    %1073 = vmatpush.msra.mxu0 %v1021
    %1074 = vmatpush.msra.mxu0 %v1019
    %1075 = vmatmul.f32.gmra.mxu0 %v1037
    %v1076 = vpop.f32.mrf.mxu0
    %v1077 = vadd.f32 0.0, %v1076
    %1078 = vdwg.mxu0
    %1079 = vmatpush.msra.mxu0 0.0
    %1080 = vmatpush.msra.mxu0 0.0
    %1081 = vmatpush.msra.mxu0 0.0
    %1082 = vmatpush.msra.mxu0 0.0
    %1083 = vmatpush.msra.mxu0 0.0
    %1084 = vmatpush.msra.mxu0 0.0
    %1085 = vmatpush.msra.mxu0 0.0
    %1086 = vmatpush.msra.mxu0 0.0
    %1087 = vmatpush.msra.mxu0 0.0
    %1088 = vmatpush.msra.mxu0 0.0
    %1089 = vmatpush.msra.mxu0 0.0
    %1090 = vmatpush.msra.mxu0 0.0
    %1091 = vmatpush.msra.mxu0 %v1016
    %1092 = vmatpush.msra.mxu0 %v1014
    %1093 = vmatpush.msra.mxu0 %v1012
    %1094 = vmatpush.msra.mxu0 %v1010
    %1095 = vmatmul.f32.gmra.mxu0 %v675
    %v1096 = vpop.f32.mrf.mxu0
    %v1097 = vadd.f32 %v1057, %v1096
    %1098 = vdwg.mxu0
    %1099 = vmatpush.msra.mxu0 0.0
    %1100 = vmatpush.msra.mxu0 0.0
    %1101 = vmatpush.msra.mxu0 0.0
    %1102 = vmatpush.msra.mxu0 0.0
    %1103 = vmatpush.msra.mxu0 0.0
    %1104 = vmatpush.msra.mxu0 0.0
    %1105 = vmatpush.msra.mxu0 0.0
    %1106 = vmatpush.msra.mxu0 0.0
    %1107 = vmatpush.msra.mxu0 0.0
    %1108 = vmatpush.msra.mxu0 0.0
    %1109 = vmatpush.msra.mxu0 0.0
    %1110 = vmatpush.msra.mxu0 0.0
    %1111 = vmatpush.msra.mxu0 %v1017
    %1112 = vmatpush.msra.mxu0 %v1015
    %1113 = vmatpush.msra.mxu0 %v1013
    %1114 = vmatpush.msra.mxu0 %v1011
    %1115 = vmatmul.f32.gmra.mxu0 %v675
    %v1116 = vpop.f32.mrf.mxu0
    %v1117 = vadd.f32 %v1077, %v1116
    %1118 = vdwg.mxu0
    %v1120 = vperm.slane %v1035, 0
    %v1121 = vperm.slane %v1035, 1
    %v1124 = vadd.f32 %v1097, %v1120
    %v1125 = vadd.f32 %v1117, %v1121
    %v1126 = vxor.u32 %v1124, 2147483648
    %v1127 = vxor.u32 %v1125, 2147483648
    %v1128 = vmul.f32 %v1126, 1.442695
    %v1129 = vpow.pop %v1128
    %v1130 = vmul.f32 %v1127, 1.442695
    %v1131 = vpow.pop %v1130
    %v1132 = vadd.f32 %v1129, 1.0
    %v1133 = vadd.f32 %v1131, 1.0
    %v1134 = vrcp.pop %v1132
    %v1135 = vmul.f32 %v1132, %v1134
    %v1136 = vsub.f32 1.0, %v1135
    %v1137 = vmul.f32 %v1134, %v1136
    %v1138 = vadd.f32 %v1134, %v1137
    %vm1139 = vweird.f32 %v1132
    %vm1140 = vweird.f32 %v1134
    %vm1141 = vmor %vm1139, %vm1140
    %v1142 = vsel %vm1141, %v1134, %v1138
    %v1143 = vand.u32 2147483647, %v1132
    %vm1144 = vcmp.eq.f32.partialorder %v1143, 8.507059e+37
    %v1145 = vand.u32 %v1132, 2147483648
    %v1146 = vor.u32 1.1754944e-38, %v1145
    %v1147 = vsel %vm1144, %v1146, %v1142
    %v1148 = vmul.f32 1.0, %v1147
    %v1149 = vrcp.pop %v1133
    %v1150 = vmul.f32 %v1133, %v1149
    %v1151 = vsub.f32 1.0, %v1150
    %v1152 = vmul.f32 %v1149, %v1151
    %v1153 = vadd.f32 %v1149, %v1152
    %vm1154 = vweird.f32 %v1133
    %vm1155 = vweird.f32 %v1149
    %vm1156 = vmor %vm1154, %vm1155
    %v1157 = vsel %vm1156, %v1149, %v1153
    %v1158 = vand.u32 2147483647, %v1133
    %vm1159 = vcmp.eq.f32.partialorder %v1158, 8.507059e+37
    %v1160 = vand.u32 %v1133, 2147483648
    %v1161 = vor.u32 1.1754944e-38, %v1160
    %v1162 = vsel %vm1159, %v1161, %v1157
    %v1163 = vmul.f32 1.0, %v1162
    %v1164 = vtanh.pop %v1125
    %v1165 = vmul.f32 %v1148, 0.0
    %1167 = vrot.lane.b32.xlu0 %v1164, 64
    %v1168 = vpop.permute.xlu0 %1167
    %v1170 = vmul.f32 %v1148, %v1168
    %1172 = vrot.lane.b32.xlu0 %v1170, 64
    %v1173 = vpop.permute.xlu0 %1172
    %v1175 = vadd.f32 %v1165, %v1173
    %v1176 = vtanh.pop %v1175
    %1178 = vrot.lane.b32.xlu0 %v1176, 64
    %v1179 = vpop.permute.xlu0 %1178
    %v1181 = vmul.f32 %v1163, %v1179
    %v1183 = vsel %vm1036, %v1181, 0
    %1185 = vmatpush.msra.mxu0 0.0
    %1186 = vmatpush.msra.mxu0 0.0
    %1187 = vmatpush.msra.mxu0 0.0
    %1188 = vmatpush.msra.mxu0 0.0
    %1189 = vmatpush.msra.mxu0 0.0
    %1190 = vmatpush.msra.mxu0 0.0
    %1191 = vmatpush.msra.mxu0 0.0
    %1192 = vmatpush.msra.mxu0 0.0
    %1193 = vmatpush.msra.mxu0 %v1032
    %1194 = vmatpush.msra.mxu0 %v1030
    %1195 = vmatpush.msra.mxu0 %v1028
    %1196 = vmatpush.msra.mxu0 %v1026
    %1197 = vmatpush.msra.mxu0 %v1024
    %1198 = vmatpush.msra.mxu0 %v1022
    %1199 = vmatpush.msra.mxu0 %v1020
    %1200 = vmatpush.msra.mxu0 %v1018
    %1201 = vmatmul.f32.gmra.mxu0 %v1183
    %v1202 = vpop.f32.mrf.mxu0
    %v1203 = vadd.f32 0.0, %v1202
    %1204 = vdwg.mxu0
    %1205 = vmatpush.msra.mxu0 0.0
    %1206 = vmatpush.msra.mxu0 0.0
    %1207 = vmatpush.msra.mxu0 0.0
    %1208 = vmatpush.msra.mxu0 0.0
    %1209 = vmatpush.msra.mxu0 0.0
    %1210 = vmatpush.msra.mxu0 0.0
    %1211 = vmatpush.msra.mxu0 0.0
    %1212 = vmatpush.msra.mxu0 0.0
    %1213 = vmatpush.msra.mxu0 %v1033
    %1214 = vmatpush.msra.mxu0 %v1031
    %1215 = vmatpush.msra.mxu0 %v1029
    %1216 = vmatpush.msra.mxu0 %v1027
    %1217 = vmatpush.msra.mxu0 %v1025
    %1218 = vmatpush.msra.mxu0 %v1023
    %1219 = vmatpush.msra.mxu0 %v1021
    %1220 = vmatpush.msra.mxu0 %v1019
    %1221 = vmatmul.f32.gmra.mxu0 %v1183
    %v1222 = vpop.f32.mrf.mxu0
    %v1223 = vadd.f32 0.0, %v1222
    %1224 = vdwg.mxu0
    %1225 = vmatpush.msra.mxu0 0.0
    %1226 = vmatpush.msra.mxu0 0.0
    %1227 = vmatpush.msra.mxu0 0.0
    %1228 = vmatpush.msra.mxu0 0.0
    %1229 = vmatpush.msra.mxu0 0.0
    %1230 = vmatpush.msra.mxu0 0.0
    %1231 = vmatpush.msra.mxu0 0.0
    %1232 = vmatpush.msra.mxu0 0.0
    %1233 = vmatpush.msra.mxu0 0.0
    %1234 = vmatpush.msra.mxu0 0.0
    %1235 = vmatpush.msra.mxu0 0.0
    %1236 = vmatpush.msra.mxu0 0.0
    %1237 = vmatpush.msra.mxu0 %v1016
    %1238 = vmatpush.msra.mxu0 %v1014
    %1239 = vmatpush.msra.mxu0 %v1012
    %1240 = vmatpush.msra.mxu0 %v1010
    %1241 = vmatmul.f32.gmra.mxu0 %v758
    %v1242 = vpop.f32.mrf.mxu0
    %v1243 = vadd.f32 %v1203, %v1242
    %1244 = vdwg.mxu0
    %1245 = vmatpush.msra.mxu0 0.0
    %1246 = vmatpush.msra.mxu0 0.0
    %1247 = vmatpush.msra.mxu0 0.0
    %1248 = vmatpush.msra.mxu0 0.0
    %1249 = vmatpush.msra.mxu0 0.0
    %1250 = vmatpush.msra.mxu0 0.0
    %1251 = vmatpush.msra.mxu0 0.0
    %1252 = vmatpush.msra.mxu0 0.0
    %1253 = vmatpush.msra.mxu0 0.0
    %1254 = vmatpush.msra.mxu0 0.0
    %1255 = vmatpush.msra.mxu0 0.0
    %1256 = vmatpush.msra.mxu0 0.0
    %1257 = vmatpush.msra.mxu0 %v1017
    %1258 = vmatpush.msra.mxu0 %v1015
    %1259 = vmatpush.msra.mxu0 %v1013
    %1260 = vmatpush.msra.mxu0 %v1011
    %1261 = vmatmul.f32.gmra.mxu0 %v758
    %v1262 = vpop.f32.mrf.mxu0
    %v1263 = vadd.f32 %v1223, %v1262
    %1264 = vdwg.mxu0
    %v1265 = vadd.f32 %v1243, %v1120
    %v1266 = vadd.f32 %v1263, %v1121
    %v1267 = vxor.u32 %v1265, 2147483648
    %v1268 = vxor.u32 %v1266, 2147483648
    %v1269 = vmul.f32 %v1267, 1.442695
    %v1270 = vpow.pop %v1269
    %v1271 = vmul.f32 %v1268, 1.442695
    %v1272 = vpow.pop %v1271
    %v1273 = vadd.f32 %v1270, 1.0
    %v1274 = vadd.f32 %v1272, 1.0
    %v1275 = vrcp.pop %v1273
    %v1276 = vmul.f32 %v1273, %v1275
    %v1277 = vsub.f32 1.0, %v1276
    %v1278 = vmul.f32 %v1275, %v1277
    %v1279 = vadd.f32 %v1275, %v1278
    %vm1280 = vweird.f32 %v1273
    %vm1281 = vweird.f32 %v1275
    %vm1282 = vmor %vm1280, %vm1281
    %v1283 = vsel %vm1282, %v1275, %v1279
    %v1284 = vand.u32 2147483647, %v1273
    %vm1285 = vcmp.eq.f32.partialorder %v1284, 8.507059e+37
    %v1286 = vand.u32 %v1273, 2147483648
    %v1287 = vor.u32 1.1754944e-38, %v1286
    %v1288 = vsel %vm1285, %v1287, %v1283
    %v1289 = vmul.f32 1.0, %v1288
    %v1290 = vrcp.pop %v1274
    %v1291 = vmul.f32 %v1274, %v1290
    %v1292 = vsub.f32 1.0, %v1291
    %v1293 = vmul.f32 %v1290, %v1292
    %v1294 = vadd.f32 %v1290, %v1293
    %vm1295 = vweird.f32 %v1274
    %vm1296 = vweird.f32 %v1290
    %vm1297 = vmor %vm1295, %vm1296
    %v1298 = vsel %vm1297, %v1290, %v1294
    %v1299 = vand.u32 2147483647, %v1274
    %vm1300 = vcmp.eq.f32.partialorder %v1299, 8.507059e+37
    %v1301 = vand.u32 %v1274, 2147483648
    %v1302 = vor.u32 1.1754944e-38, %v1301
    %v1303 = vsel %vm1300, %v1302, %v1298
    %v1304 = vmul.f32 1.0, %v1303
    %v1305 = vtanh.pop %v1266
    %v1306 = vmul.f32 %v1289, %v1175
    %1308 = vrot.lane.b32.xlu0 %v1305, 64
    %v1309 = vpop.permute.xlu0 %1308
    %v1311 = vmul.f32 %v1289, %v1309
    %1313 = vrot.lane.b32.xlu0 %v1311, 64
    %v1314 = vpop.permute.xlu0 %1313
    %v1316 = vadd.f32 %v1306, %v1314
    %v1317 = vtanh.pop %v1316
    %1319 = vrot.lane.b32.xlu0 %v1317, 64
    %v1320 = vpop.permute.xlu0 %1319
    %v1322 = vmul.f32 %v1304, %v1320
    %v1324 = vsel %vm1036, %v1322, 0
    %1326 = vmatpush.msra.mxu0 0.0
    %1327 = vmatpush.msra.mxu0 0.0
    %1328 = vmatpush.msra.mxu0 0.0
    %1329 = vmatpush.msra.mxu0 0.0
    %1330 = vmatpush.msra.mxu0 0.0
    %1331 = vmatpush.msra.mxu0 0.0
    %1332 = vmatpush.msra.mxu0 0.0
    %1333 = vmatpush.msra.mxu0 0.0
    %1334 = vmatpush.msra.mxu0 %v1032
    %1335 = vmatpush.msra.mxu0 %v1030
    %1336 = vmatpush.msra.mxu0 %v1028
    %1337 = vmatpush.msra.mxu0 %v1026
    %1338 = vmatpush.msra.mxu0 %v1024
    %1339 = vmatpush.msra.mxu0 %v1022
    %1340 = vmatpush.msra.mxu0 %v1020
    %1341 = vmatpush.msra.mxu0 %v1018
    %1342 = vmatmul.f32.gmra.mxu0 %v1324
    %v1343 = vpop.f32.mrf.mxu0
    %v1344 = vadd.f32 0.0, %v1343
    %1345 = vdwg.mxu0
    %1346 = vmatpush.msra.mxu0 0.0
    %1347 = vmatpush.msra.mxu0 0.0
    %1348 = vmatpush.msra.mxu0 0.0
    %1349 = vmatpush.msra.mxu0 0.0
    %1350 = vmatpush.msra.mxu0 0.0
    %1351 = vmatpush.msra.mxu0 0.0
    %1352 = vmatpush.msra.mxu0 0.0
    %1353 = vmatpush.msra.mxu0 0.0
    %1354 = vmatpush.msra.mxu0 %v1033
    %1355 = vmatpush.msra.mxu0 %v1031
    %1356 = vmatpush.msra.mxu0 %v1029
    %1357 = vmatpush.msra.mxu0 %v1027
    %1358 = vmatpush.msra.mxu0 %v1025
    %1359 = vmatpush.msra.mxu0 %v1023
    %1360 = vmatpush.msra.mxu0 %v1021
    %1361 = vmatpush.msra.mxu0 %v1019
    %1362 = vmatmul.f32.gmra.mxu0 %v1324
    %v1363 = vpop.f32.mrf.mxu0
    %v1364 = vadd.f32 0.0, %v1363
    %1365 = vdwg.mxu0
    %1366 = vmatpush.msra.mxu0 0.0
    %1367 = vmatpush.msra.mxu0 0.0
    %1368 = vmatpush.msra.mxu0 0.0
    %1369 = vmatpush.msra.mxu0 0.0
    %1370 = vmatpush.msra.mxu0 0.0
    %1371 = vmatpush.msra.mxu0 0.0
    %1372 = vmatpush.msra.mxu0 0.0
    %1373 = vmatpush.msra.mxu0 0.0
    %1374 = vmatpush.msra.mxu0 0.0
    %1375 = vmatpush.msra.mxu0 0.0
    %1376 = vmatpush.msra.mxu0 0.0
    %1377 = vmatpush.msra.mxu0 0.0
    %1378 = vmatpush.msra.mxu0 %v1016
    %1379 = vmatpush.msra.mxu0 %v1014
    %1380 = vmatpush.msra.mxu0 %v1012
    %1381 = vmatpush.msra.mxu0 %v1010
    %1382 = vmatmul.f32.gmra.mxu0 %v841
    %v1383 = vpop.f32.mrf.mxu0
    %v1384 = vadd.f32 %v1344, %v1383
    %1385 = vdwg.mxu0
    %1386 = vmatpush.msra.mxu0 0.0
    %1387 = vmatpush.msra.mxu0 0.0
    %1388 = vmatpush.msra.mxu0 0.0
    %1389 = vmatpush.msra.mxu0 0.0
    %1390 = vmatpush.msra.mxu0 0.0
    %1391 = vmatpush.msra.mxu0 0.0
    %1392 = vmatpush.msra.mxu0 0.0
    %1393 = vmatpush.msra.mxu0 0.0
    %1394 = vmatpush.msra.mxu0 0.0
    %1395 = vmatpush.msra.mxu0 0.0
    %1396 = vmatpush.msra.mxu0 0.0
    %1397 = vmatpush.msra.mxu0 0.0
    %1398 = vmatpush.msra.mxu0 %v1017
    %1399 = vmatpush.msra.mxu0 %v1015
    %1400 = vmatpush.msra.mxu0 %v1013
    %1401 = vmatpush.msra.mxu0 %v1011
    %1402 = vmatmul.f32.gmra.mxu0 %v841
    %v1403 = vpop.f32.mrf.mxu0
    %v1404 = vadd.f32 %v1364, %v1403
    %1405 = vdwg.mxu0
    %v1406 = vadd.f32 %v1384, %v1120
    %v1407 = vadd.f32 %v1404, %v1121
    %v1408 = vxor.u32 %v1406, 2147483648
    %v1409 = vxor.u32 %v1407, 2147483648
    %v1410 = vmul.f32 %v1408, 1.442695
    %v1411 = vpow.pop %v1410
    %v1412 = vmul.f32 %v1409, 1.442695
    %v1413 = vpow.pop %v1412
    %v1414 = vadd.f32 %v1411, 1.0
    %v1415 = vadd.f32 %v1413, 1.0
    %v1416 = vrcp.pop %v1414
    %v1417 = vmul.f32 %v1414, %v1416
    %v1418 = vsub.f32 1.0, %v1417
    %v1419 = vmul.f32 %v1416, %v1418
    %v1420 = vadd.f32 %v1416, %v1419
    %vm1421 = vweird.f32 %v1414
    %vm1422 = vweird.f32 %v1416
    %vm1423 = vmor %vm1421, %vm1422
    %v1424 = vsel %vm1423, %v1416, %v1420
    %v1425 = vand.u32 2147483647, %v1414
    %vm1426 = vcmp.eq.f32.partialorder %v1425, 8.507059e+37
    %v1427 = vand.u32 %v1414, 2147483648
    %v1428 = vor.u32 1.1754944e-38, %v1427
    %v1429 = vsel %vm1426, %v1428, %v1424
    %v1430 = vmul.f32 1.0, %v1429
    %v1431 = vrcp.pop %v1415
    %v1432 = vmul.f32 %v1415, %v1431
    %v1433 = vsub.f32 1.0, %v1432
    %v1434 = vmul.f32 %v1431, %v1433
    %v1435 = vadd.f32 %v1431, %v1434
    %vm1436 = vweird.f32 %v1415
    %vm1437 = vweird.f32 %v1431
    %vm1438 = vmor %vm1436, %vm1437
    %v1439 = vsel %vm1438, %v1431, %v1435
    %v1440 = vand.u32 2147483647, %v1415
    %vm1441 = vcmp.eq.f32.partialorder %v1440, 8.507059e+37
    %v1442 = vand.u32 %v1415, 2147483648
    %v1443 = vor.u32 1.1754944e-38, %v1442
    %v1444 = vsel %vm1441, %v1443, %v1439
    %v1445 = vmul.f32 1.0, %v1444
    %v1446 = vtanh.pop %v1407
    %v1447 = vmul.f32 %v1430, %v1316
    %1449 = vrot.lane.b32.xlu0 %v1446, 64
    %v1450 = vpop.permute.xlu0 %1449
    %v1452 = vmul.f32 %v1430, %v1450
    %1454 = vrot.lane.b32.xlu0 %v1452, 64
    %v1455 = vpop.permute.xlu0 %1454
    %v1457 = vadd.f32 %v1447, %v1455
    %v1458 = vtanh.pop %v1457
    %1460 = vrot.lane.b32.xlu0 %v1458, 64
    %v1461 = vpop.permute.xlu0 %1460
    %v1463 = vmul.f32 %v1445, %v1461
    %v1465 = vsel %vm1036, %v1463, 0
    %1467 = vmatpush.msra.mxu0 0.0
    %1468 = vmatpush.msra.mxu0 0.0
    %1469 = vmatpush.msra.mxu0 0.0
    %1470 = vmatpush.msra.mxu0 0.0
    %1471 = vmatpush.msra.mxu0 0.0
    %1472 = vmatpush.msra.mxu0 0.0
    %1473 = vmatpush.msra.mxu0 0.0
    %1474 = vmatpush.msra.mxu0 0.0
    %1475 = vmatpush.msra.mxu0 %v1032
    %1476 = vmatpush.msra.mxu0 %v1030
    %1477 = vmatpush.msra.mxu0 %v1028
    %1478 = vmatpush.msra.mxu0 %v1026
    %1479 = vmatpush.msra.mxu0 %v1024
    %1480 = vmatpush.msra.mxu0 %v1022
    %1481 = vmatpush.msra.mxu0 %v1020
    %1482 = vmatpush.msra.mxu0 %v1018
    %1483 = vmatmul.f32.gmra.mxu0 %v1465
    %v1484 = vpop.f32.mrf.mxu0
    %v1485 = vadd.f32 0.0, %v1484
    %1486 = vdwg.mxu0
    %1487 = vmatpush.msra.mxu0 0.0
    %1488 = vmatpush.msra.mxu0 0.0
    %1489 = vmatpush.msra.mxu0 0.0
    %1490 = vmatpush.msra.mxu0 0.0
    %1491 = vmatpush.msra.mxu0 0.0
    %1492 = vmatpush.msra.mxu0 0.0
    %1493 = vmatpush.msra.mxu0 0.0
    %1494 = vmatpush.msra.mxu0 0.0
    %1495 = vmatpush.msra.mxu0 %v1033
    %1496 = vmatpush.msra.mxu0 %v1031
    %1497 = vmatpush.msra.mxu0 %v1029
    %1498 = vmatpush.msra.mxu0 %v1027
    %1499 = vmatpush.msra.mxu0 %v1025
    %1500 = vmatpush.msra.mxu0 %v1023
    %1501 = vmatpush.msra.mxu0 %v1021
    %1502 = vmatpush.msra.mxu0 %v1019
    %1503 = vmatmul.f32.gmra.mxu0 %v1465
    %v1504 = vpop.f32.mrf.mxu0
    %v1505 = vadd.f32 0.0, %v1504
    %1506 = vdwg.mxu0
    %1507 = vmatpush.msra.mxu0 0.0
    %1508 = vmatpush.msra.mxu0 0.0
    %1509 = vmatpush.msra.mxu0 0.0
    %1510 = vmatpush.msra.mxu0 0.0
    %1511 = vmatpush.msra.mxu0 0.0
    %1512 = vmatpush.msra.mxu0 0.0
    %1513 = vmatpush.msra.mxu0 0.0
    %1514 = vmatpush.msra.mxu0 0.0
    %1515 = vmatpush.msra.mxu0 0.0
    %1516 = vmatpush.msra.mxu0 0.0
    %1517 = vmatpush.msra.mxu0 0.0
    %1518 = vmatpush.msra.mxu0 0.0
    %1519 = vmatpush.msra.mxu0 %v1016
    %1520 = vmatpush.msra.mxu0 %v1014
    %1521 = vmatpush.msra.mxu0 %v1012
    %1522 = vmatpush.msra.mxu0 %v1010
    %1523 = vmatmul.f32.gmra.mxu0 %v924
    %v1524 = vpop.f32.mrf.mxu0
    %v1525 = vadd.f32 %v1485, %v1524
    %1526 = vdwg.mxu0
    %1527 = vmatpush.msra.mxu0 0.0
    %1528 = vmatpush.msra.mxu0 0.0
    %1529 = vmatpush.msra.mxu0 0.0
    %1530 = vmatpush.msra.mxu0 0.0
    %1531 = vmatpush.msra.mxu0 0.0
    %1532 = vmatpush.msra.mxu0 0.0
    %1533 = vmatpush.msra.mxu0 0.0
    %1534 = vmatpush.msra.mxu0 0.0
    %1535 = vmatpush.msra.mxu0 0.0
    %1536 = vmatpush.msra.mxu0 0.0
    %1537 = vmatpush.msra.mxu0 0.0
    %1538 = vmatpush.msra.mxu0 0.0
    %1539 = vmatpush.msra.mxu0 %v1017
    %1540 = vmatpush.msra.mxu0 %v1015
    %1541 = vmatpush.msra.mxu0 %v1013
    %1542 = vmatpush.msra.mxu0 %v1011
    %1543 = vmatmul.f32.gmra.mxu0 %v924
    %v1544 = vpop.f32.mrf.mxu0
    %v1545 = vadd.f32 %v1505, %v1544
    %1546 = vdwg.mxu0
    %v1547 = vadd.f32 %v1525, %v1120
    %v1548 = vadd.f32 %v1545, %v1121
    %v1549 = vxor.u32 %v1547, 2147483648
    %v1550 = vxor.u32 %v1548, 2147483648
    %v1551 = vmul.f32 %v1549, 1.442695
    %v1552 = vpow.pop %v1551
    %v1553 = vmul.f32 %v1550, 1.442695
    %v1554 = vpow.pop %v1553
    %v1555 = vadd.f32 %v1552, 1.0
    %v1556 = vadd.f32 %v1554, 1.0
    %v1557 = vrcp.pop %v1555
    %v1558 = vmul.f32 %v1555, %v1557
    %v1559 = vsub.f32 1.0, %v1558
    %v1560 = vmul.f32 %v1557, %v1559
    %v1561 = vadd.f32 %v1557, %v1560
    %vm1562 = vweird.f32 %v1555
    %vm1563 = vweird.f32 %v1557
    %vm1564 = vmor %vm1562, %vm1563
    %v1565 = vsel %vm1564, %v1557, %v1561
    %v1566 = vand.u32 2147483647, %v1555
    %vm1567 = vcmp.eq.f32.partialorder %v1566, 8.507059e+37
    %v1568 = vand.u32 %v1555, 2147483648
    %v1569 = vor.u32 1.1754944e-38, %v1568
    %v1570 = vsel %vm1567, %v1569, %v1565
    %v1571 = vmul.f32 1.0, %v1570
    %v1572 = vrcp.pop %v1556
    %v1573 = vmul.f32 %v1556, %v1572
    %v1574 = vsub.f32 1.0, %v1573
    %v1575 = vmul.f32 %v1572, %v1574
    %v1576 = vadd.f32 %v1572, %v1575
    %vm1577 = vweird.f32 %v1556
    %vm1578 = vweird.f32 %v1572
    %vm1579 = vmor %vm1577, %vm1578
    %v1580 = vsel %vm1579, %v1572, %v1576
    %v1581 = vand.u32 2147483647, %v1556
    %vm1582 = vcmp.eq.f32.partialorder %v1581, 8.507059e+37
    %v1583 = vand.u32 %v1556, 2147483648
    %v1584 = vor.u32 1.1754944e-38, %v1583
    %v1585 = vsel %vm1582, %v1584, %v1580
    %v1586 = vmul.f32 1.0, %v1585
    %v1587 = vtanh.pop %v1548
    %v1588 = vmul.f32 %v1571, %v1457
    %1590 = vrot.lane.b32.xlu0 %v1587, 64
    %v1591 = vpop.permute.xlu0 %1590
    %v1593 = vmul.f32 %v1571, %v1591
    %1595 = vrot.lane.b32.xlu0 %v1593, 64
    %v1596 = vpop.permute.xlu0 %1595
    %v1598 = vadd.f32 %v1588, %v1596
    %v1599 = vtanh.pop %v1598
    %1601 = vrot.lane.b32.xlu0 %v1599, 64
    %v1602 = vpop.permute.xlu0 %1601
    %v1604 = vmul.f32 %v1586, %v1602
    %v1606 = vsel %vm1036, %v1604, 0
    %1608 = vmatpush.msra.mxu0 0.0
    %1609 = vmatpush.msra.mxu0 0.0
    %1610 = vmatpush.msra.mxu0 0.0
    %1611 = vmatpush.msra.mxu0 0.0
    %1612 = vmatpush.msra.mxu0 0.0
    %1613 = vmatpush.msra.mxu0 0.0
    %1614 = vmatpush.msra.mxu0 0.0
    %1615 = vmatpush.msra.mxu0 0.0
    %1616 = vmatpush.msra.mxu0 %v1032
    %1617 = vmatpush.msra.mxu0 %v1030
    %1618 = vmatpush.msra.mxu0 %v1028
    %1619 = vmatpush.msra.mxu0 %v1026
    %1620 = vmatpush.msra.mxu0 %v1024
    %1621 = vmatpush.msra.mxu0 %v1022
    %1622 = vmatpush.msra.mxu0 %v1020
    %1623 = vmatpush.msra.mxu0 %v1018
    %1624 = vmatmul.f32.gmra.mxu0 %v1606
    %v1625 = vpop.f32.mrf.mxu0
    %v1626 = vadd.f32 0.0, %v1625
    %1627 = vdwg.mxu0
    %1628 = vmatpush.msra.mxu0 0.0
    %1629 = vmatpush.msra.mxu0 0.0
    %1630 = vmatpush.msra.mxu0 0.0
    %1631 = vmatpush.msra.mxu0 0.0
    %1632 = vmatpush.msra.mxu0 0.0
    %1633 = vmatpush.msra.mxu0 0.0
    %1634 = vmatpush.msra.mxu0 0.0
    %1635 = vmatpush.msra.mxu0 0.0
    %1636 = vmatpush.msra.mxu0 %v1033
    %1637 = vmatpush.msra.mxu0 %v1031
    %1638 = vmatpush.msra.mxu0 %v1029
    %1639 = vmatpush.msra.mxu0 %v1027
    %1640 = vmatpush.msra.mxu0 %v1025
    %1641 = vmatpush.msra.mxu0 %v1023
    %1642 = vmatpush.msra.mxu0 %v1021
    %1643 = vmatpush.msra.mxu0 %v1019
    %1644 = vmatmul.f32.gmra.mxu0 %v1606
    %v1645 = vpop.f32.mrf.mxu0
    %v1646 = vadd.f32 0.0, %v1645
    %1647 = vdwg.mxu0
    %1649 = vrot.lane.b32.xlu0 %v1009, 64
    %v1650 = vpop.permute.xlu0 %1649
    %v1651 = vsel %vm221, %v1650, 0
    %1653 = vmatpush.msra.mxu0 0.0
    %1654 = vmatpush.msra.mxu0 0.0
    %1655 = vmatpush.msra.mxu0 0.0
    %1656 = vmatpush.msra.mxu0 0.0
    %1657 = vmatpush.msra.mxu0 0.0
    %1658 = vmatpush.msra.mxu0 0.0
    %1659 = vmatpush.msra.mxu0 0.0
    %1660 = vmatpush.msra.mxu0 0.0
    %1661 = vmatpush.msra.mxu0 0.0
    %1662 = vmatpush.msra.mxu0 0.0
    %1663 = vmatpush.msra.mxu0 0.0
    %1664 = vmatpush.msra.mxu0 0.0
    %1665 = vmatpush.msra.mxu0 %v1016
    %1666 = vmatpush.msra.mxu0 %v1014
    %1667 = vmatpush.msra.mxu0 %v1012
    %1668 = vmatpush.msra.mxu0 %v1010
    %1669 = vmatmul.f32.gmra.mxu0 %v1651
    %v1670 = vpop.f32.mrf.mxu0
    %v1671 = vadd.f32 %v1626, %v1670
    %1672 = vdwg.mxu0
    %1673 = vmatpush.msra.mxu0 0.0
    %1674 = vmatpush.msra.mxu0 0.0
    %1675 = vmatpush.msra.mxu0 0.0
    %1676 = vmatpush.msra.mxu0 0.0
    %1677 = vmatpush.msra.mxu0 0.0
    %1678 = vmatpush.msra.mxu0 0.0
    %1679 = vmatpush.msra.mxu0 0.0
    %1680 = vmatpush.msra.mxu0 0.0
    %1681 = vmatpush.msra.mxu0 0.0
    %1682 = vmatpush.msra.mxu0 0.0
    %1683 = vmatpush.msra.mxu0 0.0
    %1684 = vmatpush.msra.mxu0 0.0
    %1685 = vmatpush.msra.mxu0 %v1017
    %1686 = vmatpush.msra.mxu0 %v1015
    %1687 = vmatpush.msra.mxu0 %v1013
    %1688 = vmatpush.msra.mxu0 %v1011
    %1689 = vmatmul.f32.gmra.mxu0 %v1651
    %v1690 = vpop.f32.mrf.mxu0
    %v1691 = vadd.f32 %v1646, %v1690
    %1692 = vdwg.mxu0
    %v1693 = vadd.f32 %v1671, %v1120
    %v1694 = vadd.f32 %v1691, %v1121
    %v1695 = vxor.u32 %v1693, 2147483648
    %v1696 = vxor.u32 %v1694, 2147483648
    %v1697 = vmul.f32 %v1695, 1.442695
    %v1698 = vpow.pop %v1697
    %v1699 = vmul.f32 %v1696, 1.442695
    %v1700 = vpow.pop %v1699
    %v1701 = vadd.f32 %v1698, 1.0
    %v1702 = vadd.f32 %v1700, 1.0
    %v1703 = vrcp.pop %v1701
    %v1704 = vmul.f32 %v1701, %v1703
    %v1705 = vsub.f32 1.0, %v1704
    %v1706 = vmul.f32 %v1703, %v1705
    %v1707 = vadd.f32 %v1703, %v1706
    %vm1708 = vweird.f32 %v1701
    %vm1709 = vweird.f32 %v1703
    %vm1710 = vmor %vm1708, %vm1709
    %v1711 = vsel %vm1710, %v1703, %v1707
    %v1712 = vand.u32 2147483647, %v1701
    %vm1713 = vcmp.eq.f32.partialorder %v1712, 8.507059e+37
    %v1714 = vand.u32 %v1701, 2147483648
    %v1715 = vor.u32 1.1754944e-38, %v1714
    %v1716 = vsel %vm1713, %v1715, %v1711
    %v1717 = vmul.f32 1.0, %v1716
    %v1718 = vrcp.pop %v1702
    %v1719 = vmul.f32 %v1702, %v1718
    %v1720 = vsub.f32 1.0, %v1719
    %v1721 = vmul.f32 %v1718, %v1720
    %v1722 = vadd.f32 %v1718, %v1721
    %vm1723 = vweird.f32 %v1702
    %vm1724 = vweird.f32 %v1718
    %vm1725 = vmor %vm1723, %vm1724
    %v1726 = vsel %vm1725, %v1718, %v1722
    %v1727 = vand.u32 2147483647, %v1702
    %vm1728 = vcmp.eq.f32.partialorder %v1727, 8.507059e+37
    %v1729 = vand.u32 %v1702, 2147483648
    %v1730 = vor.u32 1.1754944e-38, %v1729
    %v1731 = vsel %vm1728, %v1730, %v1726
    %v1732 = vmul.f32 1.0, %v1731
    %v1733 = vtanh.pop %v1694
    %v1734 = vmul.f32 %v1717, %v1598
    %1736 = vrot.lane.b32.xlu0 %v1733, 64
    %v1737 = vpop.permute.xlu0 %1736
    %v1739 = vmul.f32 %v1717, %v1737
    %1741 = vrot.lane.b32.xlu0 %v1739, 64
    %v1742 = vpop.permute.xlu0 %1741
    %v1744 = vadd.f32 %v1734, %v1742
    %v1745 = vtanh.pop %v1744
    %1747 = vrot.lane.b32.xlu0 %v1745, 64
    %v1748 = vpop.permute.xlu0 %1747
    %v1750 = vmul.f32 %v1732, %v1748
    %v1751 = vld [vmem:[#allocation4 + $0x110] sm:$0xff]
    %v1752 = vld [vmem:[#allocation4 + $0x118] sm:$0xff]
    %v1753 = vld [vmem:[#allocation4 + $0x120] sm:$0xff]
    %v1754 = vld [vmem:[#allocation4 + $0x128] sm:$0xff]
    %v1755 = vld [vmem:[#allocation4 + $0x130] sm:$0xff]
    %v1756 = vld [vmem:[#allocation4 + $0x138] sm:$0xff]
    %v1757 = vld [vmem:[#allocation4 + $0x140] sm:$0xff]
    %v1758 = vld [vmem:[#allocation4 + $0x148] sm:$0xff]
    %v1759 = vld [vmem:[#allocation4 + $0x150] sm:$0xff]
    %v1760 = vld [vmem:[#allocation4 + $0x158] sm:$0xff]
    %v1761 = vld [vmem:[#allocation4 + $0x160] sm:$0xff]
    %v1762 = vld [vmem:[#allocation4 + $0x168] sm:$0xff]
    %v1763 = vld [vmem:[#allocation4 + $0x170] sm:$0xff]
    %v1764 = vld [vmem:[#allocation4 + $0x178] sm:$0xff]
    %v1765 = vld [vmem:[#allocation4 + $0x180] sm:$0xff]
    %v1766 = vld [vmem:[#allocation4 + $0x188] sm:$0xff]
    %v1767 = vld [vmem:[#allocation4 + $0x190] sm:$0xff]
    %v1768 = vld [vmem:[#allocation4 + $0x198] sm:$0xff]
    %v1769 = vld [vmem:[#allocation4 + $0x1a0] sm:$0xff]
    %v1770 = vld [vmem:[#allocation4 + $0x1a8] sm:$0xff]
    %v1771 = vld [vmem:[#allocation4 + $0x1b0] sm:$0xff]
    %v1772 = vld [vmem:[#allocation4 + $0x1b8] sm:$0xff]
    %v1773 = vld [vmem:[#allocation4 + $0x1c0] sm:$0xff]
    %v1774 = vld [vmem:[#allocation4 + $0x1c8] sm:$0xff]
    %v1775 = vld [vmem:[#allocation4 + $0x1d0] sm:$0xff]
    %v1776 = vld [vmem:[#allocation4 + $0x1d8] sm:$0xff]
    %v1777 = vld [vmem:[#allocation4 + $0x1e0] sm:$0xff]
    %v1778 = vld [vmem:[#allocation4 + $0x1e8] sm:$0xff]
    %v1779 = vld [vmem:[#allocation4 + $0x1f0] sm:$0xff]
    %v1780 = vld [vmem:[#allocation4 + $0x1f8] sm:$0xff]
    %v1781 = vld [vmem:[#allocation4 + $0x200] sm:$0xff]
    %v1782 = vld [vmem:[#allocation4 + $0x208] sm:$0xff]
    %s1783 = scalar_lea.vmem [#allocation4], 528
    %v1784 = vld [vmem:[%s1783] ss:$8 sm:$0x3]
    %1785 = vmatpush.msra.mxu0 0.0
    %1786 = vmatpush.msra.mxu0 0.0
    %1787 = vmatpush.msra.mxu0 0.0
    %1788 = vmatpush.msra.mxu0 0.0
    %1789 = vmatpush.msra.mxu0 0.0
    %1790 = vmatpush.msra.mxu0 0.0
    %1791 = vmatpush.msra.mxu0 0.0
    %1792 = vmatpush.msra.mxu0 0.0
    %1793 = vmatpush.msra.mxu0 %v1781
    %1794 = vmatpush.msra.mxu0 %v1779
    %1795 = vmatpush.msra.mxu0 %v1777
    %1796 = vmatpush.msra.mxu0 %v1775
    %1797 = vmatpush.msra.mxu0 %v1773
    %1798 = vmatpush.msra.mxu0 %v1771
    %1799 = vmatpush.msra.mxu0 %v1769
    %1800 = vmatpush.msra.mxu0 %v1767
    %1801 = vmatmul.f32.gmra.mxu0 %v1037
    %v1802 = vpop.f32.mrf.mxu0
    %v1803 = vadd.f32 0.0, %v1802
    %1804 = vdwg.mxu0
    %1805 = vmatpush.msra.mxu0 0.0
    %1806 = vmatpush.msra.mxu0 0.0
    %1807 = vmatpush.msra.mxu0 0.0
    %1808 = vmatpush.msra.mxu0 0.0
    %1809 = vmatpush.msra.mxu0 0.0
    %1810 = vmatpush.msra.mxu0 0.0
    %1811 = vmatpush.msra.mxu0 0.0
    %1812 = vmatpush.msra.mxu0 0.0
    %1813 = vmatpush.msra.mxu0 %v1782
    %1814 = vmatpush.msra.mxu0 %v1780
    %1815 = vmatpush.msra.mxu0 %v1778
    %1816 = vmatpush.msra.mxu0 %v1776
    %1817 = vmatpush.msra.mxu0 %v1774
    %1818 = vmatpush.msra.mxu0 %v1772
    %1819 = vmatpush.msra.mxu0 %v1770
    %1820 = vmatpush.msra.mxu0 %v1768
    %1821 = vmatmul.f32.gmra.mxu0 %v1037
    %v1822 = vpop.f32.mrf.mxu0
    %v1823 = vadd.f32 0.0, %v1822
    %1824 = vdwg.mxu0
    %1825 = vmatpush.msra.mxu0 0.0
    %1826 = vmatpush.msra.mxu0 0.0
    %1827 = vmatpush.msra.mxu0 0.0
    %1828 = vmatpush.msra.mxu0 0.0
    %1829 = vmatpush.msra.mxu0 0.0
    %1830 = vmatpush.msra.mxu0 0.0
    %1831 = vmatpush.msra.mxu0 0.0
    %1832 = vmatpush.msra.mxu0 0.0
    %1833 = vmatpush.msra.mxu0 %v1765
    %1834 = vmatpush.msra.mxu0 %v1763
    %1835 = vmatpush.msra.mxu0 %v1761
    %1836 = vmatpush.msra.mxu0 %v1759
    %1837 = vmatpush.msra.mxu0 %v1757
    %1838 = vmatpush.msra.mxu0 %v1755
    %1839 = vmatpush.msra.mxu0 %v1753
    %1840 = vmatpush.msra.mxu0 %v1751
    %1841 = vmatmul.f32.gmra.mxu0 %v1183
    %v1842 = vpop.f32.mrf.mxu0
    %v1843 = vadd.f32 %v1803, %v1842
    %1844 = vdwg.mxu0
    %1845 = vmatpush.msra.mxu0 0.0
    %1846 = vmatpush.msra.mxu0 0.0
    %1847 = vmatpush.msra.mxu0 0.0
    %1848 = vmatpush.msra.mxu0 0.0
    %1849 = vmatpush.msra.mxu0 0.0
    %1850 = vmatpush.msra.mxu0 0.0
    %1851 = vmatpush.msra.mxu0 0.0
    %1852 = vmatpush.msra.mxu0 0.0
    %1853 = vmatpush.msra.mxu0 %v1766
    %1854 = vmatpush.msra.mxu0 %v1764
    %1855 = vmatpush.msra.mxu0 %v1762
    %1856 = vmatpush.msra.mxu0 %v1760
    %1857 = vmatpush.msra.mxu0 %v1758
    %1858 = vmatpush.msra.mxu0 %v1756
    %1859 = vmatpush.msra.mxu0 %v1754
    %1860 = vmatpush.msra.mxu0 %v1752
    %1861 = vmatmul.f32.gmra.mxu0 %v1183
    %v1862 = vpop.f32.mrf.mxu0
    %v1863 = vadd.f32 %v1823, %v1862
    %1864 = vdwg.mxu0
    %v1866 = vperm.slane %v1784, 0
    %v1867 = vperm.slane %v1784, 1
    %v1870 = vadd.f32 %v1843, %v1866
    %v1871 = vadd.f32 %v1863, %v1867
    %v1872 = vxor.u32 %v1870, 2147483648
    %v1873 = vxor.u32 %v1871, 2147483648
    %v1874 = vmul.f32 %v1872, 1.442695
    %v1875 = vpow.pop %v1874
    %v1876 = vmul.f32 %v1873, 1.442695
    %v1877 = vpow.pop %v1876
    %v1878 = vadd.f32 %v1875, 1.0
    %v1879 = vadd.f32 %v1877, 1.0
    %v1880 = vrcp.pop %v1878
    %v1881 = vmul.f32 %v1878, %v1880
    %v1882 = vsub.f32 1.0, %v1881
    %v1883 = vmul.f32 %v1880, %v1882
    %v1884 = vadd.f32 %v1880, %v1883
    %vm1885 = vweird.f32 %v1878
    %vm1886 = vweird.f32 %v1880
    %vm1887 = vmor %vm1885, %vm1886
    %v1888 = vsel %vm1887, %v1880, %v1884
    %v1889 = vand.u32 2147483647, %v1878
    %vm1890 = vcmp.eq.f32.partialorder %v1889, 8.507059e+37
    %v1891 = vand.u32 %v1878, 2147483648
    %v1892 = vor.u32 1.1754944e-38, %v1891
    %v1893 = vsel %vm1890, %v1892, %v1888
    %v1894 = vmul.f32 1.0, %v1893
    %v1895 = vrcp.pop %v1879
    %v1896 = vmul.f32 %v1879, %v1895
    %v1897 = vsub.f32 1.0, %v1896
    %v1898 = vmul.f32 %v1895, %v1897
    %v1899 = vadd.f32 %v1895, %v1898
    %vm1900 = vweird.f32 %v1879
    %vm1901 = vweird.f32 %v1895
    %vm1902 = vmor %vm1900, %vm1901
    %v1903 = vsel %vm1902, %v1895, %v1899
    %v1904 = vand.u32 2147483647, %v1879
    %vm1905 = vcmp.eq.f32.partialorder %v1904, 8.507059e+37
    %v1906 = vand.u32 %v1879, 2147483648
    %v1907 = vor.u32 1.1754944e-38, %v1906
    %v1908 = vsel %vm1905, %v1907, %v1903
    %v1909 = vmul.f32 1.0, %v1908
    %v1910 = vtanh.pop %v1871
    %v1911 = vmul.f32 %v1894, 0.0
    %1913 = vrot.lane.b32.xlu0 %v1910, 64
    %v1914 = vpop.permute.xlu0 %1913
    %v1916 = vmul.f32 %v1894, %v1914
    %1918 = vrot.lane.b32.xlu0 %v1916, 64
    %v1919 = vpop.permute.xlu0 %1918
    %v1921 = vadd.f32 %v1911, %v1919
    %v1922 = vtanh.pop %v1921
    %1924 = vrot.lane.b32.xlu0 %v1922, 64
    %v1925 = vpop.permute.xlu0 %1924
    %v1927 = vmul.f32 %v1909, %v1925
    %v1929 = vsel %vm1036, %v1927, 0
    %1931 = vmatpush.msra.mxu0 0.0
    %1932 = vmatpush.msra.mxu0 0.0
    %1933 = vmatpush.msra.mxu0 0.0
    %1934 = vmatpush.msra.mxu0 0.0
    %1935 = vmatpush.msra.mxu0 0.0
    %1936 = vmatpush.msra.mxu0 0.0
    %1937 = vmatpush.msra.mxu0 0.0
    %1938 = vmatpush.msra.mxu0 0.0
    %1939 = vmatpush.msra.mxu0 %v1781
    %1940 = vmatpush.msra.mxu0 %v1779
    %1941 = vmatpush.msra.mxu0 %v1777
    %1942 = vmatpush.msra.mxu0 %v1775
    %1943 = vmatpush.msra.mxu0 %v1773
    %1944 = vmatpush.msra.mxu0 %v1771
    %1945 = vmatpush.msra.mxu0 %v1769
    %1946 = vmatpush.msra.mxu0 %v1767
    %1947 = vmatmul.f32.gmra.mxu0 %v1929
    %v1948 = vpop.f32.mrf.mxu0
    %v1949 = vadd.f32 0.0, %v1948
    %1950 = vdwg.mxu0
    %1951 = vmatpush.msra.mxu0 0.0
    %1952 = vmatpush.msra.mxu0 0.0
    %1953 = vmatpush.msra.mxu0 0.0
    %1954 = vmatpush.msra.mxu0 0.0
    %1955 = vmatpush.msra.mxu0 0.0
    %1956 = vmatpush.msra.mxu0 0.0
    %1957 = vmatpush.msra.mxu0 0.0
    %1958 = vmatpush.msra.mxu0 0.0
    %1959 = vmatpush.msra.mxu0 %v1782
    %1960 = vmatpush.msra.mxu0 %v1780
    %1961 = vmatpush.msra.mxu0 %v1778
    %1962 = vmatpush.msra.mxu0 %v1776
    %1963 = vmatpush.msra.mxu0 %v1774
    %1964 = vmatpush.msra.mxu0 %v1772
    %1965 = vmatpush.msra.mxu0 %v1770
    %1966 = vmatpush.msra.mxu0 %v1768
    %1967 = vmatmul.f32.gmra.mxu0 %v1929
    %v1968 = vpop.f32.mrf.mxu0
    %v1969 = vadd.f32 0.0, %v1968
    %1970 = vdwg.mxu0
    %1971 = vmatpush.msra.mxu0 0.0
    %1972 = vmatpush.msra.mxu0 0.0
    %1973 = vmatpush.msra.mxu0 0.0
    %1974 = vmatpush.msra.mxu0 0.0
    %1975 = vmatpush.msra.mxu0 0.0
    %1976 = vmatpush.msra.mxu0 0.0
    %1977 = vmatpush.msra.mxu0 0.0
    %1978 = vmatpush.msra.mxu0 0.0
    %1979 = vmatpush.msra.mxu0 %v1765
    %1980 = vmatpush.msra.mxu0 %v1763
    %1981 = vmatpush.msra.mxu0 %v1761
    %1982 = vmatpush.msra.mxu0 %v1759
    %1983 = vmatpush.msra.mxu0 %v1757
    %1984 = vmatpush.msra.mxu0 %v1755
    %1985 = vmatpush.msra.mxu0 %v1753
    %1986 = vmatpush.msra.mxu0 %v1751
    %1987 = vmatmul.f32.gmra.mxu0 %v1324
    %v1988 = vpop.f32.mrf.mxu0
    %v1989 = vadd.f32 %v1949, %v1988
    %1990 = vdwg.mxu0
    %1991 = vmatpush.msra.mxu0 0.0
    %1992 = vmatpush.msra.mxu0 0.0
    %1993 = vmatpush.msra.mxu0 0.0
    %1994 = vmatpush.msra.mxu0 0.0
    %1995 = vmatpush.msra.mxu0 0.0
    %1996 = vmatpush.msra.mxu0 0.0
    %1997 = vmatpush.msra.mxu0 0.0
    %1998 = vmatpush.msra.mxu0 0.0
    %1999 = vmatpush.msra.mxu0 %v1766
    %2000 = vmatpush.msra.mxu0 %v1764
    %2001 = vmatpush.msra.mxu0 %v1762
    %2002 = vmatpush.msra.mxu0 %v1760
    %2003 = vmatpush.msra.mxu0 %v1758
    %2004 = vmatpush.msra.mxu0 %v1756
    %2005 = vmatpush.msra.mxu0 %v1754
    %2006 = vmatpush.msra.mxu0 %v1752
    %2007 = vmatmul.f32.gmra.mxu0 %v1324
    %v2008 = vpop.f32.mrf.mxu0
    %v2009 = vadd.f32 %v1969, %v2008
    %2010 = vdwg.mxu0
    %v2011 = vadd.f32 %v1989, %v1866
    %v2012 = vadd.f32 %v2009, %v1867
    %v2013 = vxor.u32 %v2011, 2147483648
    %v2014 = vxor.u32 %v2012, 2147483648
    %v2015 = vmul.f32 %v2013, 1.442695
    %v2016 = vpow.pop %v2015
    %v2017 = vmul.f32 %v2014, 1.442695
    %v2018 = vpow.pop %v2017
    %v2019 = vadd.f32 %v2016, 1.0
    %v2020 = vadd.f32 %v2018, 1.0
    %v2021 = vrcp.pop %v2019
    %v2022 = vmul.f32 %v2019, %v2021
    %v2023 = vsub.f32 1.0, %v2022
    %v2024 = vmul.f32 %v2021, %v2023
    %v2025 = vadd.f32 %v2021, %v2024
    %vm2026 = vweird.f32 %v2019
    %vm2027 = vweird.f32 %v2021
    %vm2028 = vmor %vm2026, %vm2027
    %v2029 = vsel %vm2028, %v2021, %v2025
    %v2030 = vand.u32 2147483647, %v2019
    %vm2031 = vcmp.eq.f32.partialorder %v2030, 8.507059e+37
    %v2032 = vand.u32 %v2019, 2147483648
    %v2033 = vor.u32 1.1754944e-38, %v2032
    %v2034 = vsel %vm2031, %v2033, %v2029
    %v2035 = vmul.f32 1.0, %v2034
    %v2036 = vrcp.pop %v2020
    %v2037 = vmul.f32 %v2020, %v2036
    %v2038 = vsub.f32 1.0, %v2037
    %v2039 = vmul.f32 %v2036, %v2038
    %v2040 = vadd.f32 %v2036, %v2039
    %vm2041 = vweird.f32 %v2020
    %vm2042 = vweird.f32 %v2036
    %vm2043 = vmor %vm2041, %vm2042
    %v2044 = vsel %vm2043, %v2036, %v2040
    %v2045 = vand.u32 2147483647, %v2020
    %vm2046 = vcmp.eq.f32.partialorder %v2045, 8.507059e+37
    %v2047 = vand.u32 %v2020, 2147483648
    %v2048 = vor.u32 1.1754944e-38, %v2047
    %v2049 = vsel %vm2046, %v2048, %v2044
    %v2050 = vmul.f32 1.0, %v2049
    %v2051 = vtanh.pop %v2012
    %v2052 = vmul.f32 %v2035, %v1921
    %2054 = vrot.lane.b32.xlu0 %v2051, 64
    %v2055 = vpop.permute.xlu0 %2054
    %v2057 = vmul.f32 %v2035, %v2055
    %2059 = vrot.lane.b32.xlu0 %v2057, 64
    %v2060 = vpop.permute.xlu0 %2059
    %v2062 = vadd.f32 %v2052, %v2060
    %v2063 = vtanh.pop %v2062
    %2065 = vrot.lane.b32.xlu0 %v2063, 64
    %v2066 = vpop.permute.xlu0 %2065
    %v2068 = vmul.f32 %v2050, %v2066
    %v2070 = vsel %vm1036, %v2068, 0
    %2072 = vmatpush.msra.mxu0 0.0
    %2073 = vmatpush.msra.mxu0 0.0
    %2074 = vmatpush.msra.mxu0 0.0
    %2075 = vmatpush.msra.mxu0 0.0
    %2076 = vmatpush.msra.mxu0 0.0
    %2077 = vmatpush.msra.mxu0 0.0
    %2078 = vmatpush.msra.mxu0 0.0
    %2079 = vmatpush.msra.mxu0 0.0
    %2080 = vmatpush.msra.mxu0 %v1781
    %2081 = vmatpush.msra.mxu0 %v1779
    %2082 = vmatpush.msra.mxu0 %v1777
    %2083 = vmatpush.msra.mxu0 %v1775
    %2084 = vmatpush.msra.mxu0 %v1773
    %2085 = vmatpush.msra.mxu0 %v1771
    %2086 = vmatpush.msra.mxu0 %v1769
    %2087 = vmatpush.msra.mxu0 %v1767
    %2088 = vmatmul.f32.gmra.mxu0 %v2070
    %v2089 = vpop.f32.mrf.mxu0
    %v2090 = vadd.f32 0.0, %v2089
    %2091 = vdwg.mxu0
    %2092 = vmatpush.msra.mxu0 0.0
    %2093 = vmatpush.msra.mxu0 0.0
    %2094 = vmatpush.msra.mxu0 0.0
    %2095 = vmatpush.msra.mxu0 0.0
    %2096 = vmatpush.msra.mxu0 0.0
    %2097 = vmatpush.msra.mxu0 0.0
    %2098 = vmatpush.msra.mxu0 0.0
    %2099 = vmatpush.msra.mxu0 0.0
    %2100 = vmatpush.msra.mxu0 %v1782
    %2101 = vmatpush.msra.mxu0 %v1780
    %2102 = vmatpush.msra.mxu0 %v1778
    %2103 = vmatpush.msra.mxu0 %v1776
    %2104 = vmatpush.msra.mxu0 %v1774
    %2105 = vmatpush.msra.mxu0 %v1772
    %2106 = vmatpush.msra.mxu0 %v1770
    %2107 = vmatpush.msra.mxu0 %v1768
    %2108 = vmatmul.f32.gmra.mxu0 %v2070
    %v2109 = vpop.f32.mrf.mxu0
    %v2110 = vadd.f32 0.0, %v2109
    %2111 = vdwg.mxu0
    %2112 = vmatpush.msra.mxu0 0.0
    %2113 = vmatpush.msra.mxu0 0.0
    %2114 = vmatpush.msra.mxu0 0.0
    %2115 = vmatpush.msra.mxu0 0.0
    %2116 = vmatpush.msra.mxu0 0.0
    %2117 = vmatpush.msra.mxu0 0.0
    %2118 = vmatpush.msra.mxu0 0.0
    %2119 = vmatpush.msra.mxu0 0.0
    %2120 = vmatpush.msra.mxu0 %v1765
    %2121 = vmatpush.msra.mxu0 %v1763
    %2122 = vmatpush.msra.mxu0 %v1761
    %2123 = vmatpush.msra.mxu0 %v1759
    %2124 = vmatpush.msra.mxu0 %v1757
    %2125 = vmatpush.msra.mxu0 %v1755
    %2126 = vmatpush.msra.mxu0 %v1753
    %2127 = vmatpush.msra.mxu0 %v1751
    %2128 = vmatmul.f32.gmra.mxu0 %v1465
    %v2129 = vpop.f32.mrf.mxu0
    %v2130 = vadd.f32 %v2090, %v2129
    %2131 = vdwg.mxu0
    %2132 = vmatpush.msra.mxu0 0.0
    %2133 = vmatpush.msra.mxu0 0.0
    %2134 = vmatpush.msra.mxu0 0.0
    %2135 = vmatpush.msra.mxu0 0.0
    %2136 = vmatpush.msra.mxu0 0.0
    %2137 = vmatpush.msra.mxu0 0.0
    %2138 = vmatpush.msra.mxu0 0.0
    %2139 = vmatpush.msra.mxu0 0.0
    %2140 = vmatpush.msra.mxu0 %v1766
    %2141 = vmatpush.msra.mxu0 %v1764
    %2142 = vmatpush.msra.mxu0 %v1762
    %2143 = vmatpush.msra.mxu0 %v1760
    %2144 = vmatpush.msra.mxu0 %v1758
    %2145 = vmatpush.msra.mxu0 %v1756
    %2146 = vmatpush.msra.mxu0 %v1754
    %2147 = vmatpush.msra.mxu0 %v1752
    %2148 = vmatmul.f32.gmra.mxu0 %v1465
    %v2149 = vpop.f32.mrf.mxu0
    %v2150 = vadd.f32 %v2110, %v2149
    %2151 = vdwg.mxu0
    %v2152 = vadd.f32 %v2130, %v1866
    %v2153 = vadd.f32 %v2150, %v1867
    %v2154 = vxor.u32 %v2152, 2147483648
    %v2155 = vxor.u32 %v2153, 2147483648
    %v2156 = vmul.f32 %v2154, 1.442695
    %v2157 = vpow.pop %v2156
    %v2158 = vmul.f32 %v2155, 1.442695
    %v2159 = vpow.pop %v2158
    %v2160 = vadd.f32 %v2157, 1.0
    %v2161 = vadd.f32 %v2159, 1.0
    %v2162 = vrcp.pop %v2160
    %v2163 = vmul.f32 %v2160, %v2162
    %v2164 = vsub.f32 1.0, %v2163
    %v2165 = vmul.f32 %v2162, %v2164
    %v2166 = vadd.f32 %v2162, %v2165
    %vm2167 = vweird.f32 %v2160
    %vm2168 = vweird.f32 %v2162
    %vm2169 = vmor %vm2167, %vm2168
    %v2170 = vsel %vm2169, %v2162, %v2166
    %v2171 = vand.u32 2147483647, %v2160
    %vm2172 = vcmp.eq.f32.partialorder %v2171, 8.507059e+37
    %v2173 = vand.u32 %v2160, 2147483648
    %v2174 = vor.u32 1.1754944e-38, %v2173
    %v2175 = vsel %vm2172, %v2174, %v2170
    %v2176 = vmul.f32 1.0, %v2175
    %v2177 = vrcp.pop %v2161
    %v2178 = vmul.f32 %v2161, %v2177
    %v2179 = vsub.f32 1.0, %v2178
    %v2180 = vmul.f32 %v2177, %v2179
    %v2181 = vadd.f32 %v2177, %v2180
    %vm2182 = vweird.f32 %v2161
    %vm2183 = vweird.f32 %v2177
    %vm2184 = vmor %vm2182, %vm2183
    %v2185 = vsel %vm2184, %v2177, %v2181
    %v2186 = vand.u32 2147483647, %v2161
    %vm2187 = vcmp.eq.f32.partialorder %v2186, 8.507059e+37
    %v2188 = vand.u32 %v2161, 2147483648
    %v2189 = vor.u32 1.1754944e-38, %v2188
    %v2190 = vsel %vm2187, %v2189, %v2185
    %v2191 = vmul.f32 1.0, %v2190
    %v2192 = vtanh.pop %v2153
    %v2193 = vmul.f32 %v2176, %v2062
    %2195 = vrot.lane.b32.xlu0 %v2192, 64
    %v2196 = vpop.permute.xlu0 %2195
    %v2198 = vmul.f32 %v2176, %v2196
    %2200 = vrot.lane.b32.xlu0 %v2198, 64
    %v2201 = vpop.permute.xlu0 %2200
    %v2203 = vadd.f32 %v2193, %v2201
    %v2204 = vtanh.pop %v2203
    %2206 = vrot.lane.b32.xlu0 %v2204, 64
    %v2207 = vpop.permute.xlu0 %2206
    %v2209 = vmul.f32 %v2191, %v2207
    %v2211 = vsel %vm1036, %v2209, 0
    %2213 = vmatpush.msra.mxu0 0.0
    %2214 = vmatpush.msra.mxu0 0.0
    %2215 = vmatpush.msra.mxu0 0.0
    %2216 = vmatpush.msra.mxu0 0.0
    %2217 = vmatpush.msra.mxu0 0.0
    %2218 = vmatpush.msra.mxu0 0.0
    %2219 = vmatpush.msra.mxu0 0.0
    %2220 = vmatpush.msra.mxu0 0.0
    %2221 = vmatpush.msra.mxu0 %v1781
    %2222 = vmatpush.msra.mxu0 %v1779
    %2223 = vmatpush.msra.mxu0 %v1777
    %2224 = vmatpush.msra.mxu0 %v1775
    %2225 = vmatpush.msra.mxu0 %v1773
    %2226 = vmatpush.msra.mxu0 %v1771
    %2227 = vmatpush.msra.mxu0 %v1769
    %2228 = vmatpush.msra.mxu0 %v1767
    %2229 = vmatmul.f32.gmra.mxu0 %v2211
    %v2230 = vpop.f32.mrf.mxu0
    %v2231 = vadd.f32 0.0, %v2230
    %2232 = vdwg.mxu0
    %2233 = vmatpush.msra.mxu0 0.0
    %2234 = vmatpush.msra.mxu0 0.0
    %2235 = vmatpush.msra.mxu0 0.0
    %2236 = vmatpush.msra.mxu0 0.0
    %2237 = vmatpush.msra.mxu0 0.0
    %2238 = vmatpush.msra.mxu0 0.0
    %2239 = vmatpush.msra.mxu0 0.0
    %2240 = vmatpush.msra.mxu0 0.0
    %2241 = vmatpush.msra.mxu0 %v1782
    %2242 = vmatpush.msra.mxu0 %v1780
    %2243 = vmatpush.msra.mxu0 %v1778
    %2244 = vmatpush.msra.mxu0 %v1776
    %2245 = vmatpush.msra.mxu0 %v1774
    %2246 = vmatpush.msra.mxu0 %v1772
    %2247 = vmatpush.msra.mxu0 %v1770
    %2248 = vmatpush.msra.mxu0 %v1768
    %2249 = vmatmul.f32.gmra.mxu0 %v2211
    %v2250 = vpop.f32.mrf.mxu0
    %v2251 = vadd.f32 0.0, %v2250
    %2252 = vdwg.mxu0
    %2253 = vmatpush.msra.mxu0 0.0
    %2254 = vmatpush.msra.mxu0 0.0
    %2255 = vmatpush.msra.mxu0 0.0
    %2256 = vmatpush.msra.mxu0 0.0
    %2257 = vmatpush.msra.mxu0 0.0
    %2258 = vmatpush.msra.mxu0 0.0
    %2259 = vmatpush.msra.mxu0 0.0
    %2260 = vmatpush.msra.mxu0 0.0
    %2261 = vmatpush.msra.mxu0 %v1765
    %2262 = vmatpush.msra.mxu0 %v1763
    %2263 = vmatpush.msra.mxu0 %v1761
    %2264 = vmatpush.msra.mxu0 %v1759
    %2265 = vmatpush.msra.mxu0 %v1757
    %2266 = vmatpush.msra.mxu0 %v1755
    %2267 = vmatpush.msra.mxu0 %v1753
    %2268 = vmatpush.msra.mxu0 %v1751
    %2269 = vmatmul.f32.gmra.mxu0 %v1606
    %v2270 = vpop.f32.mrf.mxu0
    %v2271 = vadd.f32 %v2231, %v2270
    %2272 = vdwg.mxu0
    %2273 = vmatpush.msra.mxu0 0.0
    %2274 = vmatpush.msra.mxu0 0.0
    %2275 = vmatpush.msra.mxu0 0.0
    %2276 = vmatpush.msra.mxu0 0.0
    %2277 = vmatpush.msra.mxu0 0.0
    %2278 = vmatpush.msra.mxu0 0.0
    %2279 = vmatpush.msra.mxu0 0.0
    %2280 = vmatpush.msra.mxu0 0.0
    %2281 = vmatpush.msra.mxu0 %v1766
    %2282 = vmatpush.msra.mxu0 %v1764
    %2283 = vmatpush.msra.mxu0 %v1762
    %2284 = vmatpush.msra.mxu0 %v1760
    %2285 = vmatpush.msra.mxu0 %v1758
    %2286 = vmatpush.msra.mxu0 %v1756
    %2287 = vmatpush.msra.mxu0 %v1754
    %2288 = vmatpush.msra.mxu0 %v1752
    %2289 = vmatmul.f32.gmra.mxu0 %v1606
    %v2290 = vpop.f32.mrf.mxu0
    %v2291 = vadd.f32 %v2251, %v2290
    %2292 = vdwg.mxu0
    %v2293 = vadd.f32 %v2271, %v1866
    %v2294 = vadd.f32 %v2291, %v1867
    %v2295 = vxor.u32 %v2293, 2147483648
    %v2296 = vxor.u32 %v2294, 2147483648
    %v2297 = vmul.f32 %v2295, 1.442695
    %v2298 = vpow.pop %v2297
    %v2299 = vmul.f32 %v2296, 1.442695
    %v2300 = vpow.pop %v2299
    %v2301 = vadd.f32 %v2298, 1.0
    %v2302 = vadd.f32 %v2300, 1.0
    %v2303 = vrcp.pop %v2301
    %v2304 = vmul.f32 %v2301, %v2303
    %v2305 = vsub.f32 1.0, %v2304
    %v2306 = vmul.f32 %v2303, %v2305
    %v2307 = vadd.f32 %v2303, %v2306
    %vm2308 = vweird.f32 %v2301
    %vm2309 = vweird.f32 %v2303
    %vm2310 = vmor %vm2308, %vm2309
    %v2311 = vsel %vm2310, %v2303, %v2307
    %v2312 = vand.u32 2147483647, %v2301
    %vm2313 = vcmp.eq.f32.partialorder %v2312, 8.507059e+37
    %v2314 = vand.u32 %v2301, 2147483648
    %v2315 = vor.u32 1.1754944e-38, %v2314
    %v2316 = vsel %vm2313, %v2315, %v2311
    %v2317 = vmul.f32 1.0, %v2316
    %v2318 = vrcp.pop %v2302
    %v2319 = vmul.f32 %v2302, %v2318
    %v2320 = vsub.f32 1.0, %v2319
    %v2321 = vmul.f32 %v2318, %v2320
    %v2322 = vadd.f32 %v2318, %v2321
    %vm2323 = vweird.f32 %v2302
    %vm2324 = vweird.f32 %v2318
    %vm2325 = vmor %vm2323, %vm2324
    %v2326 = vsel %vm2325, %v2318, %v2322
    %v2327 = vand.u32 2147483647, %v2302
    %vm2328 = vcmp.eq.f32.partialorder %v2327, 8.507059e+37
    %v2329 = vand.u32 %v2302, 2147483648
    %v2330 = vor.u32 1.1754944e-38, %v2329
    %v2331 = vsel %vm2328, %v2330, %v2326
    %v2332 = vmul.f32 1.0, %v2331
    %v2333 = vtanh.pop %v2294
    %v2334 = vmul.f32 %v2317, %v2203
    %2336 = vrot.lane.b32.xlu0 %v2333, 64
    %v2337 = vpop.permute.xlu0 %2336
    %v2339 = vmul.f32 %v2317, %v2337
    %2341 = vrot.lane.b32.xlu0 %v2339, 64
    %v2342 = vpop.permute.xlu0 %2341
    %v2344 = vadd.f32 %v2334, %v2342
    %v2345 = vtanh.pop %v2344
    %2347 = vrot.lane.b32.xlu0 %v2345, 64
    %v2348 = vpop.permute.xlu0 %2347
    %v2350 = vmul.f32 %v2332, %v2348
    %v2352 = vsel %vm1036, %v2350, 0
    %2354 = vmatpush.msra.mxu0 0.0
    %2355 = vmatpush.msra.mxu0 0.0
    %2356 = vmatpush.msra.mxu0 0.0
    %2357 = vmatpush.msra.mxu0 0.0
    %2358 = vmatpush.msra.mxu0 0.0
    %2359 = vmatpush.msra.mxu0 0.0
    %2360 = vmatpush.msra.mxu0 0.0
    %2361 = vmatpush.msra.mxu0 0.0
    %2362 = vmatpush.msra.mxu0 %v1781
    %2363 = vmatpush.msra.mxu0 %v1779
    %2364 = vmatpush.msra.mxu0 %v1777
    %2365 = vmatpush.msra.mxu0 %v1775
    %2366 = vmatpush.msra.mxu0 %v1773
    %2367 = vmatpush.msra.mxu0 %v1771
    %2368 = vmatpush.msra.mxu0 %v1769
    %2369 = vmatpush.msra.mxu0 %v1767
    %2370 = vmatmul.f32.gmra.mxu0 %v2352
    %v2371 = vpop.f32.mrf.mxu0
    %v2372 = vadd.f32 0.0, %v2371
    %2373 = vdwg.mxu0
    %2374 = vmatpush.msra.mxu0 0.0
    %2375 = vmatpush.msra.mxu0 0.0
    %2376 = vmatpush.msra.mxu0 0.0
    %2377 = vmatpush.msra.mxu0 0.0
    %2378 = vmatpush.msra.mxu0 0.0
    %2379 = vmatpush.msra.mxu0 0.0
    %2380 = vmatpush.msra.mxu0 0.0
    %2381 = vmatpush.msra.mxu0 0.0
    %2382 = vmatpush.msra.mxu0 %v1782
    %2383 = vmatpush.msra.mxu0 %v1780
    %2384 = vmatpush.msra.mxu0 %v1778
    %2385 = vmatpush.msra.mxu0 %v1776
    %2386 = vmatpush.msra.mxu0 %v1774
    %2387 = vmatpush.msra.mxu0 %v1772
    %2388 = vmatpush.msra.mxu0 %v1770
    %2389 = vmatpush.msra.mxu0 %v1768
    %2390 = vmatmul.f32.gmra.mxu0 %v2352
    %v2391 = vpop.f32.mrf.mxu0
    %v2392 = vadd.f32 0.0, %v2391
    %2393 = vdwg.mxu0
    %v2395 = vsel %vm1036, %v1750, 0
    %2397 = vmatpush.msra.mxu0 0.0
    %2398 = vmatpush.msra.mxu0 0.0
    %2399 = vmatpush.msra.mxu0 0.0
    %2400 = vmatpush.msra.mxu0 0.0
    %2401 = vmatpush.msra.mxu0 0.0
    %2402 = vmatpush.msra.mxu0 0.0
    %2403 = vmatpush.msra.mxu0 0.0
    %2404 = vmatpush.msra.mxu0 0.0
    %2405 = vmatpush.msra.mxu0 %v1765
    %2406 = vmatpush.msra.mxu0 %v1763
    %2407 = vmatpush.msra.mxu0 %v1761
    %2408 = vmatpush.msra.mxu0 %v1759
    %2409 = vmatpush.msra.mxu0 %v1757
    %2410 = vmatpush.msra.mxu0 %v1755
    %2411 = vmatpush.msra.mxu0 %v1753
    %2412 = vmatpush.msra.mxu0 %v1751
    %2413 = vmatmul.f32.gmra.mxu0 %v2395
    %v2414 = vpop.f32.mrf.mxu0
    %v2415 = vadd.f32 %v2372, %v2414
    %2416 = vdwg.mxu0
    %2417 = vmatpush.msra.mxu0 0.0
    %2418 = vmatpush.msra.mxu0 0.0
    %2419 = vmatpush.msra.mxu0 0.0
    %2420 = vmatpush.msra.mxu0 0.0
    %2421 = vmatpush.msra.mxu0 0.0
    %2422 = vmatpush.msra.mxu0 0.0
    %2423 = vmatpush.msra.mxu0 0.0
    %2424 = vmatpush.msra.mxu0 0.0
    %2425 = vmatpush.msra.mxu0 %v1766
    %2426 = vmatpush.msra.mxu0 %v1764
    %2427 = vmatpush.msra.mxu0 %v1762
    %2428 = vmatpush.msra.mxu0 %v1760
    %2429 = vmatpush.msra.mxu0 %v1758
    %2430 = vmatpush.msra.mxu0 %v1756
    %2431 = vmatpush.msra.mxu0 %v1754
    %2432 = vmatpush.msra.mxu0 %v1752
    %2433 = vmatmul.f32.gmra.mxu0 %v2395
    %v2434 = vpop.f32.mrf.mxu0
    %v2435 = vadd.f32 %v2392, %v2434
    %2436 = vdwg.mxu0
    %v2437 = vadd.f32 %v2415, %v1866
    %v2438 = vadd.f32 %v2435, %v1867
    %v2439 = vxor.u32 %v2437, 2147483648
    %v2440 = vxor.u32 %v2438, 2147483648
    %v2441 = vmul.f32 %v2439, 1.442695
    %v2442 = vpow.pop %v2441
    %v2443 = vmul.f32 %v2440, 1.442695
    %v2444 = vpow.pop %v2443
    %v2445 = vadd.f32 %v2442, 1.0
    %v2446 = vadd.f32 %v2444, 1.0
    %v2447 = vrcp.pop %v2445
    %v2448 = vmul.f32 %v2445, %v2447
    %v2449 = vsub.f32 1.0, %v2448
    %v2450 = vmul.f32 %v2447, %v2449
    %v2451 = vadd.f32 %v2447, %v2450
    %vm2452 = vweird.f32 %v2445
    %vm2453 = vweird.f32 %v2447
    %vm2454 = vmor %vm2452, %vm2453
    %v2455 = vsel %vm2454, %v2447, %v2451
    %v2456 = vand.u32 2147483647, %v2445
    %vm2457 = vcmp.eq.f32.partialorder %v2456, 8.507059e+37
    %v2458 = vand.u32 %v2445, 2147483648
    %v2459 = vor.u32 1.1754944e-38, %v2458
    %v2460 = vsel %vm2457, %v2459, %v2455
    %v2461 = vmul.f32 1.0, %v2460
    %v2462 = vrcp.pop %v2446
    %v2463 = vmul.f32 %v2446, %v2462
    %v2464 = vsub.f32 1.0, %v2463
    %v2465 = vmul.f32 %v2462, %v2464
    %v2466 = vadd.f32 %v2462, %v2465
    %vm2467 = vweird.f32 %v2446
    %vm2468 = vweird.f32 %v2462
    %vm2469 = vmor %vm2467, %vm2468
    %v2470 = vsel %vm2469, %v2462, %v2466
    %v2471 = vand.u32 2147483647, %v2446
    %vm2472 = vcmp.eq.f32.partialorder %v2471, 8.507059e+37
    %v2473 = vand.u32 %v2446, 2147483648
    %v2474 = vor.u32 1.1754944e-38, %v2473
    %v2475 = vsel %vm2472, %v2474, %v2470
    %v2476 = vmul.f32 1.0, %v2475
    %v2477 = vtanh.pop %v2438
    %v2478 = vmul.f32 %v2461, %v2344
    %2480 = vrot.lane.b32.xlu0 %v2477, 64
    %v2481 = vpop.permute.xlu0 %2480
    %v2483 = vmul.f32 %v2461, %v2481
    %2485 = vrot.lane.b32.xlu0 %v2483, 64
    %v2486 = vpop.permute.xlu0 %2485
    %v2488 = vadd.f32 %v2478, %v2486
    %v2489 = vtanh.pop %v2488
    %2491 = vrot.lane.b32.xlu0 %v2489, 64
    %v2492 = vpop.permute.xlu0 %2491
    %v2494 = vmul.f32 %v2476, %v2492
    %v2495 = vld [vmem:[#allocation2 + $0xa0] sm:$0xff]
    %v2496 = vld [vmem:[#allocation2 + $0xa8] sm:$0xff]
    %v2497 = vld [vmem:[#allocation2 + $0xb0] sm:$0xff]
    %v2498 = vld [vmem:[#allocation2 + $0xb8] sm:$0xff]
    %v2499 = vld [vmem:[#allocation2 + $0xc0] sm:$0xff]
    %v2500 = vld [vmem:[#allocation2 + $0xc8] sm:$0xff]
    %v2501 = vld [vmem:[#allocation2 + $0xd0] sm:$0xff]
    %v2502 = vld [vmem:[#allocation2 + $0xd8] sm:$0xff]
    %v2503 = vld [vmem:[#allocation2 + $0xe0] sm:$0x1]
    %v2505 = vsel %vm1036, %v2494, 0
    %2507 = vmatpush.msra.mxu0 0.0
    %2508 = vmatpush.msra.mxu0 0.0
    %2509 = vmatpush.msra.mxu0 0.0
    %2510 = vmatpush.msra.mxu0 0.0
    %2511 = vmatpush.msra.mxu0 0.0
    %2512 = vmatpush.msra.mxu0 0.0
    %2513 = vmatpush.msra.mxu0 0.0
    %2514 = vmatpush.msra.mxu0 0.0
    %2515 = vmatpush.msra.mxu0 %v2502
    %2516 = vmatpush.msra.mxu0 %v2501
    %2517 = vmatpush.msra.mxu0 %v2500
    %2518 = vmatpush.msra.mxu0 %v2499
    %2519 = vmatpush.msra.mxu0 %v2498
    %2520 = vmatpush.msra.mxu0 %v2497
    %2521 = vmatpush.msra.mxu0 %v2496
    %2522 = vmatpush.msra.mxu0 %v2495
    %2523 = vmatmul.f32.gmra.mxu0 %v2505
    %v2524 = vpop.f32.mrf.mxu0
    %v2525 = vadd.f32 %v2503, %v2524
    %2526 = vdwg.mxu0
    %v2527 = vlaneseq
    %v2528 = vand.u32 %v2527, 127
    %vm2529 = vcmp.lt.s32.totalorder %v2528, 4
    %v2530 = vsel %vm2529, %v2525, -inf
    %vm2531 = vcmask 1040384
    %v2532 = vsel %vm2531, %v2530, -inf
    %2533 = vmax.xlane.f32.xlu0 %v2532
    %v2534 = vpop.xlane.xlu0 %2533
    %v2535 = vsub.f32 %v2530, %v2534
    %v2536 = vmul.f32 %v2535, 1.442695
    %v2537 = vpow.pop %v2536
    %v2538 = vsel %vm2531, %v2537, 0.0
    %2539 = vadd.xlane.f32.xlu0 %v2538
    %v2540 = vpop.xlane.xlu0 %2539
    %v2541 = vrcp.pop %v2540
    %v2542 = vmul.f32 %v2540, %v2541
    %v2543 = vsub.f32 1.0, %v2542
    %v2544 = vmul.f32 %v2541, %v2543
    %v2545 = vadd.f32 %v2541, %v2544
    %vm2546 = vweird.f32 %v2540
    %vm2547 = vweird.f32 %v2541
    %vm2548 = vmor %vm2546, %vm2547
    %v2549 = vsel %vm2548, %v2541, %v2545
    %v2550 = vand.u32 2147483647, %v2540
    %vm2551 = vcmp.eq.f32.partialorder %v2550, 8.507059e+37
    %v2552 = vand.u32 %v2540, 2147483648
    %v2553 = vor.u32 1.1754944e-38, %v2552
    %v2554 = vsel %vm2551, %v2553, %v2549
    %v2555 = vmul.f32 %v2537, %v2554
    %vm2556 = vcmp.eq.s32.totalorder %v2528, 4
    %v2557 = vsel %vm2556, %v2525, 0.0
    %v2558 = vadd.f32 %v2555, %v2557
    %v2559 = vadd.f32 %v2558, %v209
    %2560 = vst [vmem:[%s4] sm:$0x1] %v2559
    // Predicated region
    $region26: #{actor_critic_forward.1} parent=1 // pred_check
      _
    $region27: #{actor_critic_forward.1} parent=1 // pred_check_branch
      %2562 = sbr.rel (0) target = $region29
    $region28: #{actor_critic_forward.1} parent=1 // pred_region
      _
    $region29: #{actor_critic_forward.1} parent=1 // pred_fallthru
      _
    // Predicated region
    $region30: #{actor_critic_forward.1} parent=1 // pred_check
      _
    $region31: #{actor_critic_forward.1} parent=1 // pred_check_branch
      %2564 = sbr.rel (0) target = $region33
    $region32: #{actor_critic_forward.1} parent=1 // pred_region
      _
    $region33: #{actor_critic_forward.1} parent=1 // pred_fallthru
      _
    %2565 = vsyncpa [#allocation3], 1
    %2566 = vsyncpa [#allocation5], 1

</llo_original>
